<compile_context>
chip_gen: v5e
topology: v5e:2x2
jax: 0.10.0
libtpu: 0.0.40
codegen_flags: <defaults>
</compile_context>

<pallas_src>
import functools

import jax
import jax.numpy as jnp
import numpy as np
from jax.experimental import pallas as pl
from jax.experimental.pallas import tpu as pltpu


def _fused_basicblock_kernel(x_ref, wa_ref, wb_ref, bias_ref, out_ref,
                             xpad_ref, h1pad_ref):
    """One batch element per grid step (NHWC, channels on lanes).

    x_ref    : (1, H, W, C)   input block (compute dtype)
    wa_ref   : (9*C, C)       conv_a weight, im2col (dy,dx,cin) x cout,
                              BN-a scale pre-folded into the columns
    wb_ref   : (9*C, C)       conv_b weight, im2col, BN-b scale pre-folded
    bias_ref : (2, C)         [bias_a, bias_b] folded BN biases (f32)
    out_ref  : (1, H, W, C)   f32 output block
    xpad_ref : (H+2, W+2, C)  VMEM scratch, zero-halo copy of the input
    h1pad_ref: (H+2, W+2, C)  VMEM scratch, zero-halo intermediate
    """
    _, H, W, C = x_ref.shape

    x = x_ref[0]                                        # (H, W, C)

    # Zero-halo copy of the input in VMEM (replaces a wrapper-side jnp.pad and
    # its HBM round trip).  Full zero-fill is cheap vs. the two matmuls;
    # border-only zeroing would shave a little more but is kept simple here.
    xpad_ref[...] = jnp.zeros_like(xpad_ref)
    xpad_ref[1:H + 1, 1:W + 1, :] = x
    xp = xpad_ref[...]                                  # (H+2, W+2, C)

    # ---- conv_a as ONE im2col matmul (K = 9*C), f32 accumulation ----------
    taps = [xp[dy:dy + H, dx:dx + W, :]
            for dy in range(3) for dx in range(3)]      # 9 x (H, W, C)
    patches = jnp.concatenate(taps, axis=-1).reshape(H * W, 9 * C)
    acc1 = jnp.dot(patches, wa_ref[...],
                   preferred_element_type=jnp.float32)  # (H*W, C) f32
    h1 = jnp.maximum(acc1 + bias_ref[0], 0.0)           # BN-a bias + ReLU

    # ---- keep h1 in VMEM with an explicit zero halo (no HBM trip) ---------
    h1pad_ref[...] = jnp.zeros_like(h1pad_ref)
    h1pad_ref[1:H + 1, 1:W + 1, :] = (
        h1.reshape(H, W, C).astype(h1pad_ref.dtype))
    hp = h1pad_ref[...]                                 # (H+2, W+2, C)

    # ---- conv_b as ONE im2col matmul (K = 9*C) ----------------------------
    taps2 = [hp[dy:dy + H, dx:dx + W, :]
             for dy in range(3) for dx in range(3)]
    patches2 = jnp.concatenate(taps2, axis=-1).reshape(H * W, 9 * C)
    acc2 = jnp.dot(patches2, wb_ref[...],
                   preferred_element_type=jnp.float32)  # (H*W, C) f32
    y = acc2 + bias_ref[1]                              # BN-b bias

    # ---- residual add (identity path) + ReLU, in f32 ----------------------
    residual = x.reshape(H * W, C).astype(jnp.float32)
    out = jnp.maximum(residual + y, 0.0)
    out_ref[...] = out.reshape(1, H, W, C).astype(out_ref.dtype)


def _fold_bn(gamma, beta, mean, var, eps=1e-5):
    scale = gamma / jnp.sqrt(var + eps)
    bias = beta - mean * scale
    return scale.astype(jnp.float32), bias.astype(jnp.float32)


def resnet_basicblock_forward(x_nchw, params, *, compute_dtype=jnp.float32):
    """x_nchw: (N, Cin, H, W) f32.  stride=1, downsample=None (Cin == Cout)."""
    x = jnp.transpose(x_nchw, (0, 2, 3, 1))             # -> NHWC
    N, H, W, Cin = x.shape
    w_a, w_b = params["w_a"], params["w_b"]              # (3,3,Cin,Cout), (3,3,Cout,Cout)
    Cout = w_a.shape[-1]
    assert Cin == Cout, "identity residual requires inplanes == planes"

    scale_a, bias_a = _fold_bn(*params["bn_a"])
    scale_b, bias_b = _fold_bn(*params["bn_b"])

    # Fold BN scale into the conv weights (shared across the batch) and lay
    # them out for im2col (rows ordered (dy, dx, cin)).  Cast once.
    wa2d = (w_a.reshape(9 * Cin, Cout) * scale_a).astype(compute_dtype)
    wb2d = (w_b.reshape(9 * Cout, Cout) * scale_b).astype(compute_dtype)
    biases = jnp.stack([bias_a, bias_b]).astype(jnp.float32)   # (2, Cout)

    x_in = x.astype(compute_dtype)   # bf16 halves input-side HBM traffic

    out = pl.pallas_call(
        _fused_basicblock_kernel,
        out_shape=jax.ShapeDtypeStruct((N, H, W, Cout), jnp.float32),
        grid_spec=pltpu.PrefetchScalarGridSpec(
            num_scalar_prefetch=0,
            grid=(N,),
            in_specs=[
                pl.BlockSpec((1, H, W, Cin), lambda n: (n, 0, 0, 0)),
                pl.BlockSpec((9 * Cin, Cout), lambda n: (0, 0)),
                pl.BlockSpec((9 * Cout, Cout), lambda n: (0, 0)),
                pl.BlockSpec((2, Cout), lambda n: (0, 0)),
            ],
            out_specs=pl.BlockSpec((1, H, W, Cout), lambda n: (n, 0, 0, 0)),
            scratch_shapes=[
                pltpu.VMEM((H + 2, W + 2, Cin), compute_dtype),
                pltpu.VMEM((H + 2, W + 2, Cout), compute_dtype),
            ],
        ),
        compiler_params=pltpu.CompilerParams(
            dimension_semantics=("parallel",),
        ),
    )(x_in, wa2d, wb2d, biases)

    return jnp.transpose(out, (0, 3, 1, 2))              # back to NCHW


def _reference_forward(x_nchw, params):
    """Pure-JAX reference (lax conv, f32, unfolded BN) for correctness."""
    x = jnp.transpose(x_nchw, (0, 2, 3, 1))
    dn = ("NHWC", "HWIO", "NHWC")

    def conv(inp, w):
        return jax.lax.conv_general_dilated(inp, w, (1, 1), "SAME",
                                            dimension_numbers=dn)

    sa, ba = _fold_bn(*params["bn_a"])
    sb, bb = _fold_bn(*params["bn_b"])
    h = jnp.maximum(conv(x, params["w_a"]) * sa + ba, 0.0)
    y = conv(h, params["w_b"]) * sb + bb
    out = jnp.maximum(x + y, 0.0)
    return jnp.transpose(out, (0, 3, 1, 2))


def make_params(key, inplanes, planes):
    ks = jax.random.split(key, 10)
    fan_a = 3 * 3 * inplanes
    fan_b = 3 * 3 * planes
    return {
        "w_a": jax.random.normal(ks[0], (3, 3, inplanes, planes),
                                 jnp.float32) * (2.0 / fan_a) ** 0.5,
        "w_b": jax.random.normal(ks[1], (3, 3, planes, planes),
                                 jnp.float32) * (2.0 / fan_b) ** 0.5,
        # BatchNorm (gamma, beta, running_mean, running_var) — inference mode.
        "bn_a": (1.0 + 0.1 * jax.random.normal(ks[2], (planes,), jnp.float32),
                 0.1 * jax.random.normal(ks[3], (planes,), jnp.float32),
                 0.1 * jax.random.normal(ks[4], (planes,), jnp.float32),
                 1.0 + 0.1 * jax.random.uniform(ks[5], (planes,), jnp.float32)),
        "bn_b": (1.0 + 0.1 * jax.random.normal(ks[6], (planes,), jnp.float32),
                 0.1 * jax.random.normal(ks[7], (planes,), jnp.float32),
                 0.1 * jax.random.normal(ks[8], (planes,), jnp.float32),
                 1.0 + 0.1 * jax.random.uniform(ks[9], (planes,), jnp.float32)),
    }


if __name__ == "__main__":
    key = jax.random.PRNGKey(0)
    k_x, k_p = jax.random.split(key)

    N, C, H, W = 2, 8, 16, 16          # inplanes == planes, stride=1, no downsample
    x = jax.random.normal(k_x, (N, C, H, W), jnp.float32)
    params = make_params(k_p, C, C)

    fwd_f32 = jax.jit(functools.partial(resnet_basicblock_forward,
                                        compute_dtype=jnp.float32))
    fwd_bf16 = jax.jit(functools.partial(resnet_basicblock_forward,
                                         compute_dtype=jnp.bfloat16))

    out_f32 = jax.block_until_ready(fwd_f32(x, params))
    out_bf16 = jax.block_until_ready(fwd_bf16(x, params))
    ref = jax.block_until_ready(_reference_forward(x, params))

    if not np.allclose(np.asarray(out_f32), np.asarray(ref),
                       atol=1e-4, rtol=1e-4):
        raise AssertionError("Pallas f32 output does not match reference")
    if not np.allclose(np.asarray(out_bf16), np.asarray(ref),
                       atol=5e-2, rtol=5e-2):
        raise AssertionError("Pallas bf16 output does not match reference")

    print("KERNEL_OK")
</pallas_src>

<mosaic_0001>
module attributes {stable_mosaic.version = 11 : i64} {
  func.func @_fused_basicblock_kernel(%arg0: i32, %arg1: memref<1x16x16x8xf32, #tpu.memory_space<vmem>>, %arg2: memref<72x8xf32, #tpu.memory_space<vmem>>, %arg3: memref<72x8xf32, #tpu.memory_space<vmem>>, %arg4: memref<2x8xf32, #tpu.memory_space<vmem>>, %arg5: memref<1x16x16x8xf32, #tpu.memory_space<vmem>>, %arg6: memref<18x18x8xf32, #tpu.memory_space<vmem>>, %arg7: memref<18x18x8xf32, #tpu.memory_space<vmem>>) attributes {dimension_semantics = [#tpu.dimension_semantics<parallel>], iteration_bounds = array<i64: 2>, scalar_prefetch = 0 : i64, scratch_operands = 2 : i64, tpu.core_type = #tpu.core_type<tc>, window_params = [{transform_indices = @transform_0, window_bounds = array<i64: 1, 16, 16, 8>}, {pipeline_mode = #tpu.pipeline_mode<synchronous>, transform_indices = @transform_1, window_bounds = array<i64: 72, 8>}, {pipeline_mode = #tpu.pipeline_mode<synchronous>, transform_indices = @transform_2, window_bounds = array<i64: 72, 8>}, {pipeline_mode = #tpu.pipeline_mode<synchronous>, transform_indices = @transform_3, window_bounds = array<i64: 2, 8>}, {transform_indices = @transform_4, window_bounds = array<i64: 1, 16, 16, 8>}]} {
    %c0 = arith.constant 0 : index
    %c0_0 = arith.constant 0 : index
    %c0_1 = arith.constant 0 : index
    %c0_2 = arith.constant 0 : index
    %0 = vector.load %arg1[%c0, %c0_0, %c0_1, %c0_2] : memref<1x16x16x8xf32, #tpu.memory_space<vmem>>, vector<1x16x16x8xf32>
    %1 = vector.shape_cast %0 : vector<1x16x16x8xf32> to vector<16x16x8xf32>
    %cst = arith.constant 0.000000e+00 : f32
    %2 = vector.broadcast %cst : f32 to vector<18x18x8xf32>
    %c0_3 = arith.constant 0 : index
    %c0_4 = arith.constant 0 : index
    %c0_5 = arith.constant 0 : index
    %3 = vector.load %arg6[%c0_3, %c0_4, %c0_5] : memref<18x18x8xf32, #tpu.memory_space<vmem>>, vector<18x18x8xf32>
    tpu.vector_store %arg6[%c0_3, %c0_4, %c0_5], %2 {strides = array<i32>} : memref<18x18x8xf32, #tpu.memory_space<vmem>>, vector<18x18x8xf32>,
    %c1 = arith.constant 1 : index
    %c1_6 = arith.constant 1 : index
    %c0_7 = arith.constant 0 : index
    %4 = vector.load %arg6[%c1, %c1_6, %c0_7] : memref<18x18x8xf32, #tpu.memory_space<vmem>>, vector<16x16x8xf32>
    tpu.vector_store %arg6[%c1, %c1_6, %c0_7], %1 {strides = array<i32>} : memref<18x18x8xf32, #tpu.memory_space<vmem>>, vector<16x16x8xf32>,
    %c0_8 = arith.constant 0 : index
    %c0_9 = arith.constant 0 : index
    %c0_10 = arith.constant 0 : index
    %5 = vector.load %arg6[%c0_8, %c0_9, %c0_10] : memref<18x18x8xf32, #tpu.memory_space<vmem>>, vector<18x18x8xf32>
    %6 = vector.extract_strided_slice %5 {offsets = [0, 0, 0], sizes = [16, 16, 8], strides = [1, 1, 1]} : vector<18x18x8xf32> to vector<16x16x8xf32>
    %7 = vector.extract_strided_slice %5 {offsets = [0, 1, 0], sizes = [16, 16, 8], strides = [1, 1, 1]} : vector<18x18x8xf32> to vector<16x16x8xf32>
    %8 = vector.extract_strided_slice %5 {offsets = [0, 2, 0], sizes = [16, 16, 8], strides = [1, 1, 1]} : vector<18x18x8xf32> to vector<16x16x8xf32>
    %9 = vector.extract_strided_slice %5 {offsets = [1, 0, 0], sizes = [16, 16, 8], strides = [1, 1, 1]} : vector<18x18x8xf32> to vector<16x16x8xf32>
    %10 = vector.extract_strided_slice %5 {offsets = [1, 1, 0], sizes = [16, 16, 8], strides = [1, 1, 1]} : vector<18x18x8xf32> to vector<16x16x8xf32>
    %11 = vector.extract_strided_slice %5 {offsets = [1, 2, 0], sizes = [16, 16, 8], strides = [1, 1, 1]} : vector<18x18x8xf32> to vector<16x16x8xf32>
    %12 = vector.extract_strided_slice %5 {offsets = [2, 0, 0], sizes = [16, 16, 8], strides = [1, 1, 1]} : vector<18x18x8xf32> to vector<16x16x8xf32>
    %13 = vector.extract_strided_slice %5 {offsets = [2, 1, 0], sizes = [16, 16, 8], strides = [1, 1, 1]} : vector<18x18x8xf32> to vector<16x16x8xf32>
    %14 = vector.extract_strided_slice %5 {offsets = [2, 2, 0], sizes = [16, 16, 8], strides = [1, 1, 1]} : vector<18x18x8xf32> to vector<16x16x8xf32>
    %15 = tpu.concatenate %6, %7, %8, %9, %10, %11, %12, %13, %14 in 2 : vector<16x16x8xf32>, vector<16x16x8xf32>, vector<16x16x8xf32>, vector<16x16x8xf32>, vector<16x16x8xf32>, vector<16x16x8xf32>, vector<16x16x8xf32>, vector<16x16x8xf32>, vector<16x16x8xf32> -> vector<16x16x72xf32>
    %16 = vector.shape_cast %15 : vector<16x16x72xf32> to vector<256x72xf32>
    %c0_11 = arith.constant 0 : index
    %c0_12 = arith.constant 0 : index
    %17 = vector.load %arg2[%c0_11, %c0_12] : memref<72x8xf32, #tpu.memory_space<vmem>>, vector<72x8xf32>
    %cst_13 = arith.constant dense<0.000000e+00> : vector<256x8xf32>
    %18 = tpu.matmul %16, %17, %cst_13 {dimension_numbers = #tpu.dot_dimension_numbers<[1], [0], [0], [1], [0, 0, 1, 1], [], []>} : vector<256x72xf32>, vector<72x8xf32>, vector<256x8xf32> -> vector<256x8xf32>
    %c0_14 = arith.constant 0 : index
    %c0_15 = arith.constant 0 : index
    %19 = vector.load %arg4[%c0_14, %c0_15] : memref<2x8xf32, #tpu.memory_space<vmem>>, vector<1x8xf32>
    %20 = vector.shape_cast %19 : vector<1x8xf32> to vector<8xf32>
    %21 = vector.shape_cast %20 : vector<8xf32> to vector<1x8xf32>
    %22 = vector.broadcast %21 : vector<1x8xf32> to vector<256x8xf32>
    %23 = arith.addf %18, %22 : vector<256x8xf32>
    %cst_16 = arith.constant 0.000000e+00 : f32
    %24 = vector.broadcast %cst_16 : f32 to vector<256x8xf32>
    %25 = arith.maximumf %23, %24 : vector<256x8xf32>
    %cst_17 = arith.constant 0.000000e+00 : f32
    %26 = vector.broadcast %cst_17 : f32 to vector<18x18x8xf32>
    %c0_18 = arith.constant 0 : index
    %c0_19 = arith.constant 0 : index
    %c0_20 = arith.constant 0 : index
    %27 = vector.load %arg7[%c0_18, %c0_19, %c0_20] : memref<18x18x8xf32, #tpu.memory_space<vmem>>, vector<18x18x8xf32>
    tpu.vector_store %arg7[%c0_18, %c0_19, %c0_20], %26 {strides = array<i32>} : memref<18x18x8xf32, #tpu.memory_space<vmem>>, vector<18x18x8xf32>,
    %28 = vector.shape_cast %25 : vector<256x8xf32> to vector<16x16x8xf32>
    %c1_21 = arith.constant 1 : index
    %c1_22 = arith.constant 1 : index
    %c0_23 = arith.constant 0 : index
    %29 = vector.load %arg7[%c1_21, %c1_22, %c0_23] : memref<18x18x8xf32, #tpu.memory_space<vmem>>, vector<16x16x8xf32>
    tpu.vector_store %arg7[%c1_21, %c1_22, %c0_23], %28 {strides = array<i32>} : memref<18x18x8xf32, #tpu.memory_space<vmem>>, vector<16x16x8xf32>,
    %c0_24 = arith.constant 0 : index
    %c0_25 = arith.constant 0 : index
    %c0_26 = arith.constant 0 : index
    %30 = vector.load %arg7[%c0_24, %c0_25, %c0_26] : memref<18x18x8xf32, #tpu.memory_space<vmem>>, vector<18x18x8xf32>
    %31 = vector.extract_strided_slice %30 {offsets = [0, 0, 0], sizes = [16, 16, 8], strides = [1, 1, 1]} : vector<18x18x8xf32> to vector<16x16x8xf32>
    %32 = vector.extract_strided_slice %30 {offsets = [0, 1, 0], sizes = [16, 16, 8], strides = [1, 1, 1]} : vector<18x18x8xf32> to vector<16x16x8xf32>
    %33 = vector.extract_strided_slice %30 {offsets = [0, 2, 0], sizes = [16, 16, 8], strides = [1, 1, 1]} : vector<18x18x8xf32> to vector<16x16x8xf32>
    %34 = vector.extract_strided_slice %30 {offsets = [1, 0, 0], sizes = [16, 16, 8], strides = [1, 1, 1]} : vector<18x18x8xf32> to vector<16x16x8xf32>
    %35 = vector.extract_strided_slice %30 {offsets = [1, 1, 0], sizes = [16, 16, 8], strides = [1, 1, 1]} : vector<18x18x8xf32> to vector<16x16x8xf32>
    %36 = vector.extract_strided_slice %30 {offsets = [1, 2, 0], sizes = [16, 16, 8], strides = [1, 1, 1]} : vector<18x18x8xf32> to vector<16x16x8xf32>
    %37 = vector.extract_strided_slice %30 {offsets = [2, 0, 0], sizes = [16, 16, 8], strides = [1, 1, 1]} : vector<18x18x8xf32> to vector<16x16x8xf32>
    %38 = vector.extract_strided_slice %30 {offsets = [2, 1, 0], sizes = [16, 16, 8], strides = [1, 1, 1]} : vector<18x18x8xf32> to vector<16x16x8xf32>
    %39 = vector.extract_strided_slice %30 {offsets = [2, 2, 0], sizes = [16, 16, 8], strides = [1, 1, 1]} : vector<18x18x8xf32> to vector<16x16x8xf32>
    %40 = tpu.concatenate %31, %32, %33, %34, %35, %36, %37, %38, %39 in 2 : vector<16x16x8xf32>, vector<16x16x8xf32>, vector<16x16x8xf32>, vector<16x16x8xf32>, vector<16x16x8xf32>, vector<16x16x8xf32>, vector<16x16x8xf32>, vector<16x16x8xf32>, vector<16x16x8xf32> -> vector<16x16x72xf32>
    %41 = vector.shape_cast %40 : vector<16x16x72xf32> to vector<256x72xf32>
    %c0_27 = arith.constant 0 : index
    %c0_28 = arith.constant 0 : index
    %42 = vector.load %arg3[%c0_27, %c0_28] : memref<72x8xf32, #tpu.memory_space<vmem>>, vector<72x8xf32>
    %cst_29 = arith.constant dense<0.000000e+00> : vector<256x8xf32>
    %43 = tpu.matmul %41, %42, %cst_29 {dimension_numbers = #tpu.dot_dimension_numbers<[1], [0], [0], [1], [0, 0, 1, 1], [], []>} : vector<256x72xf32>, vector<72x8xf32>, vector<256x8xf32> -> vector<256x8xf32>
    %c1_30 = arith.constant 1 : index
    %c0_31 = arith.constant 0 : index
    %44 = vector.load %arg4[%c1_30, %c0_31] : memref<2x8xf32, #tpu.memory_space<vmem>>, vector<1x8xf32>
    %45 = vector.shape_cast %44 : vector<1x8xf32> to vector<8xf32>
    %46 = vector.shape_cast %45 : vector<8xf32> to vector<1x8xf32>
    %47 = vector.broadcast %46 : vector<1x8xf32> to vector<256x8xf32>
    %48 = arith.addf %43, %47 : vector<256x8xf32>
    %49 = vector.shape_cast %1 : vector<16x16x8xf32> to vector<256x8xf32>
    %50 = arith.addf %49, %48 : vector<256x8xf32>
    %cst_32 = arith.constant 0.000000e+00 : f32
    %51 = vector.broadcast %cst_32 : f32 to vector<256x8xf32>
    %52 = arith.maximumf %50, %51 : vector<256x8xf32>
    %53 = vector.shape_cast %52 : vector<256x8xf32> to vector<1x16x16x8xf32>
    %c0_33 = arith.constant 0 : index
    %c0_34 = arith.constant 0 : index
    %c0_35 = arith.constant 0 : index
    %c0_36 = arith.constant 0 : index
    %54 = vector.load %arg5[%c0_33, %c0_34, %c0_35, %c0_36] : memref<1x16x16x8xf32, #tpu.memory_space<vmem>>, vector<1x16x16x8xf32>
    tpu.vector_store %arg5[%c0_33, %c0_34, %c0_35, %c0_36], %53 {strides = array<i32>} : memref<1x16x16x8xf32, #tpu.memory_space<vmem>>, vector<1x16x16x8xf32>,
    return
  }
  func.func @transform_0(%arg0: i32) -> (i32, i32, i32, i32) {
    %c0_i32 = arith.constant 0 : i32
    %c0_i32_0 = arith.constant 0 : i32
    %c0_i32_1 = arith.constant 0 : i32
    %c0_i32_2 = arith.constant 0 : i32
    return %arg0, %c0_i32, %c0_i32_0, %c0_i32_1 : i32, i32, i32, i32
  }
  func.func @transform_1(%arg0: i32) -> (i32, i32) {
    %c0_i32 = arith.constant 0 : i32
    %c0_i32_0 = arith.constant 0 : i32
    %c0_i32_1 = arith.constant 0 : i32
    return %c0_i32, %c0_i32_0 : i32, i32
  }
  func.func @transform_2(%arg0: i32) -> (i32, i32) {
    %c0_i32 = arith.constant 0 : i32
    %c0_i32_0 = arith.constant 0 : i32
    %c0_i32_1 = arith.constant 0 : i32
    return %c0_i32, %c0_i32_0 : i32, i32
  }
  func.func @transform_3(%arg0: i32) -> (i32, i32) {
    %c0_i32 = arith.constant 0 : i32
    %c0_i32_0 = arith.constant 0 : i32
    %c0_i32_1 = arith.constant 0 : i32
    return %c0_i32, %c0_i32_0 : i32, i32
  }
  func.func @transform_4(%arg0: i32) -> (i32, i32, i32, i32) {
    %c0_i32 = arith.constant 0 : i32
    %c0_i32_0 = arith.constant 0 : i32
    %c0_i32_1 = arith.constant 0 : i32
    %c0_i32_2 = arith.constant 0 : i32
    return %arg0, %c0_i32, %c0_i32_0, %c0_i32_1 : i32, i32, i32, i32
  }
}

</mosaic_0001>

<llo_original>
// kernel: resnet_basicblock_forward.1
$region0: #{resnet_basicblock_forward.1}
  #allocation0 [shape = 'u32[]', space=smem, size = 0x4, offset = 0x4, fixed_abs, tag = 'smem constant byte address 0x4 - core index']
  #allocation1 [shape = 'u32[72,128]{1,0:T(1,128)}', space=vmem, size = 0x9000, scoped, tag = 'internal scratch']
  #allocation2 [shape = 'f32[18,18,8]{2,1,0:T(8,128)}', space=vmem, size = 0x36000, scoped, tag = 'scratch operand']
  #allocation3 [shape = 'f32[18,18,8]{2,1,0:T(8,128)}', space=vmem, size = 0x36000, scoped, tag = 'scratch operand']
  %s0 = inlined_call_operand.vmem [shape: f32[2,16,16,8], index: 0, kind: input, shape index: {}]
  %s1 = inlined_call_operand.vmem [shape: f32[72,8], index: 1, kind: input, shape index: {}]
  %s2 = inlined_call_operand.vmem [shape: f32[72,8], index: 2, kind: input, shape index: {}]
  %s3 = inlined_call_operand.vmem [shape: f32[2,8], index: 3, kind: input, shape index: {}]
  %s4 = inlined_call_operand.vmem [shape: f32[2,16,16,8], index: 4, kind: output, shape index: {}]
  %s5 = sld [smem:[#allocation0]]
  $region49: #{resnet_basicblock_forward.1} parent=0
    _
  %s7 = ssub.s32 1, %s5
  %s8 = scalar_select 0, %s7, %s5
  loop: start=0, step=1, limit=4
  $region2: #{resnet_basicblock_forward.1} parent=0 // loop_pre_header
    _
  $region3: #{resnet_basicblock_forward.1} parent=0 // loop_header
    %s10 = sphi 0, %s14
    %p11 = scmp.ge.s32.totalorder %s10, 4
    %s20 = sphi 0, %s22
    %s23 = sphi 0, %s20
    %s24 = sphi 0, %s23
    %s40 = sphi 0, %s24
    %s44 = sphi 0, %s44
    %s46 = sphi 0, %s44
    %s47 = sphi 0, %s46
    %s61 = sphi 0, %s47
    %s65 = sphi 0, %s65
    %s67 = sphi 0, %s65
    %s68 = sphi 0, %s67
    %s82 = sphi 0, %s68
    %s86 = sphi 0, %s86
    %s88 = sphi 0, %s86
    %s89 = sphi 0, %s88
    %s103 = sphi 0, %s89
    %s109 = sphi 0, %s111
    %s112 = sphi 0, %s109
    %s113 = sphi 0, %s112
    %s129 = sphi 0, %s113
  $region4: #{resnet_basicblock_forward.1} parent=0 // loop_header_branch
    %13 = sbr.rel (%p11) target = $region8
  $region5: #{resnet_basicblock_forward.1} parent=0 // loop_body
    %s15 = ssub.s32 %s10, 1
    %s16 = ssub.s32 %s10, 2
    %s17 = sadd.s32 %s10, 1
    %s18 = ssub.s32 %s10, %s17
    %p19 = scmp.eq.s32.totalorder %s18, 0
    %s21 = sadd.s32 %s20, 1
    %s22 = scalar_select %p19, %s20, %s21
    %p25 = pneg %p19
    %p26 = scmp.eq.s32.totalorder %s10, 1
    %p27 = por %p25, %p26
    %p28 = scmp.ne.s32.totalorder %s20, %s23
    %p29 = scmp.eq.s32.totalorder %s10, 0
    %p30 = por %p28, %p29
    %p31 = scmp.ne.s32.totalorder %s20, %s23
    %p32 = scmp.eq.s32.totalorder %s15, 1
    %p33 = por %p31, %p32
    %p34 = scmp.ne.s32.totalorder %s23, %s24
    %p35 = scmp.eq.s32.totalorder %s15, 0
    %p36 = por %p34, %p35
    %p37 = scmp.ne.s32.totalorder %s23, %s24
    %p38 = scmp.eq.s32.totalorder %s16, 1
    %p39 = por %p37, %p38
    %p41 = scmp.ne.s32.totalorder %s24, %s40
    %p42 = scmp.eq.s32.totalorder %s16, 0
    %p43 = por %p41, %p42
    %s45 = sadd.s32 %s44, 1
    %p48 = scmp.eq.s32.totalorder %s10, 1
    %p49 = scmp.ne.s32.totalorder %s44, %s46
    %p50 = scmp.eq.s32.totalorder %s10, 0
    %p51 = por %p49, %p50
    %p52 = scmp.ne.s32.totalorder %s44, %s46
    %p53 = scmp.eq.s32.totalorder %s15, 1
    %p54 = por %p52, %p53
    %p55 = scmp.ne.s32.totalorder %s46, %s47
    %p56 = scmp.eq.s32.totalorder %s15, 0
    %p57 = por %p55, %p56
    %p58 = scmp.ne.s32.totalorder %s46, %s47
    %p59 = scmp.eq.s32.totalorder %s16, 1
    %p60 = por %p58, %p59
    %p62 = scmp.ne.s32.totalorder %s47, %s61
    %p63 = scmp.eq.s32.totalorder %s16, 0
    %p64 = por %p62, %p63
    %s66 = sadd.s32 %s65, 1
    %p69 = scmp.eq.s32.totalorder %s10, 1
    %p70 = scmp.ne.s32.totalorder %s65, %s67
    %p71 = scmp.eq.s32.totalorder %s10, 0
    %p72 = por %p70, %p71
    %p73 = scmp.ne.s32.totalorder %s65, %s67
    %p74 = scmp.eq.s32.totalorder %s15, 1
    %p75 = por %p73, %p74
    %p76 = scmp.ne.s32.totalorder %s67, %s68
    %p77 = scmp.eq.s32.totalorder %s15, 0
    %p78 = por %p76, %p77
    %p79 = scmp.ne.s32.totalorder %s67, %s68
    %p80 = scmp.eq.s32.totalorder %s16, 1
    %p81 = por %p79, %p80
    %p83 = scmp.ne.s32.totalorder %s68, %s82
    %p84 = scmp.eq.s32.totalorder %s16, 0
    %p85 = por %p83, %p84
    %s87 = sadd.s32 %s86, 1
    %p90 = scmp.eq.s32.totalorder %s10, 1
    %p91 = scmp.ne.s32.totalorder %s86, %s88
    %p92 = scmp.eq.s32.totalorder %s10, 0
    %p93 = por %p91, %p92
    %p94 = scmp.ne.s32.totalorder %s86, %s88
    %p95 = scmp.eq.s32.totalorder %s15, 1
    %p96 = por %p94, %p95
    %p97 = scmp.ne.s32.totalorder %s88, %s89
    %p98 = scmp.eq.s32.totalorder %s15, 0
    %p99 = por %p97, %p98
    %p100 = scmp.ne.s32.totalorder %s88, %s89
    %p101 = scmp.eq.s32.totalorder %s16, 1
    %p102 = por %p100, %p101
    %p104 = scmp.ne.s32.totalorder %s89, %s103
    %p105 = scmp.eq.s32.totalorder %s16, 0
    %p106 = por %p104, %p105
    %s107 = ssub.s32 %s10, %s17
    %p108 = scmp.eq.s32.totalorder %s107, 0
    %s110 = sadd.s32 %s109, 1
    %s111 = scalar_select %p108, %s109, %s110
    %p114 = pneg %p108
    %p115 = scmp.eq.s32.totalorder %s10, 1
    %p116 = por %p114, %p115
    %p117 = scmp.ne.s32.totalorder %s109, %s112
    %p118 = scmp.eq.s32.totalorder %s10, 0
    %p119 = por %p117, %p118
    %p120 = scmp.ne.s32.totalorder %s109, %s112
    %p121 = scmp.eq.s32.totalorder %s15, 1
    %p122 = por %p120, %p121
    %p123 = scmp.ne.s32.totalorder %s112, %s113
    %p124 = scmp.eq.s32.totalorder %s15, 0
    %p125 = por %p123, %p124
    %p126 = scmp.ne.s32.totalorder %s112, %s113
    %p127 = scmp.eq.s32.totalorder %s16, 1
    %p128 = por %p126, %p127
    %p130 = scmp.ne.s32.totalorder %s113, %s129
    %p131 = scmp.eq.s32.totalorder %s16, 0
    %p132 = por %p130, %p131
    %p133 = scmp.le.s32.totalorder 1, %s10
    %p134 = scmp.lt.s32.totalorder %s10, 3
    %p135 = pnand %p133, %p134
    %p136 = pneg %p135
    // Predicated region
    $region9: #{resnet_basicblock_forward.1} parent=5 // pred_check
      _
    $region10: #{resnet_basicblock_forward.1} parent=5 // pred_check_branch
      %138 = sbr.rel (%p135) target = $region12
    $region11: #{resnet_basicblock_forward.1} parent=5 // pred_region
      %s139 = ssub.s32 %s10, 1
      // Predicated region
      $region13: #{resnet_basicblock_forward.1} parent=11 // pred_check
        %p140 = pneg %p57
      $region14: #{resnet_basicblock_forward.1} parent=11 // pred_check_branch
        %142 = sbr.rel (%p140) target = $region16
      $region15: #{resnet_basicblock_forward.1} parent=11 // pred_region
        _
      $region16: #{resnet_basicblock_forward.1} parent=11 // pred_fallthru
        _
      // Predicated region
      $region17: #{resnet_basicblock_forward.1} parent=11 // pred_check
        %p143 = pneg %p78
      $region18: #{resnet_basicblock_forward.1} parent=11 // pred_check_branch
        %145 = sbr.rel (%p143) target = $region20
      $region19: #{resnet_basicblock_forward.1} parent=11 // pred_region
        _
      $region20: #{resnet_basicblock_forward.1} parent=11 // pred_fallthru
        _
      // Predicated region
      $region21: #{resnet_basicblock_forward.1} parent=11 // pred_check
        %p146 = pneg %p99
      $region22: #{resnet_basicblock_forward.1} parent=11 // pred_check_branch
        %148 = sbr.rel (%p146) target = $region24
      $region23: #{resnet_basicblock_forward.1} parent=11 // pred_region
        _
      $region24: #{resnet_basicblock_forward.1} parent=11 // pred_fallthru
        _
    $region12: #{resnet_basicblock_forward.1} parent=5 // pred_fallthru
      _
    %p149 = scmp.lt.s32.totalorder %s10, 2
    // Predicated region
    $region25: #{resnet_basicblock_forward.1} parent=5 // pred_check
      %p150 = pneg %p149
    $region26: #{resnet_basicblock_forward.1} parent=5 // pred_check_branch
      %152 = sbr.rel (%p150) target = $region28
    $region27: #{resnet_basicblock_forward.1} parent=5 // pred_region
      // Predicated region
      $region29: #{resnet_basicblock_forward.1} parent=27 // pred_check
        %p153 = pneg %p30
      $region30: #{resnet_basicblock_forward.1} parent=27 // pred_check_branch
        %155 = sbr.rel (%p153) target = $region32
      $region31: #{resnet_basicblock_forward.1} parent=27 // pred_region
        %p156 = scmp.lt.s32.totalorder %s10, 1
        %s157 = scalar_select %p156, %s10, 1
        %s158 = smul.addr %s157, 32
        %s159 = smul.addr %s158, 8
        %s160 = scalar_lea.vmem %s0, %s159
      $region32: #{resnet_basicblock_forward.1} parent=27 // pred_fallthru
        _
    $region28: #{resnet_basicblock_forward.1} parent=5 // pred_fallthru
      _
    %p161 = scmp.le.s32.totalorder 1, %s10
    %p162 = scmp.lt.s32.totalorder %s10, 3
    %p163 = pnand %p161, %p162
    %p164 = pneg %p163
    // Predicated region
    $region33: #{resnet_basicblock_forward.1} parent=5 // pred_check
      _
    $region34: #{resnet_basicblock_forward.1} parent=5 // pred_check_branch
      %166 = sbr.rel (%p163) target = $region36
    $region35: #{resnet_basicblock_forward.1} parent=5 // pred_region
      %s167 = ssub.s32 %s10, 1
      %p168 = scmp.lt.s32.totalorder %s15, 1
      %s169 = scalar_select %p168, %s15, 1
      %s170 = smul.addr %s169, 32
      %s171 = smul.addr %s170, 8
      %s172 = scalar_lea.vmem %s0, %s171
      %p173 = pneg %p36
      %p174 = pneg %p33
      %p175 = pneg %p57
      %p176 = pneg %p54
      %p177 = pneg %p78
      %p178 = pneg %p75
      %p179 = pneg %p99
      %p180 = pneg %p96
      %p181 = pneg %p125
      %p182 = pneg %p122
      %p183 = scmp.lt.s32.totalorder %s15, 1
      %s184 = scalar_select %p183, %s15, 1
      %s185 = smul.addr %s184, 32
      %s186 = smul.addr %s185, 8
      %s187 = scalar_lea.vmem %s4, %s186
      %p188 = scmp.lt.s32.totalorder %s15, 1
      %s189 = scalar_select %p188, %s15, 1
      %s190 = smul.addr %s189, 32
      %s191 = smul.addr %s190, 8
      %s192 = scalar_lea.vmem %s0, %s191
      %p193 = scmp.lt.s32.totalorder %s15, 1
      %s194 = scalar_select %p193, %s15, 1
      %s195 = smul.addr %s194, 32
      %s196 = smul.addr %s195, 8
      %s197 = scalar_lea.vmem %s4, %s196
      %v198 = vld [vmem:[%s192] sm:$0xff]
      %v199 = vld [vmem:[%s192 + $0x8] sm:$0xff]
      %v200 = vld [vmem:[%s192 + $0x10] sm:$0xff]
      %v201 = vld [vmem:[%s192 + $0x18] sm:$0xff]
      %v202 = vld [vmem:[%s192 + $0x20] sm:$0xff]
      %v203 = vld [vmem:[%s192 + $0x28] sm:$0xff]
      %v204 = vld [vmem:[%s192 + $0x30] sm:$0xff]
      %v205 = vld [vmem:[%s192 + $0x38] sm:$0xff]
      %v206 = vld [vmem:[%s192 + $0x40] sm:$0xff]
      %v207 = vld [vmem:[%s192 + $0x48] sm:$0xff]
      %v208 = vld [vmem:[%s192 + $0x50] sm:$0xff]
      %v209 = vld [vmem:[%s192 + $0x58] sm:$0xff]
      %v210 = vld [vmem:[%s192 + $0x60] sm:$0xff]
      %v211 = vld [vmem:[%s192 + $0x68] sm:$0xff]
      %v212 = vld [vmem:[%s192 + $0x70] sm:$0xff]
      %v213 = vld [vmem:[%s192 + $0x78] sm:$0xff]
      %v214 = vld [vmem:[%s192 + $0x80] sm:$0xff]
      %v215 = vld [vmem:[%s192 + $0x88] sm:$0xff]
      %v216 = vld [vmem:[%s192 + $0x90] sm:$0xff]
      %v217 = vld [vmem:[%s192 + $0x98] sm:$0xff]
      %v218 = vld [vmem:[%s192 + $0xa0] sm:$0xff]
      %v219 = vld [vmem:[%s192 + $0xa8] sm:$0xff]
      %v220 = vld [vmem:[%s192 + $0xb0] sm:$0xff]
      %v221 = vld [vmem:[%s192 + $0xb8] sm:$0xff]
      %v222 = vld [vmem:[%s192 + $0xc0] sm:$0xff]
      %v223 = vld [vmem:[%s192 + $0xc8] sm:$0xff]
      %v224 = vld [vmem:[%s192 + $0xd0] sm:$0xff]
      %v225 = vld [vmem:[%s192 + $0xd8] sm:$0xff]
      %v226 = vld [vmem:[%s192 + $0xe0] sm:$0xff]
      %v227 = vld [vmem:[%s192 + $0xe8] sm:$0xff]
      %v228 = vld [vmem:[%s192 + $0xf0] sm:$0xff]
      %v229 = vld [vmem:[%s192 + $0xf8] sm:$0xff]
      %vm230 = vcmask 64512
      %231 = vst.msk [vmem:[#allocation2] sm:$0xff] %vm230, 0.0
      %232 = vst.msk [vmem:[#allocation2 + $0x8] sm:$0xff] %vm230, 0.0
      %vm233 = vcmask 58368
      %234 = vst.msk [vmem:[#allocation2 + $0x10] sm:$0x3] %vm233, 0.0
      %235 = vst.msk [vmem:[#allocation2 + $0x18] sm:$0xff] %vm230, 0.0
      %236 = vst.msk [vmem:[#allocation2 + $0x20] sm:$0xff] %vm230, 0.0
      %237 = vst.msk [vmem:[#allocation2 + $0x28] sm:$0x3] %vm233, 0.0
      %238 = vst.msk [vmem:[#allocation2 + $0x30] sm:$0xff] %vm230, 0.0
      %239 = vst.msk [vmem:[#allocation2 + $0x38] sm:$0xff] %vm230, 0.0
      %240 = vst.msk [vmem:[#allocation2 + $0x40] sm:$0x3] %vm233, 0.0
      %241 = vst.msk [vmem:[#allocation2 + $0x48] sm:$0xff] %vm230, 0.0
      %242 = vst.msk [vmem:[#allocation2 + $0x50] sm:$0xff] %vm230, 0.0
      %243 = vst.msk [vmem:[#allocation2 + $0x58] sm:$0x3] %vm233, 0.0
      %244 = vst.msk [vmem:[#allocation2 + $0x60] sm:$0xff] %vm230, 0.0
      %245 = vst.msk [vmem:[#allocation2 + $0x68] sm:$0xff] %vm230, 0.0
      %246 = vst.msk [vmem:[#allocation2 + $0x70] sm:$0x3] %vm233, 0.0
      %247 = vst.msk [vmem:[#allocation2 + $0x78] sm:$0xff] %vm230, 0.0
      %248 = vst.msk [vmem:[#allocation2 + $0x80] sm:$0xff] %vm230, 0.0
      %249 = vst.msk [vmem:[#allocation2 + $0x88] sm:$0x3] %vm233, 0.0
      %250 = vst.msk [vmem:[#allocation2 + $0x90] sm:$0xff] %vm230, 0.0
      %251 = vst.msk [vmem:[#allocation2 + $0x98] sm:$0xff] %vm230, 0.0
      %252 = vst.msk [vmem:[#allocation2 + $0xa0] sm:$0x3] %vm233, 0.0
      %253 = vst.msk [vmem:[#allocation2 + $0xa8] sm:$0xff] %vm230, 0.0
      %254 = vst.msk [vmem:[#allocation2 + $0xb0] sm:$0xff] %vm230, 0.0
      %255 = vst.msk [vmem:[#allocation2 + $0xb8] sm:$0x3] %vm233, 0.0
      %256 = vst.msk [vmem:[#allocation2 + $0xc0] sm:$0xff] %vm230, 0.0
      %257 = vst.msk [vmem:[#allocation2 + $0xc8] sm:$0xff] %vm230, 0.0
      %258 = vst.msk [vmem:[#allocation2 + $0xd0] sm:$0x3] %vm233, 0.0
      %259 = vst.msk [vmem:[#allocation2 + $0xd8] sm:$0xff] %vm230, 0.0
      %260 = vst.msk [vmem:[#allocation2 + $0xe0] sm:$0xff] %vm230, 0.0
      %261 = vst.msk [vmem:[#allocation2 + $0xe8] sm:$0x3] %vm233, 0.0
      %262 = vst.msk [vmem:[#allocation2 + $0xf0] sm:$0xff] %vm230, 0.0
      %263 = vst.msk [vmem:[#allocation2 + $0xf8] sm:$0xff] %vm230, 0.0
      %264 = vst.msk [vmem:[#allocation2 + $0x100] sm:$0x3] %vm233, 0.0
      %265 = vst.msk [vmem:[#allocation2 + $0x108] sm:$0xff] %vm230, 0.0
      %266 = vst.msk [vmem:[#allocation2 + $0x110] sm:$0xff] %vm230, 0.0
      %267 = vst.msk [vmem:[#allocation2 + $0x118] sm:$0x3] %vm233, 0.0
      %268 = vst.msk [vmem:[#allocation2 + $0x120] sm:$0xff] %vm230, 0.0
      %269 = vst.msk [vmem:[#allocation2 + $0x128] sm:$0xff] %vm230, 0.0
      %270 = vst.msk [vmem:[#allocation2 + $0x130] sm:$0x3] %vm233, 0.0
      %271 = vst.msk [vmem:[#allocation2 + $0x138] sm:$0xff] %vm230, 0.0
      %272 = vst.msk [vmem:[#allocation2 + $0x140] sm:$0xff] %vm230, 0.0
      %273 = vst.msk [vmem:[#allocation2 + $0x148] sm:$0x3] %vm233, 0.0
      %274 = vst.msk [vmem:[#allocation2 + $0x150] sm:$0xff] %vm230, 0.0
      %275 = vst.msk [vmem:[#allocation2 + $0x158] sm:$0xff] %vm230, 0.0
      %276 = vst.msk [vmem:[#allocation2 + $0x160] sm:$0x3] %vm233, 0.0
      %277 = vst.msk [vmem:[#allocation2 + $0x168] sm:$0xff] %vm230, 0.0
      %278 = vst.msk [vmem:[#allocation2 + $0x170] sm:$0xff] %vm230, 0.0
      %279 = vst.msk [vmem:[#allocation2 + $0x178] sm:$0x3] %vm233, 0.0
      %280 = vst.msk [vmem:[#allocation2 + $0x180] sm:$0xff] %vm230, 0.0
      %281 = vst.msk [vmem:[#allocation2 + $0x188] sm:$0xff] %vm230, 0.0
      %282 = vst.msk [vmem:[#allocation2 + $0x190] sm:$0x3] %vm233, 0.0
      %283 = vst.msk [vmem:[#allocation2 + $0x198] sm:$0xff] %vm230, 0.0
      %284 = vst.msk [vmem:[#allocation2 + $0x1a0] sm:$0xff] %vm230, 0.0
      %285 = vst.msk [vmem:[#allocation2 + $0x1a8] sm:$0x3] %vm233, 0.0
      %s286 = scalar_lea.vmem [#allocation2], 24
      %287 = vst.msk [vmem:[%s286 + $0x1] sm:$0xff] %vm230, %v198
      %288 = vst.msk [vmem:[%s286 + $0x9] sm:$0xff] %vm230, %v199
      %289 = vst.msk [vmem:[%s286 + $0x19] sm:$0xff] %vm230, %v200
      %290 = vst.msk [vmem:[%s286 + $0x21] sm:$0xff] %vm230, %v201
      %291 = vst.msk [vmem:[%s286 + $0x31] sm:$0xff] %vm230, %v202
      %292 = vst.msk [vmem:[%s286 + $0x39] sm:$0xff] %vm230, %v203
      %293 = vst.msk [vmem:[%s286 + $0x49] sm:$0xff] %vm230, %v204
      %294 = vst.msk [vmem:[%s286 + $0x51] sm:$0xff] %vm230, %v205
      %295 = vst.msk [vmem:[%s286 + $0x61] sm:$0xff] %vm230, %v206
      %296 = vst.msk [vmem:[%s286 + $0x69] sm:$0xff] %vm230, %v207
      %297 = vst.msk [vmem:[%s286 + $0x79] sm:$0xff] %vm230, %v208
      %298 = vst.msk [vmem:[%s286 + $0x81] sm:$0xff] %vm230, %v209
      %299 = vst.msk [vmem:[%s286 + $0x91] sm:$0xff] %vm230, %v210
      %300 = vst.msk [vmem:[%s286 + $0x99] sm:$0xff] %vm230, %v211
      %301 = vst.msk [vmem:[%s286 + $0xa9] sm:$0xff] %vm230, %v212
      %302 = vst.msk [vmem:[%s286 + $0xb1] sm:$0xff] %vm230, %v213
      %303 = vst.msk [vmem:[%s286 + $0xc1] sm:$0xff] %vm230, %v214
      %304 = vst.msk [vmem:[%s286 + $0xc9] sm:$0xff] %vm230, %v215
      %305 = vst.msk [vmem:[%s286 + $0xd9] sm:$0xff] %vm230, %v216
      %306 = vst.msk [vmem:[%s286 + $0xe1] sm:$0xff] %vm230, %v217
      %307 = vst.msk [vmem:[%s286 + $0xf1] sm:$0xff] %vm230, %v218
      %308 = vst.msk [vmem:[%s286 + $0xf9] sm:$0xff] %vm230, %v219
      %309 = vst.msk [vmem:[%s286 + $0x109] sm:$0xff] %vm230, %v220
      %310 = vst.msk [vmem:[%s286 + $0x111] sm:$0xff] %vm230, %v221
      %311 = vst.msk [vmem:[%s286 + $0x121] sm:$0xff] %vm230, %v222
      %312 = vst.msk [vmem:[%s286 + $0x129] sm:$0xff] %vm230, %v223
      %313 = vst.msk [vmem:[%s286 + $0x139] sm:$0xff] %vm230, %v224
      %314 = vst.msk [vmem:[%s286 + $0x141] sm:$0xff] %vm230, %v225
      %315 = vst.msk [vmem:[%s286 + $0x151] sm:$0xff] %vm230, %v226
      %316 = vst.msk [vmem:[%s286 + $0x159] sm:$0xff] %vm230, %v227
      %317 = vst.msk [vmem:[%s286 + $0x169] sm:$0xff] %vm230, %v228
      %318 = vst.msk [vmem:[%s286 + $0x171] sm:$0xff] %vm230, %v229
      %v319 = vld [vmem:[#allocation2] sm:$0xff]
      %v320 = vld [vmem:[#allocation2 + $0x8] sm:$0xff]
      %v321 = vld [vmem:[#allocation2 + $0x10] sm:$0x3]
      %v322 = vld [vmem:[#allocation2 + $0x18] sm:$0xff]
      %v323 = vld [vmem:[#allocation2 + $0x20] sm:$0xff]
      %v324 = vld [vmem:[#allocation2 + $0x28] sm:$0x3]
      %v325 = vld [vmem:[#allocation2 + $0x30] sm:$0xff]
      %v326 = vld [vmem:[#allocation2 + $0x38] sm:$0xff]
      %v327 = vld [vmem:[#allocation2 + $0x40] sm:$0x3]
      %v328 = vld [vmem:[#allocation2 + $0x48] sm:$0xff]
      %v329 = vld [vmem:[#allocation2 + $0x50] sm:$0xff]
      %v330 = vld [vmem:[#allocation2 + $0x58] sm:$0x3]
      %v331 = vld [vmem:[#allocation2 + $0x60] sm:$0xff]
      %v332 = vld [vmem:[#allocation2 + $0x68] sm:$0xff]
      %v333 = vld [vmem:[#allocation2 + $0x70] sm:$0x3]
      %v334 = vld [vmem:[#allocation2 + $0x78] sm:$0xff]
      %v335 = vld [vmem:[#allocation2 + $0x80] sm:$0xff]
      %v336 = vld [vmem:[#allocation2 + $0x88] sm:$0x3]
      %v337 = vld [vmem:[#allocation2 + $0x90] sm:$0xff]
      %v338 = vld [vmem:[#allocation2 + $0x98] sm:$0xff]
      %v339 = vld [vmem:[#allocation2 + $0xa0] sm:$0x3]
      %v340 = vld [vmem:[#allocation2 + $0xa8] sm:$0xff]
      %v341 = vld [vmem:[#allocation2 + $0xb0] sm:$0xff]
      %v342 = vld [vmem:[#allocation2 + $0xb8] sm:$0x3]
      %v343 = vld [vmem:[#allocation2 + $0xc0] sm:$0xff]
      %v344 = vld [vmem:[#allocation2 + $0xc8] sm:$0xff]
      %v345 = vld [vmem:[#allocation2 + $0xd0] sm:$0x3]
      %v346 = vld [vmem:[#allocation2 + $0xd8] sm:$0xff]
      %v347 = vld [vmem:[#allocation2 + $0xe0] sm:$0xff]
      %v348 = vld [vmem:[#allocation2 + $0xe8] sm:$0x3]
      %v349 = vld [vmem:[#allocation2 + $0xf0] sm:$0xff]
      %v350 = vld [vmem:[#allocation2 + $0xf8] sm:$0xff]
      %v351 = vld [vmem:[#allocation2 + $0x100] sm:$0x3]
      %v352 = vld [vmem:[#allocation2 + $0x108] sm:$0xff]
      %v353 = vld [vmem:[#allocation2 + $0x110] sm:$0xff]
      %v354 = vld [vmem:[#allocation2 + $0x118] sm:$0x3]
      %v355 = vld [vmem:[#allocation2 + $0x120] sm:$0xff]
      %v356 = vld [vmem:[#allocation2 + $0x128] sm:$0xff]
      %v357 = vld [vmem:[#allocation2 + $0x130] sm:$0x3]
      %v358 = vld [vmem:[#allocation2 + $0x138] sm:$0xff]
      %v359 = vld [vmem:[#allocation2 + $0x140] sm:$0xff]
      %v360 = vld [vmem:[#allocation2 + $0x148] sm:$0x3]
      %v361 = vld [vmem:[#allocation2 + $0x150] sm:$0xff]
      %v362 = vld [vmem:[#allocation2 + $0x158] sm:$0xff]
      %v363 = vld [vmem:[#allocation2 + $0x160] sm:$0x3]
      %v364 = vld [vmem:[#allocation2 + $0x168] sm:$0xff]
      %v365 = vld [vmem:[#allocation2 + $0x170] sm:$0xff]
      %v366 = vld [vmem:[#allocation2 + $0x178] sm:$0x3]
      %v367 = vld [vmem:[#allocation2 + $0x180] sm:$0xff]
      %v368 = vld [vmem:[#allocation2 + $0x188] sm:$0xff]
      %v369 = vld [vmem:[#allocation2 + $0x190] sm:$0x3]
      %v370 = vld [vmem:[#allocation2 + $0x198] sm:$0xff]
      %v371 = vld [vmem:[#allocation2 + $0x1a0] sm:$0xff]
      %v372 = vld [vmem:[#allocation2 + $0x1a8] sm:$0x3]
      %vm421 = vcmask 1046528
      %v422 = vrot.slane %v319, 1
      %v423 = vrot.slane %v320, 1
      %v424 = vsel %vm421, %v422, %v423
      %v425 = vrot.slane %v321, 1
      %v426 = vsel %vm421, %v423, %v425
      %v427 = vrot.slane %v322, 1
      %v428 = vrot.slane %v323, 1
      %v429 = vsel %vm421, %v427, %v428
      %v430 = vrot.slane %v324, 1
      %v431 = vsel %vm421, %v428, %v430
      %v432 = vrot.slane %v325, 1
      %v433 = vrot.slane %v326, 1
      %v434 = vsel %vm421, %v432, %v433
      %v435 = vrot.slane %v327, 1
      %v436 = vsel %vm421, %v433, %v435
      %v437 = vrot.slane %v328, 1
      %v438 = vrot.slane %v329, 1
      %v439 = vsel %vm421, %v437, %v438
      %v440 = vrot.slane %v330, 1
      %v441 = vsel %vm421, %v438, %v440
      %v442 = vrot.slane %v331, 1
      %v443 = vrot.slane %v332, 1
      %v444 = vsel %vm421, %v442, %v443
      %v445 = vrot.slane %v333, 1
      %v446 = vsel %vm421, %v443, %v445
      %v447 = vrot.slane %v334, 1
      %v448 = vrot.slane %v335, 1
      %v449 = vsel %vm421, %v447, %v448
      %v450 = vrot.slane %v336, 1
      %v451 = vsel %vm421, %v448, %v450
      %v452 = vrot.slane %v337, 1
      %v453 = vrot.slane %v338, 1
      %v454 = vsel %vm421, %v452, %v453
      %v455 = vrot.slane %v339, 1
      %v456 = vsel %vm421, %v453, %v455
      %v457 = vrot.slane %v340, 1
      %v458 = vrot.slane %v341, 1
      %v459 = vsel %vm421, %v457, %v458
      %v460 = vrot.slane %v342, 1
      %v461 = vsel %vm421, %v458, %v460
      %v462 = vrot.slane %v343, 1
      %v463 = vrot.slane %v344, 1
      %v464 = vsel %vm421, %v462, %v463
      %v465 = vrot.slane %v345, 1
      %v466 = vsel %vm421, %v463, %v465
      %v467 = vrot.slane %v346, 1
      %v468 = vrot.slane %v347, 1
      %v469 = vsel %vm421, %v467, %v468
      %v470 = vrot.slane %v348, 1
      %v471 = vsel %vm421, %v468, %v470
      %v472 = vrot.slane %v349, 1
      %v473 = vrot.slane %v350, 1
      %v474 = vsel %vm421, %v472, %v473
      %v475 = vrot.slane %v351, 1
      %v476 = vsel %vm421, %v473, %v475
      %v477 = vrot.slane %v352, 1
      %v478 = vrot.slane %v353, 1
      %v479 = vsel %vm421, %v477, %v478
      %v480 = vrot.slane %v354, 1
      %v481 = vsel %vm421, %v478, %v480
      %v482 = vrot.slane %v355, 1
      %v483 = vrot.slane %v356, 1
      %v484 = vsel %vm421, %v482, %v483
      %v485 = vrot.slane %v357, 1
      %v486 = vsel %vm421, %v483, %v485
      %v487 = vrot.slane %v358, 1
      %v488 = vrot.slane %v359, 1
      %v489 = vsel %vm421, %v487, %v488
      %v490 = vrot.slane %v360, 1
      %v491 = vsel %vm421, %v488, %v490
      %v492 = vrot.slane %v361, 1
      %v493 = vrot.slane %v362, 1
      %v494 = vsel %vm421, %v492, %v493
      %v495 = vrot.slane %v363, 1
      %v496 = vsel %vm421, %v493, %v495
      %v497 = vrot.slane %v364, 1
      %v498 = vrot.slane %v365, 1
      %v499 = vsel %vm421, %v497, %v498
      %v500 = vrot.slane %v366, 1
      %v501 = vsel %vm421, %v498, %v500
      %502 = vrot.lane.b32.xlu0 %v424, 8
      %v503 = vpop.permute.xlu0 %502
      %504 = vrot.lane.b32.xlu0 %v426, 8
      %v505 = vpop.permute.xlu0 %504
      %506 = vrot.lane.b32.xlu0 %v429, 8
      %v507 = vpop.permute.xlu0 %506
      %508 = vrot.lane.b32.xlu0 %v431, 8
      %v509 = vpop.permute.xlu0 %508
      %510 = vrot.lane.b32.xlu0 %v434, 8
      %v511 = vpop.permute.xlu0 %510
      %512 = vrot.lane.b32.xlu0 %v436, 8
      %v513 = vpop.permute.xlu0 %512
      %514 = vrot.lane.b32.xlu0 %v439, 8
      %v515 = vpop.permute.xlu0 %514
      %516 = vrot.lane.b32.xlu0 %v441, 8
      %v517 = vpop.permute.xlu0 %516
      %518 = vrot.lane.b32.xlu0 %v444, 8
      %v519 = vpop.permute.xlu0 %518
      %520 = vrot.lane.b32.xlu0 %v446, 8
      %v521 = vpop.permute.xlu0 %520
      %522 = vrot.lane.b32.xlu0 %v449, 8
      %v523 = vpop.permute.xlu0 %522
      %524 = vrot.lane.b32.xlu0 %v451, 8
      %v525 = vpop.permute.xlu0 %524
      %526 = vrot.lane.b32.xlu0 %v454, 8
      %v527 = vpop.permute.xlu0 %526
      %528 = vrot.lane.b32.xlu0 %v456, 8
      %v529 = vpop.permute.xlu0 %528
      %530 = vrot.lane.b32.xlu0 %v459, 8
      %v531 = vpop.permute.xlu0 %530
      %532 = vrot.lane.b32.xlu0 %v461, 8
      %v533 = vpop.permute.xlu0 %532
      %534 = vrot.lane.b32.xlu0 %v464, 8
      %v535 = vpop.permute.xlu0 %534
      %536 = vrot.lane.b32.xlu0 %v466, 8
      %v537 = vpop.permute.xlu0 %536
      %538 = vrot.lane.b32.xlu0 %v469, 8
      %v539 = vpop.permute.xlu0 %538
      %540 = vrot.lane.b32.xlu0 %v471, 8
      %v541 = vpop.permute.xlu0 %540
      %542 = vrot.lane.b32.xlu0 %v474, 8
      %v543 = vpop.permute.xlu0 %542
      %544 = vrot.lane.b32.xlu0 %v476, 8
      %v545 = vpop.permute.xlu0 %544
      %546 = vrot.lane.b32.xlu0 %v479, 8
      %v547 = vpop.permute.xlu0 %546
      %548 = vrot.lane.b32.xlu0 %v481, 8
      %v549 = vpop.permute.xlu0 %548
      %550 = vrot.lane.b32.xlu0 %v484, 8
      %v551 = vpop.permute.xlu0 %550
      %552 = vrot.lane.b32.xlu0 %v486, 8
      %v553 = vpop.permute.xlu0 %552
      %554 = vrot.lane.b32.xlu0 %v489, 8
      %v555 = vpop.permute.xlu0 %554
      %556 = vrot.lane.b32.xlu0 %v491, 8
      %v557 = vpop.permute.xlu0 %556
      %558 = vrot.lane.b32.xlu0 %v494, 8
      %v559 = vpop.permute.xlu0 %558
      %560 = vrot.lane.b32.xlu0 %v496, 8
      %v561 = vpop.permute.xlu0 %560
      %562 = vrot.lane.b32.xlu0 %v499, 8
      %v563 = vpop.permute.xlu0 %562
      %564 = vrot.lane.b32.xlu0 %v501, 8
      %v565 = vpop.permute.xlu0 %564
      %vm598 = vcmask 1045504
      %v599 = vrot.slane %v319, 2
      %v600 = vrot.slane %v320, 2
      %v601 = vsel %vm598, %v599, %v600
      %v602 = vrot.slane %v321, 2
      %v603 = vsel %vm598, %v600, %v602
      %v604 = vrot.slane %v322, 2
      %v605 = vrot.slane %v323, 2
      %v606 = vsel %vm598, %v604, %v605
      %v607 = vrot.slane %v324, 2
      %v608 = vsel %vm598, %v605, %v607
      %v609 = vrot.slane %v325, 2
      %v610 = vrot.slane %v326, 2
      %v611 = vsel %vm598, %v609, %v610
      %v612 = vrot.slane %v327, 2
      %v613 = vsel %vm598, %v610, %v612
      %v614 = vrot.slane %v328, 2
      %v615 = vrot.slane %v329, 2
      %v616 = vsel %vm598, %v614, %v615
      %v617 = vrot.slane %v330, 2
      %v618 = vsel %vm598, %v615, %v617
      %v619 = vrot.slane %v331, 2
      %v620 = vrot.slane %v332, 2
      %v621 = vsel %vm598, %v619, %v620
      %v622 = vrot.slane %v333, 2
      %v623 = vsel %vm598, %v620, %v622
      %v624 = vrot.slane %v334, 2
      %v625 = vrot.slane %v335, 2
      %v626 = vsel %vm598, %v624, %v625
      %v627 = vrot.slane %v336, 2
      %v628 = vsel %vm598, %v625, %v627
      %v629 = vrot.slane %v337, 2
      %v630 = vrot.slane %v338, 2
      %v631 = vsel %vm598, %v629, %v630
      %v632 = vrot.slane %v339, 2
      %v633 = vsel %vm598, %v630, %v632
      %v634 = vrot.slane %v340, 2
      %v635 = vrot.slane %v341, 2
      %v636 = vsel %vm598, %v634, %v635
      %v637 = vrot.slane %v342, 2
      %v638 = vsel %vm598, %v635, %v637
      %v639 = vrot.slane %v343, 2
      %v640 = vrot.slane %v344, 2
      %v641 = vsel %vm598, %v639, %v640
      %v642 = vrot.slane %v345, 2
      %v643 = vsel %vm598, %v640, %v642
      %v644 = vrot.slane %v346, 2
      %v645 = vrot.slane %v347, 2
      %v646 = vsel %vm598, %v644, %v645
      %v647 = vrot.slane %v348, 2
      %v648 = vsel %vm598, %v645, %v647
      %v649 = vrot.slane %v349, 2
      %v650 = vrot.slane %v350, 2
      %v651 = vsel %vm598, %v649, %v650
      %v652 = vrot.slane %v351, 2
      %v653 = vsel %vm598, %v650, %v652
      %v654 = vrot.slane %v352, 2
      %v655 = vrot.slane %v353, 2
      %v656 = vsel %vm598, %v654, %v655
      %v657 = vrot.slane %v354, 2
      %v658 = vsel %vm598, %v655, %v657
      %v659 = vrot.slane %v355, 2
      %v660 = vrot.slane %v356, 2
      %v661 = vsel %vm598, %v659, %v660
      %v662 = vrot.slane %v357, 2
      %v663 = vsel %vm598, %v660, %v662
      %v664 = vrot.slane %v358, 2
      %v665 = vrot.slane %v359, 2
      %v666 = vsel %vm598, %v664, %v665
      %v667 = vrot.slane %v360, 2
      %v668 = vsel %vm598, %v665, %v667
      %v669 = vrot.slane %v361, 2
      %v670 = vrot.slane %v362, 2
      %v671 = vsel %vm598, %v669, %v670
      %v672 = vrot.slane %v363, 2
      %v673 = vsel %vm598, %v670, %v672
      %v674 = vrot.slane %v364, 2
      %v675 = vrot.slane %v365, 2
      %v676 = vsel %vm598, %v674, %v675
      %v677 = vrot.slane %v366, 2
      %v678 = vsel %vm598, %v675, %v677
      %679 = vrot.lane.b32.xlu0 %v601, 16
      %v680 = vpop.permute.xlu0 %679
      %681 = vrot.lane.b32.xlu0 %v603, 16
      %v682 = vpop.permute.xlu0 %681
      %683 = vrot.lane.b32.xlu0 %v606, 16
      %v684 = vpop.permute.xlu0 %683
      %685 = vrot.lane.b32.xlu0 %v608, 16
      %v686 = vpop.permute.xlu0 %685
      %687 = vrot.lane.b32.xlu0 %v611, 16
      %v688 = vpop.permute.xlu0 %687
      %689 = vrot.lane.b32.xlu0 %v613, 16
      %v690 = vpop.permute.xlu0 %689
      %691 = vrot.lane.b32.xlu0 %v616, 16
      %v692 = vpop.permute.xlu0 %691
      %693 = vrot.lane.b32.xlu0 %v618, 16
      %v694 = vpop.permute.xlu0 %693
      %695 = vrot.lane.b32.xlu0 %v621, 16
      %v696 = vpop.permute.xlu0 %695
      %697 = vrot.lane.b32.xlu0 %v623, 16
      %v698 = vpop.permute.xlu0 %697
      %699 = vrot.lane.b32.xlu0 %v626, 16
      %v700 = vpop.permute.xlu0 %699
      %701 = vrot.lane.b32.xlu0 %v628, 16
      %v702 = vpop.permute.xlu0 %701
      %703 = vrot.lane.b32.xlu0 %v631, 16
      %v704 = vpop.permute.xlu0 %703
      %705 = vrot.lane.b32.xlu0 %v633, 16
      %v706 = vpop.permute.xlu0 %705
      %707 = vrot.lane.b32.xlu0 %v636, 16
      %v708 = vpop.permute.xlu0 %707
      %709 = vrot.lane.b32.xlu0 %v638, 16
      %v710 = vpop.permute.xlu0 %709
      %711 = vrot.lane.b32.xlu0 %v641, 16
      %v712 = vpop.permute.xlu0 %711
      %713 = vrot.lane.b32.xlu0 %v643, 16
      %v714 = vpop.permute.xlu0 %713
      %715 = vrot.lane.b32.xlu0 %v646, 16
      %v716 = vpop.permute.xlu0 %715
      %717 = vrot.lane.b32.xlu0 %v648, 16
      %v718 = vpop.permute.xlu0 %717
      %719 = vrot.lane.b32.xlu0 %v651, 16
      %v720 = vpop.permute.xlu0 %719
      %721 = vrot.lane.b32.xlu0 %v653, 16
      %v722 = vpop.permute.xlu0 %721
      %723 = vrot.lane.b32.xlu0 %v656, 16
      %v724 = vpop.permute.xlu0 %723
      %725 = vrot.lane.b32.xlu0 %v658, 16
      %v726 = vpop.permute.xlu0 %725
      %727 = vrot.lane.b32.xlu0 %v661, 16
      %v728 = vpop.permute.xlu0 %727
      %729 = vrot.lane.b32.xlu0 %v663, 16
      %v730 = vpop.permute.xlu0 %729
      %731 = vrot.lane.b32.xlu0 %v666, 16
      %v732 = vpop.permute.xlu0 %731
      %733 = vrot.lane.b32.xlu0 %v668, 16
      %v734 = vpop.permute.xlu0 %733
      %735 = vrot.lane.b32.xlu0 %v671, 16
      %v736 = vpop.permute.xlu0 %735
      %737 = vrot.lane.b32.xlu0 %v673, 16
      %v738 = vpop.permute.xlu0 %737
      %739 = vrot.lane.b32.xlu0 %v676, 16
      %v740 = vpop.permute.xlu0 %739
      %741 = vrot.lane.b32.xlu0 %v678, 16
      %v742 = vpop.permute.xlu0 %741
      %777 = vrot.lane.b32.xlu0 %v322, 24
      %v778 = vpop.permute.xlu0 %777
      %779 = vrot.lane.b32.xlu0 %v323, 24
      %v780 = vpop.permute.xlu0 %779
      %781 = vrot.lane.b32.xlu0 %v325, 24
      %v782 = vpop.permute.xlu0 %781
      %783 = vrot.lane.b32.xlu0 %v326, 24
      %v784 = vpop.permute.xlu0 %783
      %785 = vrot.lane.b32.xlu0 %v328, 24
      %v786 = vpop.permute.xlu0 %785
      %787 = vrot.lane.b32.xlu0 %v329, 24
      %v788 = vpop.permute.xlu0 %787
      %789 = vrot.lane.b32.xlu0 %v331, 24
      %v790 = vpop.permute.xlu0 %789
      %791 = vrot.lane.b32.xlu0 %v332, 24
      %v792 = vpop.permute.xlu0 %791
      %793 = vrot.lane.b32.xlu0 %v334, 24
      %v794 = vpop.permute.xlu0 %793
      %795 = vrot.lane.b32.xlu0 %v335, 24
      %v796 = vpop.permute.xlu0 %795
      %797 = vrot.lane.b32.xlu0 %v337, 24
      %v798 = vpop.permute.xlu0 %797
      %799 = vrot.lane.b32.xlu0 %v338, 24
      %v800 = vpop.permute.xlu0 %799
      %801 = vrot.lane.b32.xlu0 %v340, 24
      %v802 = vpop.permute.xlu0 %801
      %803 = vrot.lane.b32.xlu0 %v341, 24
      %v804 = vpop.permute.xlu0 %803
      %805 = vrot.lane.b32.xlu0 %v343, 24
      %v806 = vpop.permute.xlu0 %805
      %807 = vrot.lane.b32.xlu0 %v344, 24
      %v808 = vpop.permute.xlu0 %807
      %809 = vrot.lane.b32.xlu0 %v346, 24
      %v810 = vpop.permute.xlu0 %809
      %811 = vrot.lane.b32.xlu0 %v347, 24
      %v812 = vpop.permute.xlu0 %811
      %813 = vrot.lane.b32.xlu0 %v349, 24
      %v814 = vpop.permute.xlu0 %813
      %815 = vrot.lane.b32.xlu0 %v350, 24
      %v816 = vpop.permute.xlu0 %815
      %817 = vrot.lane.b32.xlu0 %v352, 24
      %v818 = vpop.permute.xlu0 %817
      %819 = vrot.lane.b32.xlu0 %v353, 24
      %v820 = vpop.permute.xlu0 %819
      %821 = vrot.lane.b32.xlu0 %v355, 24
      %v822 = vpop.permute.xlu0 %821
      %823 = vrot.lane.b32.xlu0 %v356, 24
      %v824 = vpop.permute.xlu0 %823
      %825 = vrot.lane.b32.xlu0 %v358, 24
      %v826 = vpop.permute.xlu0 %825
      %827 = vrot.lane.b32.xlu0 %v359, 24
      %v828 = vpop.permute.xlu0 %827
      %829 = vrot.lane.b32.xlu0 %v361, 24
      %v830 = vpop.permute.xlu0 %829
      %831 = vrot.lane.b32.xlu0 %v362, 24
      %v832 = vpop.permute.xlu0 %831
      %833 = vrot.lane.b32.xlu0 %v364, 24
      %v834 = vpop.permute.xlu0 %833
      %835 = vrot.lane.b32.xlu0 %v365, 24
      %v836 = vpop.permute.xlu0 %835
      %837 = vrot.lane.b32.xlu0 %v367, 24
      %v838 = vpop.permute.xlu0 %837
      %839 = vrot.lane.b32.xlu0 %v368, 24
      %v840 = vpop.permute.xlu0 %839
      %v874 = vrot.slane %v367, 1
      %v875 = vrot.slane %v368, 1
      %v876 = vsel %vm421, %v874, %v875
      %v877 = vrot.slane %v369, 1
      %v878 = vsel %vm421, %v875, %v877
      %879 = vrot.lane.b32.xlu0 %v429, 32
      %v880 = vpop.permute.xlu0 %879
      %881 = vrot.lane.b32.xlu0 %v431, 32
      %v882 = vpop.permute.xlu0 %881
      %883 = vrot.lane.b32.xlu0 %v434, 32
      %v884 = vpop.permute.xlu0 %883
      %885 = vrot.lane.b32.xlu0 %v436, 32
      %v886 = vpop.permute.xlu0 %885
      %887 = vrot.lane.b32.xlu0 %v439, 32
      %v888 = vpop.permute.xlu0 %887
      %889 = vrot.lane.b32.xlu0 %v441, 32
      %v890 = vpop.permute.xlu0 %889
      %891 = vrot.lane.b32.xlu0 %v444, 32
      %v892 = vpop.permute.xlu0 %891
      %893 = vrot.lane.b32.xlu0 %v446, 32
      %v894 = vpop.permute.xlu0 %893
      %895 = vrot.lane.b32.xlu0 %v449, 32
      %v896 = vpop.permute.xlu0 %895
      %897 = vrot.lane.b32.xlu0 %v451, 32
      %v898 = vpop.permute.xlu0 %897
      %899 = vrot.lane.b32.xlu0 %v454, 32
      %v900 = vpop.permute.xlu0 %899
      %901 = vrot.lane.b32.xlu0 %v456, 32
      %v902 = vpop.permute.xlu0 %901
      %903 = vrot.lane.b32.xlu0 %v459, 32
      %v904 = vpop.permute.xlu0 %903
      %905 = vrot.lane.b32.xlu0 %v461, 32
      %v906 = vpop.permute.xlu0 %905
      %907 = vrot.lane.b32.xlu0 %v464, 32
      %v908 = vpop.permute.xlu0 %907
      %909 = vrot.lane.b32.xlu0 %v466, 32
      %v910 = vpop.permute.xlu0 %909
      %911 = vrot.lane.b32.xlu0 %v469, 32
      %v912 = vpop.permute.xlu0 %911
      %913 = vrot.lane.b32.xlu0 %v471, 32
      %v914 = vpop.permute.xlu0 %913
      %915 = vrot.lane.b32.xlu0 %v474, 32
      %v916 = vpop.permute.xlu0 %915
      %917 = vrot.lane.b32.xlu0 %v476, 32
      %v918 = vpop.permute.xlu0 %917
      %919 = vrot.lane.b32.xlu0 %v479, 32
      %v920 = vpop.permute.xlu0 %919
      %921 = vrot.lane.b32.xlu0 %v481, 32
      %v922 = vpop.permute.xlu0 %921
      %923 = vrot.lane.b32.xlu0 %v484, 32
      %v924 = vpop.permute.xlu0 %923
      %925 = vrot.lane.b32.xlu0 %v486, 32
      %v926 = vpop.permute.xlu0 %925
      %927 = vrot.lane.b32.xlu0 %v489, 32
      %v928 = vpop.permute.xlu0 %927
      %929 = vrot.lane.b32.xlu0 %v491, 32
      %v930 = vpop.permute.xlu0 %929
      %931 = vrot.lane.b32.xlu0 %v494, 32
      %v932 = vpop.permute.xlu0 %931
      %933 = vrot.lane.b32.xlu0 %v496, 32
      %v934 = vpop.permute.xlu0 %933
      %935 = vrot.lane.b32.xlu0 %v499, 32
      %v936 = vpop.permute.xlu0 %935
      %937 = vrot.lane.b32.xlu0 %v501, 32
      %v938 = vpop.permute.xlu0 %937
      %939 = vrot.lane.b32.xlu0 %v876, 32
      %v940 = vpop.permute.xlu0 %939
      %941 = vrot.lane.b32.xlu0 %v878, 32
      %v942 = vpop.permute.xlu0 %941
      %v975 = vrot.slane %v367, 2
      %v976 = vrot.slane %v368, 2
      %v977 = vsel %vm598, %v975, %v976
      %v978 = vrot.slane %v369, 2
      %v979 = vsel %vm598, %v976, %v978
      %980 = vrot.lane.b32.xlu0 %v606, 40
      %v981 = vpop.permute.xlu0 %980
      %982 = vrot.lane.b32.xlu0 %v608, 40
      %v983 = vpop.permute.xlu0 %982
      %984 = vrot.lane.b32.xlu0 %v611, 40
      %v985 = vpop.permute.xlu0 %984
      %986 = vrot.lane.b32.xlu0 %v613, 40
      %v987 = vpop.permute.xlu0 %986
      %988 = vrot.lane.b32.xlu0 %v616, 40
      %v989 = vpop.permute.xlu0 %988
      %990 = vrot.lane.b32.xlu0 %v618, 40
      %v991 = vpop.permute.xlu0 %990
      %992 = vrot.lane.b32.xlu0 %v621, 40
      %v993 = vpop.permute.xlu0 %992
      %994 = vrot.lane.b32.xlu0 %v623, 40
      %v995 = vpop.permute.xlu0 %994
      %996 = vrot.lane.b32.xlu0 %v626, 40
      %v997 = vpop.permute.xlu0 %996
      %998 = vrot.lane.b32.xlu0 %v628, 40
      %v999 = vpop.permute.xlu0 %998
      %1000 = vrot.lane.b32.xlu0 %v631, 40
      %v1001 = vpop.permute.xlu0 %1000
      %1002 = vrot.lane.b32.xlu0 %v633, 40
      %v1003 = vpop.permute.xlu0 %1002
      %1004 = vrot.lane.b32.xlu0 %v636, 40
      %v1005 = vpop.permute.xlu0 %1004
      %1006 = vrot.lane.b32.xlu0 %v638, 40
      %v1007 = vpop.permute.xlu0 %1006
      %1008 = vrot.lane.b32.xlu0 %v641, 40
      %v1009 = vpop.permute.xlu0 %1008
      %1010 = vrot.lane.b32.xlu0 %v643, 40
      %v1011 = vpop.permute.xlu0 %1010
      %1012 = vrot.lane.b32.xlu0 %v646, 40
      %v1013 = vpop.permute.xlu0 %1012
      %1014 = vrot.lane.b32.xlu0 %v648, 40
      %v1015 = vpop.permute.xlu0 %1014
      %1016 = vrot.lane.b32.xlu0 %v651, 40
      %v1017 = vpop.permute.xlu0 %1016
      %1018 = vrot.lane.b32.xlu0 %v653, 40
      %v1019 = vpop.permute.xlu0 %1018
      %1020 = vrot.lane.b32.xlu0 %v656, 40
      %v1021 = vpop.permute.xlu0 %1020
      %1022 = vrot.lane.b32.xlu0 %v658, 40
      %v1023 = vpop.permute.xlu0 %1022
      %1024 = vrot.lane.b32.xlu0 %v661, 40
      %v1025 = vpop.permute.xlu0 %1024
      %1026 = vrot.lane.b32.xlu0 %v663, 40
      %v1027 = vpop.permute.xlu0 %1026
      %1028 = vrot.lane.b32.xlu0 %v666, 40
      %v1029 = vpop.permute.xlu0 %1028
      %1030 = vrot.lane.b32.xlu0 %v668, 40
      %v1031 = vpop.permute.xlu0 %1030
      %1032 = vrot.lane.b32.xlu0 %v671, 40
      %v1033 = vpop.permute.xlu0 %1032
      %1034 = vrot.lane.b32.xlu0 %v673, 40
      %v1035 = vpop.permute.xlu0 %1034
      %1036 = vrot.lane.b32.xlu0 %v676, 40
      %v1037 = vpop.permute.xlu0 %1036
      %1038 = vrot.lane.b32.xlu0 %v678, 40
      %v1039 = vpop.permute.xlu0 %1038
      %1040 = vrot.lane.b32.xlu0 %v977, 40
      %v1041 = vpop.permute.xlu0 %1040
      %1042 = vrot.lane.b32.xlu0 %v979, 40
      %v1043 = vpop.permute.xlu0 %1042
      %1078 = vrot.lane.b32.xlu0 %v325, 48
      %v1079 = vpop.permute.xlu0 %1078
      %1080 = vrot.lane.b32.xlu0 %v326, 48
      %v1081 = vpop.permute.xlu0 %1080
      %1082 = vrot.lane.b32.xlu0 %v328, 48
      %v1083 = vpop.permute.xlu0 %1082
      %1084 = vrot.lane.b32.xlu0 %v329, 48
      %v1085 = vpop.permute.xlu0 %1084
      %1086 = vrot.lane.b32.xlu0 %v331, 48
      %v1087 = vpop.permute.xlu0 %1086
      %1088 = vrot.lane.b32.xlu0 %v332, 48
      %v1089 = vpop.permute.xlu0 %1088
      %1090 = vrot.lane.b32.xlu0 %v334, 48
      %v1091 = vpop.permute.xlu0 %1090
      %1092 = vrot.lane.b32.xlu0 %v335, 48
      %v1093 = vpop.permute.xlu0 %1092
      %1094 = vrot.lane.b32.xlu0 %v337, 48
      %v1095 = vpop.permute.xlu0 %1094
      %1096 = vrot.lane.b32.xlu0 %v338, 48
      %v1097 = vpop.permute.xlu0 %1096
      %1098 = vrot.lane.b32.xlu0 %v340, 48
      %v1099 = vpop.permute.xlu0 %1098
      %1100 = vrot.lane.b32.xlu0 %v341, 48
      %v1101 = vpop.permute.xlu0 %1100
      %1102 = vrot.lane.b32.xlu0 %v343, 48
      %v1103 = vpop.permute.xlu0 %1102
      %1104 = vrot.lane.b32.xlu0 %v344, 48
      %v1105 = vpop.permute.xlu0 %1104
      %1106 = vrot.lane.b32.xlu0 %v346, 48
      %v1107 = vpop.permute.xlu0 %1106
      %1108 = vrot.lane.b32.xlu0 %v347, 48
      %v1109 = vpop.permute.xlu0 %1108
      %1110 = vrot.lane.b32.xlu0 %v349, 48
      %v1111 = vpop.permute.xlu0 %1110
      %1112 = vrot.lane.b32.xlu0 %v350, 48
      %v1113 = vpop.permute.xlu0 %1112
      %1114 = vrot.lane.b32.xlu0 %v352, 48
      %v1115 = vpop.permute.xlu0 %1114
      %1116 = vrot.lane.b32.xlu0 %v353, 48
      %v1117 = vpop.permute.xlu0 %1116
      %1118 = vrot.lane.b32.xlu0 %v355, 48
      %v1119 = vpop.permute.xlu0 %1118
      %1120 = vrot.lane.b32.xlu0 %v356, 48
      %v1121 = vpop.permute.xlu0 %1120
      %1122 = vrot.lane.b32.xlu0 %v358, 48
      %v1123 = vpop.permute.xlu0 %1122
      %1124 = vrot.lane.b32.xlu0 %v359, 48
      %v1125 = vpop.permute.xlu0 %1124
      %1126 = vrot.lane.b32.xlu0 %v361, 48
      %v1127 = vpop.permute.xlu0 %1126
      %1128 = vrot.lane.b32.xlu0 %v362, 48
      %v1129 = vpop.permute.xlu0 %1128
      %1130 = vrot.lane.b32.xlu0 %v364, 48
      %v1131 = vpop.permute.xlu0 %1130
      %1132 = vrot.lane.b32.xlu0 %v365, 48
      %v1133 = vpop.permute.xlu0 %1132
      %1134 = vrot.lane.b32.xlu0 %v367, 48
      %v1135 = vpop.permute.xlu0 %1134
      %1136 = vrot.lane.b32.xlu0 %v368, 48
      %v1137 = vpop.permute.xlu0 %1136
      %1138 = vrot.lane.b32.xlu0 %v370, 48
      %v1139 = vpop.permute.xlu0 %1138
      %1140 = vrot.lane.b32.xlu0 %v371, 48
      %v1141 = vpop.permute.xlu0 %1140
      %v1175 = vrot.slane %v370, 1
      %v1176 = vrot.slane %v371, 1
      %v1177 = vsel %vm421, %v1175, %v1176
      %v1178 = vrot.slane %v372, 1
      %v1179 = vsel %vm421, %v1176, %v1178
      %1180 = vrot.lane.b32.xlu0 %v434, 56
      %v1181 = vpop.permute.xlu0 %1180
      %1182 = vrot.lane.b32.xlu0 %v436, 56
      %v1183 = vpop.permute.xlu0 %1182
      %1184 = vrot.lane.b32.xlu0 %v439, 56
      %v1185 = vpop.permute.xlu0 %1184
      %1186 = vrot.lane.b32.xlu0 %v441, 56
      %v1187 = vpop.permute.xlu0 %1186
      %1188 = vrot.lane.b32.xlu0 %v444, 56
      %v1189 = vpop.permute.xlu0 %1188
      %1190 = vrot.lane.b32.xlu0 %v446, 56
      %v1191 = vpop.permute.xlu0 %1190
      %1192 = vrot.lane.b32.xlu0 %v449, 56
      %v1193 = vpop.permute.xlu0 %1192
      %1194 = vrot.lane.b32.xlu0 %v451, 56
      %v1195 = vpop.permute.xlu0 %1194
      %1196 = vrot.lane.b32.xlu0 %v454, 56
      %v1197 = vpop.permute.xlu0 %1196
      %1198 = vrot.lane.b32.xlu0 %v456, 56
      %v1199 = vpop.permute.xlu0 %1198
      %1200 = vrot.lane.b32.xlu0 %v459, 56
      %v1201 = vpop.permute.xlu0 %1200
      %1202 = vrot.lane.b32.xlu0 %v461, 56
      %v1203 = vpop.permute.xlu0 %1202
      %1204 = vrot.lane.b32.xlu0 %v464, 56
      %v1205 = vpop.permute.xlu0 %1204
      %1206 = vrot.lane.b32.xlu0 %v466, 56
      %v1207 = vpop.permute.xlu0 %1206
      %1208 = vrot.lane.b32.xlu0 %v469, 56
      %v1209 = vpop.permute.xlu0 %1208
      %1210 = vrot.lane.b32.xlu0 %v471, 56
      %v1211 = vpop.permute.xlu0 %1210
      %1212 = vrot.lane.b32.xlu0 %v474, 56
      %v1213 = vpop.permute.xlu0 %1212
      %1214 = vrot.lane.b32.xlu0 %v476, 56
      %v1215 = vpop.permute.xlu0 %1214
      %1216 = vrot.lane.b32.xlu0 %v479, 56
      %v1217 = vpop.permute.xlu0 %1216
      %1218 = vrot.lane.b32.xlu0 %v481, 56
      %v1219 = vpop.permute.xlu0 %1218
      %1220 = vrot.lane.b32.xlu0 %v484, 56
      %v1221 = vpop.permute.xlu0 %1220
      %1222 = vrot.lane.b32.xlu0 %v486, 56
      %v1223 = vpop.permute.xlu0 %1222
      %1224 = vrot.lane.b32.xlu0 %v489, 56
      %v1225 = vpop.permute.xlu0 %1224
      %1226 = vrot.lane.b32.xlu0 %v491, 56
      %v1227 = vpop.permute.xlu0 %1226
      %1228 = vrot.lane.b32.xlu0 %v494, 56
      %v1229 = vpop.permute.xlu0 %1228
      %1230 = vrot.lane.b32.xlu0 %v496, 56
      %v1231 = vpop.permute.xlu0 %1230
      %1232 = vrot.lane.b32.xlu0 %v499, 56
      %v1233 = vpop.permute.xlu0 %1232
      %1234 = vrot.lane.b32.xlu0 %v501, 56
      %v1235 = vpop.permute.xlu0 %1234
      %1236 = vrot.lane.b32.xlu0 %v876, 56
      %v1237 = vpop.permute.xlu0 %1236
      %1238 = vrot.lane.b32.xlu0 %v878, 56
      %v1239 = vpop.permute.xlu0 %1238
      %1240 = vrot.lane.b32.xlu0 %v1177, 56
      %v1241 = vpop.permute.xlu0 %1240
      %1242 = vrot.lane.b32.xlu0 %v1179, 56
      %v1243 = vpop.permute.xlu0 %1242
      %v1276 = vrot.slane %v370, 2
      %v1277 = vrot.slane %v371, 2
      %v1278 = vsel %vm598, %v1276, %v1277
      %v1279 = vrot.slane %v372, 2
      %v1280 = vsel %vm598, %v1277, %v1279
      %1281 = vrot.lane.b32.xlu0 %v611, 64
      %v1282 = vpop.permute.xlu0 %1281
      %1283 = vrot.lane.b32.xlu0 %v613, 64
      %v1284 = vpop.permute.xlu0 %1283
      %1285 = vrot.lane.b32.xlu0 %v616, 64
      %v1286 = vpop.permute.xlu0 %1285
      %1287 = vrot.lane.b32.xlu0 %v618, 64
      %v1288 = vpop.permute.xlu0 %1287
      %1289 = vrot.lane.b32.xlu0 %v621, 64
      %v1290 = vpop.permute.xlu0 %1289
      %1291 = vrot.lane.b32.xlu0 %v623, 64
      %v1292 = vpop.permute.xlu0 %1291
      %1293 = vrot.lane.b32.xlu0 %v626, 64
      %v1294 = vpop.permute.xlu0 %1293
      %1295 = vrot.lane.b32.xlu0 %v628, 64
      %v1296 = vpop.permute.xlu0 %1295
      %1297 = vrot.lane.b32.xlu0 %v631, 64
      %v1298 = vpop.permute.xlu0 %1297
      %1299 = vrot.lane.b32.xlu0 %v633, 64
      %v1300 = vpop.permute.xlu0 %1299
      %1301 = vrot.lane.b32.xlu0 %v636, 64
      %v1302 = vpop.permute.xlu0 %1301
      %1303 = vrot.lane.b32.xlu0 %v638, 64
      %v1304 = vpop.permute.xlu0 %1303
      %1305 = vrot.lane.b32.xlu0 %v641, 64
      %v1306 = vpop.permute.xlu0 %1305
      %1307 = vrot.lane.b32.xlu0 %v643, 64
      %v1308 = vpop.permute.xlu0 %1307
      %1309 = vrot.lane.b32.xlu0 %v646, 64
      %v1310 = vpop.permute.xlu0 %1309
      %1311 = vrot.lane.b32.xlu0 %v648, 64
      %v1312 = vpop.permute.xlu0 %1311
      %1313 = vrot.lane.b32.xlu0 %v651, 64
      %v1314 = vpop.permute.xlu0 %1313
      %1315 = vrot.lane.b32.xlu0 %v653, 64
      %v1316 = vpop.permute.xlu0 %1315
      %1317 = vrot.lane.b32.xlu0 %v656, 64
      %v1318 = vpop.permute.xlu0 %1317
      %1319 = vrot.lane.b32.xlu0 %v658, 64
      %v1320 = vpop.permute.xlu0 %1319
      %1321 = vrot.lane.b32.xlu0 %v661, 64
      %v1322 = vpop.permute.xlu0 %1321
      %1323 = vrot.lane.b32.xlu0 %v663, 64
      %v1324 = vpop.permute.xlu0 %1323
      %1325 = vrot.lane.b32.xlu0 %v666, 64
      %v1326 = vpop.permute.xlu0 %1325
      %1327 = vrot.lane.b32.xlu0 %v668, 64
      %v1328 = vpop.permute.xlu0 %1327
      %1329 = vrot.lane.b32.xlu0 %v671, 64
      %v1330 = vpop.permute.xlu0 %1329
      %1331 = vrot.lane.b32.xlu0 %v673, 64
      %v1332 = vpop.permute.xlu0 %1331
      %1333 = vrot.lane.b32.xlu0 %v676, 64
      %v1334 = vpop.permute.xlu0 %1333
      %1335 = vrot.lane.b32.xlu0 %v678, 64
      %v1336 = vpop.permute.xlu0 %1335
      %1337 = vrot.lane.b32.xlu0 %v977, 64
      %v1338 = vpop.permute.xlu0 %1337
      %1339 = vrot.lane.b32.xlu0 %v979, 64
      %v1340 = vpop.permute.xlu0 %1339
      %1341 = vrot.lane.b32.xlu0 %v1278, 64
      %v1342 = vpop.permute.xlu0 %1341
      %1343 = vrot.lane.b32.xlu0 %v1280, 64
      %v1344 = vpop.permute.xlu0 %1343
      %v1377 = vsel %vm230, %v319, %v503
      %v1378 = vsel %vm230, %v320, %v505
      %v1379 = vsel %vm230, %v322, %v507
      %v1380 = vsel %vm230, %v323, %v509
      %v1381 = vsel %vm230, %v325, %v511
      %v1382 = vsel %vm230, %v326, %v513
      %v1383 = vsel %vm230, %v328, %v515
      %v1384 = vsel %vm230, %v329, %v517
      %v1385 = vsel %vm230, %v331, %v519
      %v1386 = vsel %vm230, %v332, %v521
      %v1387 = vsel %vm230, %v334, %v523
      %v1388 = vsel %vm230, %v335, %v525
      %v1389 = vsel %vm230, %v337, %v527
      %v1390 = vsel %vm230, %v338, %v529
      %v1391 = vsel %vm230, %v340, %v531
      %v1392 = vsel %vm230, %v341, %v533
      %v1393 = vsel %vm230, %v343, %v535
      %v1394 = vsel %vm230, %v344, %v537
      %v1395 = vsel %vm230, %v346, %v539
      %v1396 = vsel %vm230, %v347, %v541
      %v1397 = vsel %vm230, %v349, %v543
      %v1398 = vsel %vm230, %v350, %v545
      %v1399 = vsel %vm230, %v352, %v547
      %v1400 = vsel %vm230, %v353, %v549
      %v1401 = vsel %vm230, %v355, %v551
      %v1402 = vsel %vm230, %v356, %v553
      %v1403 = vsel %vm230, %v358, %v555
      %v1404 = vsel %vm230, %v359, %v557
      %v1405 = vsel %vm230, %v361, %v559
      %v1406 = vsel %vm230, %v362, %v561
      %v1407 = vsel %vm230, %v364, %v563
      %v1408 = vsel %vm230, %v365, %v565
      %vm1409 = vcmask 130048
      %v1410 = vsel %vm1409, %v1377, %v680
      %v1411 = vsel %vm1409, %v1378, %v682
      %v1412 = vsel %vm1409, %v1379, %v684
      %v1413 = vsel %vm1409, %v1380, %v686
      %v1414 = vsel %vm1409, %v1381, %v688
      %v1415 = vsel %vm1409, %v1382, %v690
      %v1416 = vsel %vm1409, %v1383, %v692
      %v1417 = vsel %vm1409, %v1384, %v694
      %v1418 = vsel %vm1409, %v1385, %v696
      %v1419 = vsel %vm1409, %v1386, %v698
      %v1420 = vsel %vm1409, %v1387, %v700
      %v1421 = vsel %vm1409, %v1388, %v702
      %v1422 = vsel %vm1409, %v1389, %v704
      %v1423 = vsel %vm1409, %v1390, %v706
      %v1424 = vsel %vm1409, %v1391, %v708
      %v1425 = vsel %vm1409, %v1392, %v710
      %v1426 = vsel %vm1409, %v1393, %v712
      %v1427 = vsel %vm1409, %v1394, %v714
      %v1428 = vsel %vm1409, %v1395, %v716
      %v1429 = vsel %vm1409, %v1396, %v718
      %v1430 = vsel %vm1409, %v1397, %v720
      %v1431 = vsel %vm1409, %v1398, %v722
      %v1432 = vsel %vm1409, %v1399, %v724
      %v1433 = vsel %vm1409, %v1400, %v726
      %v1434 = vsel %vm1409, %v1401, %v728
      %v1435 = vsel %vm1409, %v1402, %v730
      %v1436 = vsel %vm1409, %v1403, %v732
      %v1437 = vsel %vm1409, %v1404, %v734
      %v1438 = vsel %vm1409, %v1405, %v736
      %v1439 = vsel %vm1409, %v1406, %v738
      %v1440 = vsel %vm1409, %v1407, %v740
      %v1441 = vsel %vm1409, %v1408, %v742
      %vm1442 = vcmask 195584
      %v1443 = vsel %vm1442, %v1410, %v778
      %v1444 = vsel %vm1442, %v1411, %v780
      %v1445 = vsel %vm1442, %v1412, %v782
      %v1446 = vsel %vm1442, %v1413, %v784
      %v1447 = vsel %vm1442, %v1414, %v786
      %v1448 = vsel %vm1442, %v1415, %v788
      %v1449 = vsel %vm1442, %v1416, %v790
      %v1450 = vsel %vm1442, %v1417, %v792
      %v1451 = vsel %vm1442, %v1418, %v794
      %v1452 = vsel %vm1442, %v1419, %v796
      %v1453 = vsel %vm1442, %v1420, %v798
      %v1454 = vsel %vm1442, %v1421, %v800
      %v1455 = vsel %vm1442, %v1422, %v802
      %v1456 = vsel %vm1442, %v1423, %v804
      %v1457 = vsel %vm1442, %v1424, %v806
      %v1458 = vsel %vm1442, %v1425, %v808
      %v1459 = vsel %vm1442, %v1426, %v810
      %v1460 = vsel %vm1442, %v1427, %v812
      %v1461 = vsel %vm1442, %v1428, %v814
      %v1462 = vsel %vm1442, %v1429, %v816
      %v1463 = vsel %vm1442, %v1430, %v818
      %v1464 = vsel %vm1442, %v1431, %v820
      %v1465 = vsel %vm1442, %v1432, %v822
      %v1466 = vsel %vm1442, %v1433, %v824
      %v1467 = vsel %vm1442, %v1434, %v826
      %v1468 = vsel %vm1442, %v1435, %v828
      %v1469 = vsel %vm1442, %v1436, %v830
      %v1470 = vsel %vm1442, %v1437, %v832
      %v1471 = vsel %vm1442, %v1438, %v834
      %v1472 = vsel %vm1442, %v1439, %v836
      %v1473 = vsel %vm1442, %v1440, %v838
      %v1474 = vsel %vm1442, %v1441, %v840
      %vm1475 = vcmask 261120
      %v1476 = vsel %vm1475, %v1443, %v880
      %v1477 = vsel %vm1475, %v1444, %v882
      %v1478 = vsel %vm1475, %v1445, %v884
      %v1479 = vsel %vm1475, %v1446, %v886
      %v1480 = vsel %vm1475, %v1447, %v888
      %v1481 = vsel %vm1475, %v1448, %v890
      %v1482 = vsel %vm1475, %v1449, %v892
      %v1483 = vsel %vm1475, %v1450, %v894
      %v1484 = vsel %vm1475, %v1451, %v896
      %v1485 = vsel %vm1475, %v1452, %v898
      %v1486 = vsel %vm1475, %v1453, %v900
      %v1487 = vsel %vm1475, %v1454, %v902
      %v1488 = vsel %vm1475, %v1455, %v904
      %v1489 = vsel %vm1475, %v1456, %v906
      %v1490 = vsel %vm1475, %v1457, %v908
      %v1491 = vsel %vm1475, %v1458, %v910
      %v1492 = vsel %vm1475, %v1459, %v912
      %v1493 = vsel %vm1475, %v1460, %v914
      %v1494 = vsel %vm1475, %v1461, %v916
      %v1495 = vsel %vm1475, %v1462, %v918
      %v1496 = vsel %vm1475, %v1463, %v920
      %v1497 = vsel %vm1475, %v1464, %v922
      %v1498 = vsel %vm1475, %v1465, %v924
      %v1499 = vsel %vm1475, %v1466, %v926
      %v1500 = vsel %vm1475, %v1467, %v928
      %v1501 = vsel %vm1475, %v1468, %v930
      %v1502 = vsel %vm1475, %v1469, %v932
      %v1503 = vsel %vm1475, %v1470, %v934
      %v1504 = vsel %vm1475, %v1471, %v936
      %v1505 = vsel %vm1475, %v1472, %v938
      %v1506 = vsel %vm1475, %v1473, %v940
      %v1507 = vsel %vm1475, %v1474, %v942
      %vm1508 = vcmask 326656
      %v1509 = vsel %vm1508, %v1476, %v981
      %v1510 = vsel %vm1508, %v1477, %v983
      %v1511 = vsel %vm1508, %v1478, %v985
      %v1512 = vsel %vm1508, %v1479, %v987
      %v1513 = vsel %vm1508, %v1480, %v989
      %v1514 = vsel %vm1508, %v1481, %v991
      %v1515 = vsel %vm1508, %v1482, %v993
      %v1516 = vsel %vm1508, %v1483, %v995
      %v1517 = vsel %vm1508, %v1484, %v997
      %v1518 = vsel %vm1508, %v1485, %v999
      %v1519 = vsel %vm1508, %v1486, %v1001
      %v1520 = vsel %vm1508, %v1487, %v1003
      %v1521 = vsel %vm1508, %v1488, %v1005
      %v1522 = vsel %vm1508, %v1489, %v1007
      %v1523 = vsel %vm1508, %v1490, %v1009
      %v1524 = vsel %vm1508, %v1491, %v1011
      %v1525 = vsel %vm1508, %v1492, %v1013
      %v1526 = vsel %vm1508, %v1493, %v1015
      %v1527 = vsel %vm1508, %v1494, %v1017
      %v1528 = vsel %vm1508, %v1495, %v1019
      %v1529 = vsel %vm1508, %v1496, %v1021
      %v1530 = vsel %vm1508, %v1497, %v1023
      %v1531 = vsel %vm1508, %v1498, %v1025
      %v1532 = vsel %vm1508, %v1499, %v1027
      %v1533 = vsel %vm1508, %v1500, %v1029
      %v1534 = vsel %vm1508, %v1501, %v1031
      %v1535 = vsel %vm1508, %v1502, %v1033
      %v1536 = vsel %vm1508, %v1503, %v1035
      %v1537 = vsel %vm1508, %v1504, %v1037
      %v1538 = vsel %vm1508, %v1505, %v1039
      %v1539 = vsel %vm1508, %v1506, %v1041
      %v1540 = vsel %vm1508, %v1507, %v1043
      %vm1541 = vcmask 392192
      %v1542 = vsel %vm1541, %v1509, %v1079
      %v1543 = vsel %vm1541, %v1510, %v1081
      %v1544 = vsel %vm1541, %v1511, %v1083
      %v1545 = vsel %vm1541, %v1512, %v1085
      %v1546 = vsel %vm1541, %v1513, %v1087
      %v1547 = vsel %vm1541, %v1514, %v1089
      %v1548 = vsel %vm1541, %v1515, %v1091
      %v1549 = vsel %vm1541, %v1516, %v1093
      %v1550 = vsel %vm1541, %v1517, %v1095
      %v1551 = vsel %vm1541, %v1518, %v1097
      %v1552 = vsel %vm1541, %v1519, %v1099
      %v1553 = vsel %vm1541, %v1520, %v1101
      %v1554 = vsel %vm1541, %v1521, %v1103
      %v1555 = vsel %vm1541, %v1522, %v1105
      %v1556 = vsel %vm1541, %v1523, %v1107
      %v1557 = vsel %vm1541, %v1524, %v1109
      %v1558 = vsel %vm1541, %v1525, %v1111
      %v1559 = vsel %vm1541, %v1526, %v1113
      %v1560 = vsel %vm1541, %v1527, %v1115
      %v1561 = vsel %vm1541, %v1528, %v1117
      %v1562 = vsel %vm1541, %v1529, %v1119
      %v1563 = vsel %vm1541, %v1530, %v1121
      %v1564 = vsel %vm1541, %v1531, %v1123
      %v1565 = vsel %vm1541, %v1532, %v1125
      %v1566 = vsel %vm1541, %v1533, %v1127
      %v1567 = vsel %vm1541, %v1534, %v1129
      %v1568 = vsel %vm1541, %v1535, %v1131
      %v1569 = vsel %vm1541, %v1536, %v1133
      %v1570 = vsel %vm1541, %v1537, %v1135
      %v1571 = vsel %vm1541, %v1538, %v1137
      %v1572 = vsel %vm1541, %v1539, %v1139
      %v1573 = vsel %vm1541, %v1540, %v1141
      %vm1574 = vcmask 457728
      %v1575 = vsel %vm1574, %v1542, %v1181
      %v1576 = vsel %vm1574, %v1543, %v1183
      %v1577 = vsel %vm1574, %v1544, %v1185
      %v1578 = vsel %vm1574, %v1545, %v1187
      %v1579 = vsel %vm1574, %v1546, %v1189
      %v1580 = vsel %vm1574, %v1547, %v1191
      %v1581 = vsel %vm1574, %v1548, %v1193
      %v1582 = vsel %vm1574, %v1549, %v1195
      %v1583 = vsel %vm1574, %v1550, %v1197
      %v1584 = vsel %vm1574, %v1551, %v1199
      %v1585 = vsel %vm1574, %v1552, %v1201
      %v1586 = vsel %vm1574, %v1553, %v1203
      %v1587 = vsel %vm1574, %v1554, %v1205
      %v1588 = vsel %vm1574, %v1555, %v1207
      %v1589 = vsel %vm1574, %v1556, %v1209
      %v1590 = vsel %vm1574, %v1557, %v1211
      %v1591 = vsel %vm1574, %v1558, %v1213
      %v1592 = vsel %vm1574, %v1559, %v1215
      %v1593 = vsel %vm1574, %v1560, %v1217
      %v1594 = vsel %vm1574, %v1561, %v1219
      %v1595 = vsel %vm1574, %v1562, %v1221
      %v1596 = vsel %vm1574, %v1563, %v1223
      %v1597 = vsel %vm1574, %v1564, %v1225
      %v1598 = vsel %vm1574, %v1565, %v1227
      %v1599 = vsel %vm1574, %v1566, %v1229
      %v1600 = vsel %vm1574, %v1567, %v1231
      %v1601 = vsel %vm1574, %v1568, %v1233
      %v1602 = vsel %vm1574, %v1569, %v1235
      %v1603 = vsel %vm1574, %v1570, %v1237
      %v1604 = vsel %vm1574, %v1571, %v1239
      %v1605 = vsel %vm1574, %v1572, %v1241
      %v1606 = vsel %vm1574, %v1573, %v1243
      %vm1607 = vcmask 523264
      %v1608 = vsel %vm1607, %v1575, %v1282
      %v1609 = vsel %vm1607, %v1576, %v1284
      %v1610 = vsel %vm1607, %v1577, %v1286
      %v1611 = vsel %vm1607, %v1578, %v1288
      %v1612 = vsel %vm1607, %v1579, %v1290
      %v1613 = vsel %vm1607, %v1580, %v1292
      %v1614 = vsel %vm1607, %v1581, %v1294
      %v1615 = vsel %vm1607, %v1582, %v1296
      %v1616 = vsel %vm1607, %v1583, %v1298
      %v1617 = vsel %vm1607, %v1584, %v1300
      %v1618 = vsel %vm1607, %v1585, %v1302
      %v1619 = vsel %vm1607, %v1586, %v1304
      %v1620 = vsel %vm1607, %v1587, %v1306
      %v1621 = vsel %vm1607, %v1588, %v1308
      %v1622 = vsel %vm1607, %v1589, %v1310
      %v1623 = vsel %vm1607, %v1590, %v1312
      %v1624 = vsel %vm1607, %v1591, %v1314
      %v1625 = vsel %vm1607, %v1592, %v1316
      %v1626 = vsel %vm1607, %v1593, %v1318
      %v1627 = vsel %vm1607, %v1594, %v1320
      %v1628 = vsel %vm1607, %v1595, %v1322
      %v1629 = vsel %vm1607, %v1596, %v1324
      %v1630 = vsel %vm1607, %v1597, %v1326
      %v1631 = vsel %vm1607, %v1598, %v1328
      %v1632 = vsel %vm1607, %v1599, %v1330
      %v1633 = vsel %vm1607, %v1600, %v1332
      %v1634 = vsel %vm1607, %v1601, %v1334
      %v1635 = vsel %vm1607, %v1602, %v1336
      %v1636 = vsel %vm1607, %v1603, %v1338
      %v1637 = vsel %vm1607, %v1604, %v1340
      %v1638 = vsel %vm1607, %v1605, %v1342
      %v1639 = vsel %vm1607, %v1606, %v1344
      %v1640 = vld [vmem:[%s1] sm:$0xff]
      %v1641 = vld [vmem:[%s1 + $0x8] sm:$0xff]
      %v1642 = vld [vmem:[%s1 + $0x10] sm:$0xff]
      %v1643 = vld [vmem:[%s1 + $0x18] sm:$0xff]
      %v1644 = vld [vmem:[%s1 + $0x20] sm:$0xff]
      %v1645 = vld [vmem:[%s1 + $0x28] sm:$0xff]
      %v1646 = vld [vmem:[%s1 + $0x30] sm:$0xff]
      %v1647 = vld [vmem:[%s1 + $0x38] sm:$0xff]
      %v1648 = vld [vmem:[%s1 + $0x40] sm:$0xff]
      %v1649 = vld [vmem:[%s3] sm:$0x1]
      %v1650 = vperm.slane %v1649, 0
      %vm1651 = vcmask 588800
      %v1653 = vsel %vm1651, %v1608, 0
      %v1656 = vsel %vm1651, %v1609, 0
      %v1659 = vsel %vm1651, %v1610, 0
      %v1662 = vsel %vm1651, %v1611, 0
      %v1665 = vsel %vm1651, %v1612, 0
      %v1668 = vsel %vm1651, %v1613, 0
      %v1671 = vsel %vm1651, %v1614, 0
      %v1674 = vsel %vm1651, %v1615, 0
      %v1677 = vsel %vm1651, %v1616, 0
      %v1680 = vsel %vm1651, %v1617, 0
      %v1683 = vsel %vm1651, %v1618, 0
      %v1686 = vsel %vm1651, %v1619, 0
      %v1689 = vsel %vm1651, %v1620, 0
      %v1692 = vsel %vm1651, %v1621, 0
      %v1695 = vsel %vm1651, %v1622, 0
      %v1698 = vsel %vm1651, %v1623, 0
      %v1701 = vsel %vm1651, %v1624, 0
      %v1704 = vsel %vm1651, %v1625, 0
      %v1707 = vsel %vm1651, %v1626, 0
      %v1710 = vsel %vm1651, %v1627, 0
      %v1713 = vsel %vm1651, %v1628, 0
      %v1716 = vsel %vm1651, %v1629, 0
      %v1719 = vsel %vm1651, %v1630, 0
      %v1722 = vsel %vm1651, %v1631, 0
      %v1725 = vsel %vm1651, %v1632, 0
      %v1728 = vsel %vm1651, %v1633, 0
      %v1731 = vsel %vm1651, %v1634, 0
      %v1734 = vsel %vm1651, %v1635, 0
      %v1737 = vsel %vm1651, %v1636, 0
      %v1740 = vsel %vm1651, %v1637, 0
      %v1743 = vsel %vm1651, %v1638, 0
      %v1746 = vsel %vm1651, %v1639, 0
      %1748 = vmatpush.msra.mxu0 0.0
      %1749 = vmatpush.msra.mxu0 0.0
      %1750 = vmatpush.msra.mxu0 0.0
      %1751 = vmatpush.msra.mxu0 0.0
      %1752 = vmatpush.msra.mxu0 0.0
      %1753 = vmatpush.msra.mxu0 0.0
      %1754 = vmatpush.msra.mxu0 0.0
      %1755 = vmatpush.msra.mxu0 %v1648
      %1756 = vmatpush.msra.mxu0 %v1647
      %1757 = vmatpush.msra.mxu0 %v1646
      %1758 = vmatpush.msra.mxu0 %v1645
      %1759 = vmatpush.msra.mxu0 %v1644
      %1760 = vmatpush.msra.mxu0 %v1643
      %1761 = vmatpush.msra.mxu0 %v1642
      %1762 = vmatpush.msra.mxu0 %v1641
      %1763 = vmatpush.msra.mxu0 %v1640
      %1764 = vmatmul.f32.gmra.mxu0 %v1653
      %v1765 = vpop.f32.mrf.mxu0
      %v1766 = vadd.f32 %v1650, %v1765
      %1767 = vmatmul.f32.gmra.mxu0 %v1656
      %v1768 = vpop.f32.mrf.mxu0
      %v1769 = vadd.f32 %v1650, %v1768
      %1770 = vmatmul.f32.gmra.mxu0 %v1659
      %v1771 = vpop.f32.mrf.mxu0
      %v1772 = vadd.f32 %v1650, %v1771
      %1773 = vmatmul.f32.gmra.mxu0 %v1662
      %v1774 = vpop.f32.mrf.mxu0
      %v1775 = vadd.f32 %v1650, %v1774
      %1776 = vmatmul.f32.gmra.mxu0 %v1665
      %v1777 = vpop.f32.mrf.mxu0
      %v1778 = vadd.f32 %v1650, %v1777
      %1779 = vmatmul.f32.gmra.mxu0 %v1668
      %v1780 = vpop.f32.mrf.mxu0
      %v1781 = vadd.f32 %v1650, %v1780
      %1782 = vmatmul.f32.gmra.mxu0 %v1671
      %v1783 = vpop.f32.mrf.mxu0
      %v1784 = vadd.f32 %v1650, %v1783
      %1785 = vmatmul.f32.gmra.mxu0 %v1674
      %v1786 = vpop.f32.mrf.mxu0
      %v1787 = vadd.f32 %v1650, %v1786
      %1788 = vmatmul.f32.gmra.mxu0 %v1677
      %v1789 = vpop.f32.mrf.mxu0
      %v1790 = vadd.f32 %v1650, %v1789
      %1791 = vmatmul.f32.gmra.mxu0 %v1680
      %v1792 = vpop.f32.mrf.mxu0
      %v1793 = vadd.f32 %v1650, %v1792
      %1794 = vmatmul.f32.gmra.mxu0 %v1683
      %v1795 = vpop.f32.mrf.mxu0
      %v1796 = vadd.f32 %v1650, %v1795
      %1797 = vmatmul.f32.gmra.mxu0 %v1686
      %v1798 = vpop.f32.mrf.mxu0
      %v1799 = vadd.f32 %v1650, %v1798
      %1800 = vmatmul.f32.gmra.mxu0 %v1689
      %v1801 = vpop.f32.mrf.mxu0
      %v1802 = vadd.f32 %v1650, %v1801
      %1803 = vmatmul.f32.gmra.mxu0 %v1692
      %v1804 = vpop.f32.mrf.mxu0
      %v1805 = vadd.f32 %v1650, %v1804
      %1806 = vmatmul.f32.gmra.mxu0 %v1695
      %v1807 = vpop.f32.mrf.mxu0
      %v1808 = vadd.f32 %v1650, %v1807
      %1809 = vmatmul.f32.gmra.mxu0 %v1698
      %v1810 = vpop.f32.mrf.mxu0
      %v1811 = vadd.f32 %v1650, %v1810
      %1812 = vmatmul.f32.gmra.mxu0 %v1701
      %v1813 = vpop.f32.mrf.mxu0
      %v1814 = vadd.f32 %v1650, %v1813
      %1815 = vmatmul.f32.gmra.mxu0 %v1704
      %v1816 = vpop.f32.mrf.mxu0
      %v1817 = vadd.f32 %v1650, %v1816
      %1818 = vmatmul.f32.gmra.mxu0 %v1707
      %v1819 = vpop.f32.mrf.mxu0
      %v1820 = vadd.f32 %v1650, %v1819
      %1821 = vmatmul.f32.gmra.mxu0 %v1710
      %v1822 = vpop.f32.mrf.mxu0
      %v1823 = vadd.f32 %v1650, %v1822
      %1824 = vmatmul.f32.gmra.mxu0 %v1713
      %v1825 = vpop.f32.mrf.mxu0
      %v1826 = vadd.f32 %v1650, %v1825
      %1827 = vmatmul.f32.gmra.mxu0 %v1716
      %v1828 = vpop.f32.mrf.mxu0
      %v1829 = vadd.f32 %v1650, %v1828
      %1830 = vmatmul.f32.gmra.mxu0 %v1719
      %v1831 = vpop.f32.mrf.mxu0
      %v1832 = vadd.f32 %v1650, %v1831
      %1833 = vmatmul.f32.gmra.mxu0 %v1722
      %v1834 = vpop.f32.mrf.mxu0
      %v1835 = vadd.f32 %v1650, %v1834
      %1836 = vmatmul.f32.gmra.mxu0 %v1725
      %v1837 = vpop.f32.mrf.mxu0
      %v1838 = vadd.f32 %v1650, %v1837
      %1839 = vmatmul.f32.gmra.mxu0 %v1728
      %v1840 = vpop.f32.mrf.mxu0
      %v1841 = vadd.f32 %v1650, %v1840
      %1842 = vmatmul.f32.gmra.mxu0 %v1731
      %v1843 = vpop.f32.mrf.mxu0
      %v1844 = vadd.f32 %v1650, %v1843
      %1845 = vmatmul.f32.gmra.mxu0 %v1734
      %v1846 = vpop.f32.mrf.mxu0
      %v1847 = vadd.f32 %v1650, %v1846
      %1848 = vmatmul.f32.gmra.mxu0 %v1737
      %v1849 = vpop.f32.mrf.mxu0
      %v1850 = vadd.f32 %v1650, %v1849
      %1851 = vmatmul.f32.gmra.mxu0 %v1740
      %v1852 = vpop.f32.mrf.mxu0
      %v1853 = vadd.f32 %v1650, %v1852
      %1854 = vmatmul.f32.gmra.mxu0 %v1743
      %v1855 = vpop.f32.mrf.mxu0
      %v1856 = vadd.f32 %v1650, %v1855
      %1857 = vmatmul.f32.gmra.mxu0 %v1746
      %v1858 = vpop.f32.mrf.mxu0
      %v1859 = vadd.f32 %v1650, %v1858
      %1860 = vdwg.mxu0
      %v1861 = vmax.f32 %v1766, 0.0
      %v1862 = vmax.f32 %v1769, 0.0
      %v1863 = vmax.f32 %v1772, 0.0
      %v1864 = vmax.f32 %v1775, 0.0
      %v1865 = vmax.f32 %v1778, 0.0
      %v1866 = vmax.f32 %v1781, 0.0
      %v1867 = vmax.f32 %v1784, 0.0
      %v1868 = vmax.f32 %v1787, 0.0
      %v1869 = vmax.f32 %v1790, 0.0
      %v1870 = vmax.f32 %v1793, 0.0
      %v1871 = vmax.f32 %v1796, 0.0
      %v1872 = vmax.f32 %v1799, 0.0
      %v1873 = vmax.f32 %v1802, 0.0
      %v1874 = vmax.f32 %v1805, 0.0
      %v1875 = vmax.f32 %v1808, 0.0
      %v1876 = vmax.f32 %v1811, 0.0
      %v1877 = vmax.f32 %v1814, 0.0
      %v1878 = vmax.f32 %v1817, 0.0
      %v1879 = vmax.f32 %v1820, 0.0
      %v1880 = vmax.f32 %v1823, 0.0
      %v1881 = vmax.f32 %v1826, 0.0
      %v1882 = vmax.f32 %v1829, 0.0
      %v1883 = vmax.f32 %v1832, 0.0
      %v1884 = vmax.f32 %v1835, 0.0
      %v1885 = vmax.f32 %v1838, 0.0
      %v1886 = vmax.f32 %v1841, 0.0
      %v1887 = vmax.f32 %v1844, 0.0
      %v1888 = vmax.f32 %v1847, 0.0
      %v1889 = vmax.f32 %v1850, 0.0
      %v1890 = vmax.f32 %v1853, 0.0
      %v1891 = vmax.f32 %v1856, 0.0
      %v1892 = vmax.f32 %v1859, 0.0
      %1893 = vst.msk [vmem:[#allocation3] sm:$0xff] %vm230, 0.0
      %1894 = vst.msk [vmem:[#allocation3 + $0x8] sm:$0xff] %vm230, 0.0
      %1895 = vst.msk [vmem:[#allocation3 + $0x10] sm:$0x3] %vm233, 0.0
      %1896 = vst.msk [vmem:[#allocation3 + $0x18] sm:$0xff] %vm230, 0.0
      %1897 = vst.msk [vmem:[#allocation3 + $0x20] sm:$0xff] %vm230, 0.0
      %1898 = vst.msk [vmem:[#allocation3 + $0x28] sm:$0x3] %vm233, 0.0
      %1899 = vst.msk [vmem:[#allocation3 + $0x30] sm:$0xff] %vm230, 0.0
      %1900 = vst.msk [vmem:[#allocation3 + $0x38] sm:$0xff] %vm230, 0.0
      %1901 = vst.msk [vmem:[#allocation3 + $0x40] sm:$0x3] %vm233, 0.0
      %1902 = vst.msk [vmem:[#allocation3 + $0x48] sm:$0xff] %vm230, 0.0
      %1903 = vst.msk [vmem:[#allocation3 + $0x50] sm:$0xff] %vm230, 0.0
      %1904 = vst.msk [vmem:[#allocation3 + $0x58] sm:$0x3] %vm233, 0.0
      %1905 = vst.msk [vmem:[#allocation3 + $0x60] sm:$0xff] %vm230, 0.0
      %1906 = vst.msk [vmem:[#allocation3 + $0x68] sm:$0xff] %vm230, 0.0
      %1907 = vst.msk [vmem:[#allocation3 + $0x70] sm:$0x3] %vm233, 0.0
      %1908 = vst.msk [vmem:[#allocation3 + $0x78] sm:$0xff] %vm230, 0.0
      %1909 = vst.msk [vmem:[#allocation3 + $0x80] sm:$0xff] %vm230, 0.0
      %1910 = vst.msk [vmem:[#allocation3 + $0x88] sm:$0x3] %vm233, 0.0
      %1911 = vst.msk [vmem:[#allocation3 + $0x90] sm:$0xff] %vm230, 0.0
      %1912 = vst.msk [vmem:[#allocation3 + $0x98] sm:$0xff] %vm230, 0.0
      %1913 = vst.msk [vmem:[#allocation3 + $0xa0] sm:$0x3] %vm233, 0.0
      %1914 = vst.msk [vmem:[#allocation3 + $0xa8] sm:$0xff] %vm230, 0.0
      %1915 = vst.msk [vmem:[#allocation3 + $0xb0] sm:$0xff] %vm230, 0.0
      %1916 = vst.msk [vmem:[#allocation3 + $0xb8] sm:$0x3] %vm233, 0.0
      %1917 = vst.msk [vmem:[#allocation3 + $0xc0] sm:$0xff] %vm230, 0.0
      %1918 = vst.msk [vmem:[#allocation3 + $0xc8] sm:$0xff] %vm230, 0.0
      %1919 = vst.msk [vmem:[#allocation3 + $0xd0] sm:$0x3] %vm233, 0.0
      %1920 = vst.msk [vmem:[#allocation3 + $0xd8] sm:$0xff] %vm230, 0.0
      %1921 = vst.msk [vmem:[#allocation3 + $0xe0] sm:$0xff] %vm230, 0.0
      %1922 = vst.msk [vmem:[#allocation3 + $0xe8] sm:$0x3] %vm233, 0.0
      %1923 = vst.msk [vmem:[#allocation3 + $0xf0] sm:$0xff] %vm230, 0.0
      %1924 = vst.msk [vmem:[#allocation3 + $0xf8] sm:$0xff] %vm230, 0.0
      %1925 = vst.msk [vmem:[#allocation3 + $0x100] sm:$0x3] %vm233, 0.0
      %1926 = vst.msk [vmem:[#allocation3 + $0x108] sm:$0xff] %vm230, 0.0
      %1927 = vst.msk [vmem:[#allocation3 + $0x110] sm:$0xff] %vm230, 0.0
      %1928 = vst.msk [vmem:[#allocation3 + $0x118] sm:$0x3] %vm233, 0.0
      %1929 = vst.msk [vmem:[#allocation3 + $0x120] sm:$0xff] %vm230, 0.0
      %1930 = vst.msk [vmem:[#allocation3 + $0x128] sm:$0xff] %vm230, 0.0
      %1931 = vst.msk [vmem:[#allocation3 + $0x130] sm:$0x3] %vm233, 0.0
      %1932 = vst.msk [vmem:[#allocation3 + $0x138] sm:$0xff] %vm230, 0.0
      %1933 = vst.msk [vmem:[#allocation3 + $0x140] sm:$0xff] %vm230, 0.0
      %1934 = vst.msk [vmem:[#allocation3 + $0x148] sm:$0x3] %vm233, 0.0
      %1935 = vst.msk [vmem:[#allocation3 + $0x150] sm:$0xff] %vm230, 0.0
      %1936 = vst.msk [vmem:[#allocation3 + $0x158] sm:$0xff] %vm230, 0.0
      %1937 = vst.msk [vmem:[#allocation3 + $0x160] sm:$0x3] %vm233, 0.0
      %1938 = vst.msk [vmem:[#allocation3 + $0x168] sm:$0xff] %vm230, 0.0
      %1939 = vst.msk [vmem:[#allocation3 + $0x170] sm:$0xff] %vm230, 0.0
      %1940 = vst.msk [vmem:[#allocation3 + $0x178] sm:$0x3] %vm233, 0.0
      %1941 = vst.msk [vmem:[#allocation3 + $0x180] sm:$0xff] %vm230, 0.0
      %1942 = vst.msk [vmem:[#allocation3 + $0x188] sm:$0xff] %vm230, 0.0
      %1943 = vst.msk [vmem:[#allocation3 + $0x190] sm:$0x3] %vm233, 0.0
      %1944 = vst.msk [vmem:[#allocation3 + $0x198] sm:$0xff] %vm230, 0.0
      %1945 = vst.msk [vmem:[#allocation3 + $0x1a0] sm:$0xff] %vm230, 0.0
      %1946 = vst.msk [vmem:[#allocation3 + $0x1a8] sm:$0x3] %vm233, 0.0
      %s1947 = scalar_lea.vmem [#allocation3], 24
      %1948 = vst.msk [vmem:[%s1947 + $0x1] sm:$0xff] %vm230, %v1861
      %1949 = vst.msk [vmem:[%s1947 + $0x9] sm:$0xff] %vm230, %v1862
      %1950 = vst.msk [vmem:[%s1947 + $0x19] sm:$0xff] %vm230, %v1863
      %1951 = vst.msk [vmem:[%s1947 + $0x21] sm:$0xff] %vm230, %v1864
      %1952 = vst.msk [vmem:[%s1947 + $0x31] sm:$0xff] %vm230, %v1865
      %1953 = vst.msk [vmem:[%s1947 + $0x39] sm:$0xff] %vm230, %v1866
      %1954 = vst.msk [vmem:[%s1947 + $0x49] sm:$0xff] %vm230, %v1867
      %1955 = vst.msk [vmem:[%s1947 + $0x51] sm:$0xff] %vm230, %v1868
      %1956 = vst.msk [vmem:[%s1947 + $0x61] sm:$0xff] %vm230, %v1869
      %1957 = vst.msk [vmem:[%s1947 + $0x69] sm:$0xff] %vm230, %v1870
      %1958 = vst.msk [vmem:[%s1947 + $0x79] sm:$0xff] %vm230, %v1871
      %1959 = vst.msk [vmem:[%s1947 + $0x81] sm:$0xff] %vm230, %v1872
      %1960 = vst.msk [vmem:[%s1947 + $0x91] sm:$0xff] %vm230, %v1873
      %1961 = vst.msk [vmem:[%s1947 + $0x99] sm:$0xff] %vm230, %v1874
      %1962 = vst.msk [vmem:[%s1947 + $0xa9] sm:$0xff] %vm230, %v1875
      %1963 = vst.msk [vmem:[%s1947 + $0xb1] sm:$0xff] %vm230, %v1876
      %1964 = vst.msk [vmem:[%s1947 + $0xc1] sm:$0xff] %vm230, %v1877
      %1965 = vst.msk [vmem:[%s1947 + $0xc9] sm:$0xff] %vm230, %v1878
      %1966 = vst.msk [vmem:[%s1947 + $0xd9] sm:$0xff] %vm230, %v1879
      %1967 = vst.msk [vmem:[%s1947 + $0xe1] sm:$0xff] %vm230, %v1880
      %1968 = vst.msk [vmem:[%s1947 + $0xf1] sm:$0xff] %vm230, %v1881
      %1969 = vst.msk [vmem:[%s1947 + $0xf9] sm:$0xff] %vm230, %v1882
      %1970 = vst.msk [vmem:[%s1947 + $0x109] sm:$0xff] %vm230, %v1883
      %1971 = vst.msk [vmem:[%s1947 + $0x111] sm:$0xff] %vm230, %v1884
      %1972 = vst.msk [vmem:[%s1947 + $0x121] sm:$0xff] %vm230, %v1885
      %1973 = vst.msk [vmem:[%s1947 + $0x129] sm:$0xff] %vm230, %v1886
      %1974 = vst.msk [vmem:[%s1947 + $0x139] sm:$0xff] %vm230, %v1887
      %1975 = vst.msk [vmem:[%s1947 + $0x141] sm:$0xff] %vm230, %v1888
      %1976 = vst.msk [vmem:[%s1947 + $0x151] sm:$0xff] %vm230, %v1889
      %1977 = vst.msk [vmem:[%s1947 + $0x159] sm:$0xff] %vm230, %v1890
      %1978 = vst.msk [vmem:[%s1947 + $0x169] sm:$0xff] %vm230, %v1891
      %1979 = vst.msk [vmem:[%s1947 + $0x171] sm:$0xff] %vm230, %v1892
      %v1980 = vld [vmem:[#allocation3] sm:$0xff]
      %v1981 = vld [vmem:[#allocation3 + $0x8] sm:$0xff]
      %v1982 = vld [vmem:[#allocation3 + $0x10] sm:$0x3]
      %v1983 = vld [vmem:[#allocation3 + $0x18] sm:$0xff]
      %v1984 = vld [vmem:[#allocation3 + $0x20] sm:$0xff]
      %v1985 = vld [vmem:[#allocation3 + $0x28] sm:$0x3]
      %v1986 = vld [vmem:[#allocation3 + $0x30] sm:$0xff]
      %v1987 = vld [vmem:[#allocation3 + $0x38] sm:$0xff]
      %v1988 = vld [vmem:[#allocation3 + $0x40] sm:$0x3]
      %v1989 = vld [vmem:[#allocation3 + $0x48] sm:$0xff]
      %v1990 = vld [vmem:[#allocation3 + $0x50] sm:$0xff]
      %v1991 = vld [vmem:[#allocation3 + $0x58] sm:$0x3]
      %v1992 = vld [vmem:[#allocation3 + $0x60] sm:$0xff]
      %v1993 = vld [vmem:[#allocation3 + $0x68] sm:$0xff]
      %v1994 = vld [vmem:[#allocation3 + $0x70] sm:$0x3]
      %v1995 = vld [vmem:[#allocation3 + $0x78] sm:$0xff]
      %v1996 = vld [vmem:[#allocation3 + $0x80] sm:$0xff]
      %v1997 = vld [vmem:[#allocation3 + $0x88] sm:$0x3]
      %v1998 = vld [vmem:[#allocation3 + $0x90] sm:$0xff]
      %v1999 = vld [vmem:[#allocation3 + $0x98] sm:$0xff]
      %v2000 = vld [vmem:[#allocation3 + $0xa0] sm:$0x3]
      %v2001 = vld [vmem:[#allocation3 + $0xa8] sm:$0xff]
      %v2002 = vld [vmem:[#allocation3 + $0xb0] sm:$0xff]
      %v2003 = vld [vmem:[#allocation3 + $0xb8] sm:$0x3]
      %v2004 = vld [vmem:[#allocation3 + $0xc0] sm:$0xff]
      %v2005 = vld [vmem:[#allocation3 + $0xc8] sm:$0xff]
      %v2006 = vld [vmem:[#allocation3 + $0xd0] sm:$0x3]
      %v2007 = vld [vmem:[#allocation3 + $0xd8] sm:$0xff]
      %v2008 = vld [vmem:[#allocation3 + $0xe0] sm:$0xff]
      %v2009 = vld [vmem:[#allocation3 + $0xe8] sm:$0x3]
      %v2010 = vld [vmem:[#allocation3 + $0xf0] sm:$0xff]
      %v2011 = vld [vmem:[#allocation3 + $0xf8] sm:$0xff]
      %v2012 = vld [vmem:[#allocation3 + $0x100] sm:$0x3]
      %v2013 = vld [vmem:[#allocation3 + $0x108] sm:$0xff]
      %v2014 = vld [vmem:[#allocation3 + $0x110] sm:$0xff]
      %v2015 = vld [vmem:[#allocation3 + $0x118] sm:$0x3]
      %v2016 = vld [vmem:[#allocation3 + $0x120] sm:$0xff]
      %v2017 = vld [vmem:[#allocation3 + $0x128] sm:$0xff]
      %v2018 = vld [vmem:[#allocation3 + $0x130] sm:$0x3]
      %v2019 = vld [vmem:[#allocation3 + $0x138] sm:$0xff]
      %v2020 = vld [vmem:[#allocation3 + $0x140] sm:$0xff]
      %v2021 = vld [vmem:[#allocation3 + $0x148] sm:$0x3]
      %v2022 = vld [vmem:[#allocation3 + $0x150] sm:$0xff]
      %v2023 = vld [vmem:[#allocation3 + $0x158] sm:$0xff]
      %v2024 = vld [vmem:[#allocation3 + $0x160] sm:$0x3]
      %v2025 = vld [vmem:[#allocation3 + $0x168] sm:$0xff]
      %v2026 = vld [vmem:[#allocation3 + $0x170] sm:$0xff]
      %v2027 = vld [vmem:[#allocation3 + $0x178] sm:$0x3]
      %v2028 = vld [vmem:[#allocation3 + $0x180] sm:$0xff]
      %v2029 = vld [vmem:[#allocation3 + $0x188] sm:$0xff]
      %v2030 = vld [vmem:[#allocation3 + $0x190] sm:$0x3]
      %v2031 = vld [vmem:[#allocation3 + $0x198] sm:$0xff]
      %v2032 = vld [vmem:[#allocation3 + $0x1a0] sm:$0xff]
      %v2033 = vld [vmem:[#allocation3 + $0x1a8] sm:$0x3]
      %v2082 = vrot.slane %v1980, 1
      %v2083 = vrot.slane %v1981, 1
      %v2084 = vsel %vm421, %v2082, %v2083
      %v2085 = vrot.slane %v1982, 1
      %v2086 = vsel %vm421, %v2083, %v2085
      %v2087 = vrot.slane %v1983, 1
      %v2088 = vrot.slane %v1984, 1
      %v2089 = vsel %vm421, %v2087, %v2088
      %v2090 = vrot.slane %v1985, 1
      %v2091 = vsel %vm421, %v2088, %v2090
      %v2092 = vrot.slane %v1986, 1
      %v2093 = vrot.slane %v1987, 1
      %v2094 = vsel %vm421, %v2092, %v2093
      %v2095 = vrot.slane %v1988, 1
      %v2096 = vsel %vm421, %v2093, %v2095
      %v2097 = vrot.slane %v1989, 1
      %v2098 = vrot.slane %v1990, 1
      %v2099 = vsel %vm421, %v2097, %v2098
      %v2100 = vrot.slane %v1991, 1
      %v2101 = vsel %vm421, %v2098, %v2100
      %v2102 = vrot.slane %v1992, 1
      %v2103 = vrot.slane %v1993, 1
      %v2104 = vsel %vm421, %v2102, %v2103
      %v2105 = vrot.slane %v1994, 1
      %v2106 = vsel %vm421, %v2103, %v2105
      %v2107 = vrot.slane %v1995, 1
      %v2108 = vrot.slane %v1996, 1
      %v2109 = vsel %vm421, %v2107, %v2108
      %v2110 = vrot.slane %v1997, 1
      %v2111 = vsel %vm421, %v2108, %v2110
      %v2112 = vrot.slane %v1998, 1
      %v2113 = vrot.slane %v1999, 1
      %v2114 = vsel %vm421, %v2112, %v2113
      %v2115 = vrot.slane %v2000, 1
      %v2116 = vsel %vm421, %v2113, %v2115
      %v2117 = vrot.slane %v2001, 1
      %v2118 = vrot.slane %v2002, 1
      %v2119 = vsel %vm421, %v2117, %v2118
      %v2120 = vrot.slane %v2003, 1
      %v2121 = vsel %vm421, %v2118, %v2120
      %v2122 = vrot.slane %v2004, 1
      %v2123 = vrot.slane %v2005, 1
      %v2124 = vsel %vm421, %v2122, %v2123
      %v2125 = vrot.slane %v2006, 1
      %v2126 = vsel %vm421, %v2123, %v2125
      %v2127 = vrot.slane %v2007, 1
      %v2128 = vrot.slane %v2008, 1
      %v2129 = vsel %vm421, %v2127, %v2128
      %v2130 = vrot.slane %v2009, 1
      %v2131 = vsel %vm421, %v2128, %v2130
      %v2132 = vrot.slane %v2010, 1
      %v2133 = vrot.slane %v2011, 1
      %v2134 = vsel %vm421, %v2132, %v2133
      %v2135 = vrot.slane %v2012, 1
      %v2136 = vsel %vm421, %v2133, %v2135
      %v2137 = vrot.slane %v2013, 1
      %v2138 = vrot.slane %v2014, 1
      %v2139 = vsel %vm421, %v2137, %v2138
      %v2140 = vrot.slane %v2015, 1
      %v2141 = vsel %vm421, %v2138, %v2140
      %v2142 = vrot.slane %v2016, 1
      %v2143 = vrot.slane %v2017, 1
      %v2144 = vsel %vm421, %v2142, %v2143
      %v2145 = vrot.slane %v2018, 1
      %v2146 = vsel %vm421, %v2143, %v2145
      %v2147 = vrot.slane %v2019, 1
      %v2148 = vrot.slane %v2020, 1
      %v2149 = vsel %vm421, %v2147, %v2148
      %v2150 = vrot.slane %v2021, 1
      %v2151 = vsel %vm421, %v2148, %v2150
      %v2152 = vrot.slane %v2022, 1
      %v2153 = vrot.slane %v2023, 1
      %v2154 = vsel %vm421, %v2152, %v2153
      %v2155 = vrot.slane %v2024, 1
      %v2156 = vsel %vm421, %v2153, %v2155
      %v2157 = vrot.slane %v2025, 1
      %v2158 = vrot.slane %v2026, 1
      %v2159 = vsel %vm421, %v2157, %v2158
      %v2160 = vrot.slane %v2027, 1
      %v2161 = vsel %vm421, %v2158, %v2160
      %2162 = vrot.lane.b32.xlu0 %v2084, 8
      %v2163 = vpop.permute.xlu0 %2162
      %2164 = vrot.lane.b32.xlu0 %v2086, 8
      %v2165 = vpop.permute.xlu0 %2164
      %2166 = vrot.lane.b32.xlu0 %v2089, 8
      %v2167 = vpop.permute.xlu0 %2166
      %2168 = vrot.lane.b32.xlu0 %v2091, 8
      %v2169 = vpop.permute.xlu0 %2168
      %2170 = vrot.lane.b32.xlu0 %v2094, 8
      %v2171 = vpop.permute.xlu0 %2170
      %2172 = vrot.lane.b32.xlu0 %v2096, 8
      %v2173 = vpop.permute.xlu0 %2172
      %2174 = vrot.lane.b32.xlu0 %v2099, 8
      %v2175 = vpop.permute.xlu0 %2174
      %2176 = vrot.lane.b32.xlu0 %v2101, 8
      %v2177 = vpop.permute.xlu0 %2176
      %2178 = vrot.lane.b32.xlu0 %v2104, 8
      %v2179 = vpop.permute.xlu0 %2178
      %2180 = vrot.lane.b32.xlu0 %v2106, 8
      %v2181 = vpop.permute.xlu0 %2180
      %2182 = vrot.lane.b32.xlu0 %v2109, 8
      %v2183 = vpop.permute.xlu0 %2182
      %2184 = vrot.lane.b32.xlu0 %v2111, 8
      %v2185 = vpop.permute.xlu0 %2184
      %2186 = vrot.lane.b32.xlu0 %v2114, 8
      %v2187 = vpop.permute.xlu0 %2186
      %2188 = vrot.lane.b32.xlu0 %v2116, 8
      %v2189 = vpop.permute.xlu0 %2188
      %2190 = vrot.lane.b32.xlu0 %v2119, 8
      %v2191 = vpop.permute.xlu0 %2190
      %2192 = vrot.lane.b32.xlu0 %v2121, 8
      %v2193 = vpop.permute.xlu0 %2192
      %2194 = vrot.lane.b32.xlu0 %v2124, 8
      %v2195 = vpop.permute.xlu0 %2194
      %2196 = vrot.lane.b32.xlu0 %v2126, 8
      %v2197 = vpop.permute.xlu0 %2196
      %2198 = vrot.lane.b32.xlu0 %v2129, 8
      %v2199 = vpop.permute.xlu0 %2198
      %2200 = vrot.lane.b32.xlu0 %v2131, 8
      %v2201 = vpop.permute.xlu0 %2200
      %2202 = vrot.lane.b32.xlu0 %v2134, 8
      %v2203 = vpop.permute.xlu0 %2202
      %2204 = vrot.lane.b32.xlu0 %v2136, 8
      %v2205 = vpop.permute.xlu0 %2204
      %2206 = vrot.lane.b32.xlu0 %v2139, 8
      %v2207 = vpop.permute.xlu0 %2206
      %2208 = vrot.lane.b32.xlu0 %v2141, 8
      %v2209 = vpop.permute.xlu0 %2208
      %2210 = vrot.lane.b32.xlu0 %v2144, 8
      %v2211 = vpop.permute.xlu0 %2210
      %2212 = vrot.lane.b32.xlu0 %v2146, 8
      %v2213 = vpop.permute.xlu0 %2212
      %2214 = vrot.lane.b32.xlu0 %v2149, 8
      %v2215 = vpop.permute.xlu0 %2214
      %2216 = vrot.lane.b32.xlu0 %v2151, 8
      %v2217 = vpop.permute.xlu0 %2216
      %2218 = vrot.lane.b32.xlu0 %v2154, 8
      %v2219 = vpop.permute.xlu0 %2218
      %2220 = vrot.lane.b32.xlu0 %v2156, 8
      %v2221 = vpop.permute.xlu0 %2220
      %2222 = vrot.lane.b32.xlu0 %v2159, 8
      %v2223 = vpop.permute.xlu0 %2222
      %2224 = vrot.lane.b32.xlu0 %v2161, 8
      %v2225 = vpop.permute.xlu0 %2224
      %v2258 = vrot.slane %v1980, 2
      %v2259 = vrot.slane %v1981, 2
      %v2260 = vsel %vm598, %v2258, %v2259
      %v2261 = vrot.slane %v1982, 2
      %v2262 = vsel %vm598, %v2259, %v2261
      %v2263 = vrot.slane %v1983, 2
      %v2264 = vrot.slane %v1984, 2
      %v2265 = vsel %vm598, %v2263, %v2264
      %v2266 = vrot.slane %v1985, 2
      %v2267 = vsel %vm598, %v2264, %v2266
      %v2268 = vrot.slane %v1986, 2
      %v2269 = vrot.slane %v1987, 2
      %v2270 = vsel %vm598, %v2268, %v2269
      %v2271 = vrot.slane %v1988, 2
      %v2272 = vsel %vm598, %v2269, %v2271
      %v2273 = vrot.slane %v1989, 2
      %v2274 = vrot.slane %v1990, 2
      %v2275 = vsel %vm598, %v2273, %v2274
      %v2276 = vrot.slane %v1991, 2
      %v2277 = vsel %vm598, %v2274, %v2276
      %v2278 = vrot.slane %v1992, 2
      %v2279 = vrot.slane %v1993, 2
      %v2280 = vsel %vm598, %v2278, %v2279
      %v2281 = vrot.slane %v1994, 2
      %v2282 = vsel %vm598, %v2279, %v2281
      %v2283 = vrot.slane %v1995, 2
      %v2284 = vrot.slane %v1996, 2
      %v2285 = vsel %vm598, %v2283, %v2284
      %v2286 = vrot.slane %v1997, 2
      %v2287 = vsel %vm598, %v2284, %v2286
      %v2288 = vrot.slane %v1998, 2
      %v2289 = vrot.slane %v1999, 2
      %v2290 = vsel %vm598, %v2288, %v2289
      %v2291 = vrot.slane %v2000, 2
      %v2292 = vsel %vm598, %v2289, %v2291
      %v2293 = vrot.slane %v2001, 2
      %v2294 = vrot.slane %v2002, 2
      %v2295 = vsel %vm598, %v2293, %v2294
      %v2296 = vrot.slane %v2003, 2
      %v2297 = vsel %vm598, %v2294, %v2296
      %v2298 = vrot.slane %v2004, 2
      %v2299 = vrot.slane %v2005, 2
      %v2300 = vsel %vm598, %v2298, %v2299
      %v2301 = vrot.slane %v2006, 2
      %v2302 = vsel %vm598, %v2299, %v2301
      %v2303 = vrot.slane %v2007, 2
      %v2304 = vrot.slane %v2008, 2
      %v2305 = vsel %vm598, %v2303, %v2304
      %v2306 = vrot.slane %v2009, 2
      %v2307 = vsel %vm598, %v2304, %v2306
      %v2308 = vrot.slane %v2010, 2
      %v2309 = vrot.slane %v2011, 2
      %v2310 = vsel %vm598, %v2308, %v2309
      %v2311 = vrot.slane %v2012, 2
      %v2312 = vsel %vm598, %v2309, %v2311
      %v2313 = vrot.slane %v2013, 2
      %v2314 = vrot.slane %v2014, 2
      %v2315 = vsel %vm598, %v2313, %v2314
      %v2316 = vrot.slane %v2015, 2
      %v2317 = vsel %vm598, %v2314, %v2316
      %v2318 = vrot.slane %v2016, 2
      %v2319 = vrot.slane %v2017, 2
      %v2320 = vsel %vm598, %v2318, %v2319
      %v2321 = vrot.slane %v2018, 2
      %v2322 = vsel %vm598, %v2319, %v2321
      %v2323 = vrot.slane %v2019, 2
      %v2324 = vrot.slane %v2020, 2
      %v2325 = vsel %vm598, %v2323, %v2324
      %v2326 = vrot.slane %v2021, 2
      %v2327 = vsel %vm598, %v2324, %v2326
      %v2328 = vrot.slane %v2022, 2
      %v2329 = vrot.slane %v2023, 2
      %v2330 = vsel %vm598, %v2328, %v2329
      %v2331 = vrot.slane %v2024, 2
      %v2332 = vsel %vm598, %v2329, %v2331
      %v2333 = vrot.slane %v2025, 2
      %v2334 = vrot.slane %v2026, 2
      %v2335 = vsel %vm598, %v2333, %v2334
      %v2336 = vrot.slane %v2027, 2
      %v2337 = vsel %vm598, %v2334, %v2336
      %2338 = vrot.lane.b32.xlu0 %v2260, 16
      %v2339 = vpop.permute.xlu0 %2338
      %2340 = vrot.lane.b32.xlu0 %v2262, 16
      %v2341 = vpop.permute.xlu0 %2340
      %2342 = vrot.lane.b32.xlu0 %v2265, 16
      %v2343 = vpop.permute.xlu0 %2342
      %2344 = vrot.lane.b32.xlu0 %v2267, 16
      %v2345 = vpop.permute.xlu0 %2344
      %2346 = vrot.lane.b32.xlu0 %v2270, 16
      %v2347 = vpop.permute.xlu0 %2346
      %2348 = vrot.lane.b32.xlu0 %v2272, 16
      %v2349 = vpop.permute.xlu0 %2348
      %2350 = vrot.lane.b32.xlu0 %v2275, 16
      %v2351 = vpop.permute.xlu0 %2350
      %2352 = vrot.lane.b32.xlu0 %v2277, 16
      %v2353 = vpop.permute.xlu0 %2352
      %2354 = vrot.lane.b32.xlu0 %v2280, 16
      %v2355 = vpop.permute.xlu0 %2354
      %2356 = vrot.lane.b32.xlu0 %v2282, 16
      %v2357 = vpop.permute.xlu0 %2356
      %2358 = vrot.lane.b32.xlu0 %v2285, 16
      %v2359 = vpop.permute.xlu0 %2358
      %2360 = vrot.lane.b32.xlu0 %v2287, 16
      %v2361 = vpop.permute.xlu0 %2360
      %2362 = vrot.lane.b32.xlu0 %v2290, 16
      %v2363 = vpop.permute.xlu0 %2362
      %2364 = vrot.lane.b32.xlu0 %v2292, 16
      %v2365 = vpop.permute.xlu0 %2364
      %2366 = vrot.lane.b32.xlu0 %v2295, 16
      %v2367 = vpop.permute.xlu0 %2366
      %2368 = vrot.lane.b32.xlu0 %v2297, 16
      %v2369 = vpop.permute.xlu0 %2368
      %2370 = vrot.lane.b32.xlu0 %v2300, 16
      %v2371 = vpop.permute.xlu0 %2370
      %2372 = vrot.lane.b32.xlu0 %v2302, 16
      %v2373 = vpop.permute.xlu0 %2372
      %2374 = vrot.lane.b32.xlu0 %v2305, 16
      %v2375 = vpop.permute.xlu0 %2374
      %2376 = vrot.lane.b32.xlu0 %v2307, 16
      %v2377 = vpop.permute.xlu0 %2376
      %2378 = vrot.lane.b32.xlu0 %v2310, 16
      %v2379 = vpop.permute.xlu0 %2378
      %2380 = vrot.lane.b32.xlu0 %v2312, 16
      %v2381 = vpop.permute.xlu0 %2380
      %2382 = vrot.lane.b32.xlu0 %v2315, 16
      %v2383 = vpop.permute.xlu0 %2382
      %2384 = vrot.lane.b32.xlu0 %v2317, 16
      %v2385 = vpop.permute.xlu0 %2384
      %2386 = vrot.lane.b32.xlu0 %v2320, 16
      %v2387 = vpop.permute.xlu0 %2386
      %2388 = vrot.lane.b32.xlu0 %v2322, 16
      %v2389 = vpop.permute.xlu0 %2388
      %2390 = vrot.lane.b32.xlu0 %v2325, 16
      %v2391 = vpop.permute.xlu0 %2390
      %2392 = vrot.lane.b32.xlu0 %v2327, 16
      %v2393 = vpop.permute.xlu0 %2392
      %2394 = vrot.lane.b32.xlu0 %v2330, 16
      %v2395 = vpop.permute.xlu0 %2394
      %2396 = vrot.lane.b32.xlu0 %v2332, 16
      %v2397 = vpop.permute.xlu0 %2396
      %2398 = vrot.lane.b32.xlu0 %v2335, 16
      %v2399 = vpop.permute.xlu0 %2398
      %2400 = vrot.lane.b32.xlu0 %v2337, 16
      %v2401 = vpop.permute.xlu0 %2400
      %2436 = vrot.lane.b32.xlu0 %v1983, 24
      %v2437 = vpop.permute.xlu0 %2436
      %2438 = vrot.lane.b32.xlu0 %v1984, 24
      %v2439 = vpop.permute.xlu0 %2438
      %2440 = vrot.lane.b32.xlu0 %v1986, 24
      %v2441 = vpop.permute.xlu0 %2440
      %2442 = vrot.lane.b32.xlu0 %v1987, 24
      %v2443 = vpop.permute.xlu0 %2442
      %2444 = vrot.lane.b32.xlu0 %v1989, 24
      %v2445 = vpop.permute.xlu0 %2444
      %2446 = vrot.lane.b32.xlu0 %v1990, 24
      %v2447 = vpop.permute.xlu0 %2446
      %2448 = vrot.lane.b32.xlu0 %v1992, 24
      %v2449 = vpop.permute.xlu0 %2448
      %2450 = vrot.lane.b32.xlu0 %v1993, 24
      %v2451 = vpop.permute.xlu0 %2450
      %2452 = vrot.lane.b32.xlu0 %v1995, 24
      %v2453 = vpop.permute.xlu0 %2452
      %2454 = vrot.lane.b32.xlu0 %v1996, 24
      %v2455 = vpop.permute.xlu0 %2454
      %2456 = vrot.lane.b32.xlu0 %v1998, 24
      %v2457 = vpop.permute.xlu0 %2456
      %2458 = vrot.lane.b32.xlu0 %v1999, 24
      %v2459 = vpop.permute.xlu0 %2458
      %2460 = vrot.lane.b32.xlu0 %v2001, 24
      %v2461 = vpop.permute.xlu0 %2460
      %2462 = vrot.lane.b32.xlu0 %v2002, 24
      %v2463 = vpop.permute.xlu0 %2462
      %2464 = vrot.lane.b32.xlu0 %v2004, 24
      %v2465 = vpop.permute.xlu0 %2464
      %2466 = vrot.lane.b32.xlu0 %v2005, 24
      %v2467 = vpop.permute.xlu0 %2466
      %2468 = vrot.lane.b32.xlu0 %v2007, 24
      %v2469 = vpop.permute.xlu0 %2468
      %2470 = vrot.lane.b32.xlu0 %v2008, 24
      %v2471 = vpop.permute.xlu0 %2470
      %2472 = vrot.lane.b32.xlu0 %v2010, 24
      %v2473 = vpop.permute.xlu0 %2472
      %2474 = vrot.lane.b32.xlu0 %v2011, 24
      %v2475 = vpop.permute.xlu0 %2474
      %2476 = vrot.lane.b32.xlu0 %v2013, 24
      %v2477 = vpop.permute.xlu0 %2476
      %2478 = vrot.lane.b32.xlu0 %v2014, 24
      %v2479 = vpop.permute.xlu0 %2478
      %2480 = vrot.lane.b32.xlu0 %v2016, 24
      %v2481 = vpop.permute.xlu0 %2480
      %2482 = vrot.lane.b32.xlu0 %v2017, 24
      %v2483 = vpop.permute.xlu0 %2482
      %2484 = vrot.lane.b32.xlu0 %v2019, 24
      %v2485 = vpop.permute.xlu0 %2484
      %2486 = vrot.lane.b32.xlu0 %v2020, 24
      %v2487 = vpop.permute.xlu0 %2486
      %2488 = vrot.lane.b32.xlu0 %v2022, 24
      %v2489 = vpop.permute.xlu0 %2488
      %2490 = vrot.lane.b32.xlu0 %v2023, 24
      %v2491 = vpop.permute.xlu0 %2490
      %2492 = vrot.lane.b32.xlu0 %v2025, 24
      %v2493 = vpop.permute.xlu0 %2492
      %2494 = vrot.lane.b32.xlu0 %v2026, 24
      %v2495 = vpop.permute.xlu0 %2494
      %2496 = vrot.lane.b32.xlu0 %v2028, 24
      %v2497 = vpop.permute.xlu0 %2496
      %2498 = vrot.lane.b32.xlu0 %v2029, 24
      %v2499 = vpop.permute.xlu0 %2498
      %v2533 = vrot.slane %v2028, 1
      %v2534 = vrot.slane %v2029, 1
      %v2535 = vsel %vm421, %v2533, %v2534
      %v2536 = vrot.slane %v2030, 1
      %v2537 = vsel %vm421, %v2534, %v2536
      %2538 = vrot.lane.b32.xlu0 %v2089, 32
      %v2539 = vpop.permute.xlu0 %2538
      %2540 = vrot.lane.b32.xlu0 %v2091, 32
      %v2541 = vpop.permute.xlu0 %2540
      %2542 = vrot.lane.b32.xlu0 %v2094, 32
      %v2543 = vpop.permute.xlu0 %2542
      %2544 = vrot.lane.b32.xlu0 %v2096, 32
      %v2545 = vpop.permute.xlu0 %2544
      %2546 = vrot.lane.b32.xlu0 %v2099, 32
      %v2547 = vpop.permute.xlu0 %2546
      %2548 = vrot.lane.b32.xlu0 %v2101, 32
      %v2549 = vpop.permute.xlu0 %2548
      %2550 = vrot.lane.b32.xlu0 %v2104, 32
      %v2551 = vpop.permute.xlu0 %2550
      %2552 = vrot.lane.b32.xlu0 %v2106, 32
      %v2553 = vpop.permute.xlu0 %2552
      %2554 = vrot.lane.b32.xlu0 %v2109, 32
      %v2555 = vpop.permute.xlu0 %2554
      %2556 = vrot.lane.b32.xlu0 %v2111, 32
      %v2557 = vpop.permute.xlu0 %2556
      %2558 = vrot.lane.b32.xlu0 %v2114, 32
      %v2559 = vpop.permute.xlu0 %2558
      %2560 = vrot.lane.b32.xlu0 %v2116, 32
      %v2561 = vpop.permute.xlu0 %2560
      %2562 = vrot.lane.b32.xlu0 %v2119, 32
      %v2563 = vpop.permute.xlu0 %2562
      %2564 = vrot.lane.b32.xlu0 %v2121, 32
      %v2565 = vpop.permute.xlu0 %2564
      %2566 = vrot.lane.b32.xlu0 %v2124, 32
      %v2567 = vpop.permute.xlu0 %2566
      %2568 = vrot.lane.b32.xlu0 %v2126, 32
      %v2569 = vpop.permute.xlu0 %2568
      %2570 = vrot.lane.b32.xlu0 %v2129, 32
      %v2571 = vpop.permute.xlu0 %2570
      %2572 = vrot.lane.b32.xlu0 %v2131, 32
      %v2573 = vpop.permute.xlu0 %2572
      %2574 = vrot.lane.b32.xlu0 %v2134, 32
      %v2575 = vpop.permute.xlu0 %2574
      %2576 = vrot.lane.b32.xlu0 %v2136, 32
      %v2577 = vpop.permute.xlu0 %2576
      %2578 = vrot.lane.b32.xlu0 %v2139, 32
      %v2579 = vpop.permute.xlu0 %2578
      %2580 = vrot.lane.b32.xlu0 %v2141, 32
      %v2581 = vpop.permute.xlu0 %2580
      %2582 = vrot.lane.b32.xlu0 %v2144, 32
      %v2583 = vpop.permute.xlu0 %2582
      %2584 = vrot.lane.b32.xlu0 %v2146, 32
      %v2585 = vpop.permute.xlu0 %2584
      %2586 = vrot.lane.b32.xlu0 %v2149, 32
      %v2587 = vpop.permute.xlu0 %2586
      %2588 = vrot.lane.b32.xlu0 %v2151, 32
      %v2589 = vpop.permute.xlu0 %2588
      %2590 = vrot.lane.b32.xlu0 %v2154, 32
      %v2591 = vpop.permute.xlu0 %2590
      %2592 = vrot.lane.b32.xlu0 %v2156, 32
      %v2593 = vpop.permute.xlu0 %2592
      %2594 = vrot.lane.b32.xlu0 %v2159, 32
      %v2595 = vpop.permute.xlu0 %2594
      %2596 = vrot.lane.b32.xlu0 %v2161, 32
      %v2597 = vpop.permute.xlu0 %2596
      %2598 = vrot.lane.b32.xlu0 %v2535, 32
      %v2599 = vpop.permute.xlu0 %2598
      %2600 = vrot.lane.b32.xlu0 %v2537, 32
      %v2601 = vpop.permute.xlu0 %2600
      %v2634 = vrot.slane %v2028, 2
      %v2635 = vrot.slane %v2029, 2
      %v2636 = vsel %vm598, %v2634, %v2635
      %v2637 = vrot.slane %v2030, 2
      %v2638 = vsel %vm598, %v2635, %v2637
      %2639 = vrot.lane.b32.xlu0 %v2265, 40
      %v2640 = vpop.permute.xlu0 %2639
      %2641 = vrot.lane.b32.xlu0 %v2267, 40
      %v2642 = vpop.permute.xlu0 %2641
      %2643 = vrot.lane.b32.xlu0 %v2270, 40
      %v2644 = vpop.permute.xlu0 %2643
      %2645 = vrot.lane.b32.xlu0 %v2272, 40
      %v2646 = vpop.permute.xlu0 %2645
      %2647 = vrot.lane.b32.xlu0 %v2275, 40
      %v2648 = vpop.permute.xlu0 %2647
      %2649 = vrot.lane.b32.xlu0 %v2277, 40
      %v2650 = vpop.permute.xlu0 %2649
      %2651 = vrot.lane.b32.xlu0 %v2280, 40
      %v2652 = vpop.permute.xlu0 %2651
      %2653 = vrot.lane.b32.xlu0 %v2282, 40
      %v2654 = vpop.permute.xlu0 %2653
      %2655 = vrot.lane.b32.xlu0 %v2285, 40
      %v2656 = vpop.permute.xlu0 %2655
      %2657 = vrot.lane.b32.xlu0 %v2287, 40
      %v2658 = vpop.permute.xlu0 %2657
      %2659 = vrot.lane.b32.xlu0 %v2290, 40
      %v2660 = vpop.permute.xlu0 %2659
      %2661 = vrot.lane.b32.xlu0 %v2292, 40
      %v2662 = vpop.permute.xlu0 %2661
      %2663 = vrot.lane.b32.xlu0 %v2295, 40
      %v2664 = vpop.permute.xlu0 %2663
      %2665 = vrot.lane.b32.xlu0 %v2297, 40
      %v2666 = vpop.permute.xlu0 %2665
      %2667 = vrot.lane.b32.xlu0 %v2300, 40
      %v2668 = vpop.permute.xlu0 %2667
      %2669 = vrot.lane.b32.xlu0 %v2302, 40
      %v2670 = vpop.permute.xlu0 %2669
      %2671 = vrot.lane.b32.xlu0 %v2305, 40
      %v2672 = vpop.permute.xlu0 %2671
      %2673 = vrot.lane.b32.xlu0 %v2307, 40
      %v2674 = vpop.permute.xlu0 %2673
      %2675 = vrot.lane.b32.xlu0 %v2310, 40
      %v2676 = vpop.permute.xlu0 %2675
      %2677 = vrot.lane.b32.xlu0 %v2312, 40
      %v2678 = vpop.permute.xlu0 %2677
      %2679 = vrot.lane.b32.xlu0 %v2315, 40
      %v2680 = vpop.permute.xlu0 %2679
      %2681 = vrot.lane.b32.xlu0 %v2317, 40
      %v2682 = vpop.permute.xlu0 %2681
      %2683 = vrot.lane.b32.xlu0 %v2320, 40
      %v2684 = vpop.permute.xlu0 %2683
      %2685 = vrot.lane.b32.xlu0 %v2322, 40
      %v2686 = vpop.permute.xlu0 %2685
      %2687 = vrot.lane.b32.xlu0 %v2325, 40
      %v2688 = vpop.permute.xlu0 %2687
      %2689 = vrot.lane.b32.xlu0 %v2327, 40
      %v2690 = vpop.permute.xlu0 %2689
      %2691 = vrot.lane.b32.xlu0 %v2330, 40
      %v2692 = vpop.permute.xlu0 %2691
      %2693 = vrot.lane.b32.xlu0 %v2332, 40
      %v2694 = vpop.permute.xlu0 %2693
      %2695 = vrot.lane.b32.xlu0 %v2335, 40
      %v2696 = vpop.permute.xlu0 %2695
      %2697 = vrot.lane.b32.xlu0 %v2337, 40
      %v2698 = vpop.permute.xlu0 %2697
      %2699 = vrot.lane.b32.xlu0 %v2636, 40
      %v2700 = vpop.permute.xlu0 %2699
      %2701 = vrot.lane.b32.xlu0 %v2638, 40
      %v2702 = vpop.permute.xlu0 %2701
      %2737 = vrot.lane.b32.xlu0 %v1986, 48
      %v2738 = vpop.permute.xlu0 %2737
      %2739 = vrot.lane.b32.xlu0 %v1987, 48
      %v2740 = vpop.permute.xlu0 %2739
      %2741 = vrot.lane.b32.xlu0 %v1989, 48
      %v2742 = vpop.permute.xlu0 %2741
      %2743 = vrot.lane.b32.xlu0 %v1990, 48
      %v2744 = vpop.permute.xlu0 %2743
      %2745 = vrot.lane.b32.xlu0 %v1992, 48
      %v2746 = vpop.permute.xlu0 %2745
      %2747 = vrot.lane.b32.xlu0 %v1993, 48
      %v2748 = vpop.permute.xlu0 %2747
      %2749 = vrot.lane.b32.xlu0 %v1995, 48
      %v2750 = vpop.permute.xlu0 %2749
      %2751 = vrot.lane.b32.xlu0 %v1996, 48
      %v2752 = vpop.permute.xlu0 %2751
      %2753 = vrot.lane.b32.xlu0 %v1998, 48
      %v2754 = vpop.permute.xlu0 %2753
      %2755 = vrot.lane.b32.xlu0 %v1999, 48
      %v2756 = vpop.permute.xlu0 %2755
      %2757 = vrot.lane.b32.xlu0 %v2001, 48
      %v2758 = vpop.permute.xlu0 %2757
      %2759 = vrot.lane.b32.xlu0 %v2002, 48
      %v2760 = vpop.permute.xlu0 %2759
      %2761 = vrot.lane.b32.xlu0 %v2004, 48
      %v2762 = vpop.permute.xlu0 %2761
      %2763 = vrot.lane.b32.xlu0 %v2005, 48
      %v2764 = vpop.permute.xlu0 %2763
      %2765 = vrot.lane.b32.xlu0 %v2007, 48
      %v2766 = vpop.permute.xlu0 %2765
      %2767 = vrot.lane.b32.xlu0 %v2008, 48
      %v2768 = vpop.permute.xlu0 %2767
      %2769 = vrot.lane.b32.xlu0 %v2010, 48
      %v2770 = vpop.permute.xlu0 %2769
      %2771 = vrot.lane.b32.xlu0 %v2011, 48
      %v2772 = vpop.permute.xlu0 %2771
      %2773 = vrot.lane.b32.xlu0 %v2013, 48
      %v2774 = vpop.permute.xlu0 %2773
      %2775 = vrot.lane.b32.xlu0 %v2014, 48
      %v2776 = vpop.permute.xlu0 %2775
      %2777 = vrot.lane.b32.xlu0 %v2016, 48
      %v2778 = vpop.permute.xlu0 %2777
      %2779 = vrot.lane.b32.xlu0 %v2017, 48
      %v2780 = vpop.permute.xlu0 %2779
      %2781 = vrot.lane.b32.xlu0 %v2019, 48
      %v2782 = vpop.permute.xlu0 %2781
      %2783 = vrot.lane.b32.xlu0 %v2020, 48
      %v2784 = vpop.permute.xlu0 %2783
      %2785 = vrot.lane.b32.xlu0 %v2022, 48
      %v2786 = vpop.permute.xlu0 %2785
      %2787 = vrot.lane.b32.xlu0 %v2023, 48
      %v2788 = vpop.permute.xlu0 %2787
      %2789 = vrot.lane.b32.xlu0 %v2025, 48
      %v2790 = vpop.permute.xlu0 %2789
      %2791 = vrot.lane.b32.xlu0 %v2026, 48
      %v2792 = vpop.permute.xlu0 %2791
      %2793 = vrot.lane.b32.xlu0 %v2028, 48
      %v2794 = vpop.permute.xlu0 %2793
      %2795 = vrot.lane.b32.xlu0 %v2029, 48
      %v2796 = vpop.permute.xlu0 %2795
      %2797 = vrot.lane.b32.xlu0 %v2031, 48
      %v2798 = vpop.permute.xlu0 %2797
      %2799 = vrot.lane.b32.xlu0 %v2032, 48
      %v2800 = vpop.permute.xlu0 %2799
      %v2834 = vrot.slane %v2031, 1
      %v2835 = vrot.slane %v2032, 1
      %v2836 = vsel %vm421, %v2834, %v2835
      %v2837 = vrot.slane %v2033, 1
      %v2838 = vsel %vm421, %v2835, %v2837
      %2839 = vrot.lane.b32.xlu0 %v2094, 56
      %v2840 = vpop.permute.xlu0 %2839
      %2841 = vrot.lane.b32.xlu0 %v2096, 56
      %v2842 = vpop.permute.xlu0 %2841
      %2843 = vrot.lane.b32.xlu0 %v2099, 56
      %v2844 = vpop.permute.xlu0 %2843
      %2845 = vrot.lane.b32.xlu0 %v2101, 56
      %v2846 = vpop.permute.xlu0 %2845
      %2847 = vrot.lane.b32.xlu0 %v2104, 56
      %v2848 = vpop.permute.xlu0 %2847
      %2849 = vrot.lane.b32.xlu0 %v2106, 56
      %v2850 = vpop.permute.xlu0 %2849
      %2851 = vrot.lane.b32.xlu0 %v2109, 56
      %v2852 = vpop.permute.xlu0 %2851
      %2853 = vrot.lane.b32.xlu0 %v2111, 56
      %v2854 = vpop.permute.xlu0 %2853
      %2855 = vrot.lane.b32.xlu0 %v2114, 56
      %v2856 = vpop.permute.xlu0 %2855
      %2857 = vrot.lane.b32.xlu0 %v2116, 56
      %v2858 = vpop.permute.xlu0 %2857
      %2859 = vrot.lane.b32.xlu0 %v2119, 56
      %v2860 = vpop.permute.xlu0 %2859
      %2861 = vrot.lane.b32.xlu0 %v2121, 56
      %v2862 = vpop.permute.xlu0 %2861
      %2863 = vrot.lane.b32.xlu0 %v2124, 56
      %v2864 = vpop.permute.xlu0 %2863
      %2865 = vrot.lane.b32.xlu0 %v2126, 56
      %v2866 = vpop.permute.xlu0 %2865
      %2867 = vrot.lane.b32.xlu0 %v2129, 56
      %v2868 = vpop.permute.xlu0 %2867
      %2869 = vrot.lane.b32.xlu0 %v2131, 56
      %v2870 = vpop.permute.xlu0 %2869
      %2871 = vrot.lane.b32.xlu0 %v2134, 56
      %v2872 = vpop.permute.xlu0 %2871
      %2873 = vrot.lane.b32.xlu0 %v2136, 56
      %v2874 = vpop.permute.xlu0 %2873
      %2875 = vrot.lane.b32.xlu0 %v2139, 56
      %v2876 = vpop.permute.xlu0 %2875
      %2877 = vrot.lane.b32.xlu0 %v2141, 56
      %v2878 = vpop.permute.xlu0 %2877
      %2879 = vrot.lane.b32.xlu0 %v2144, 56
      %v2880 = vpop.permute.xlu0 %2879
      %2881 = vrot.lane.b32.xlu0 %v2146, 56
      %v2882 = vpop.permute.xlu0 %2881
      %2883 = vrot.lane.b32.xlu0 %v2149, 56
      %v2884 = vpop.permute.xlu0 %2883
      %2885 = vrot.lane.b32.xlu0 %v2151, 56
      %v2886 = vpop.permute.xlu0 %2885
      %2887 = vrot.lane.b32.xlu0 %v2154, 56
      %v2888 = vpop.permute.xlu0 %2887
      %2889 = vrot.lane.b32.xlu0 %v2156, 56
      %v2890 = vpop.permute.xlu0 %2889
      %2891 = vrot.lane.b32.xlu0 %v2159, 56
      %v2892 = vpop.permute.xlu0 %2891
      %2893 = vrot.lane.b32.xlu0 %v2161, 56
      %v2894 = vpop.permute.xlu0 %2893
      %2895 = vrot.lane.b32.xlu0 %v2535, 56
      %v2896 = vpop.permute.xlu0 %2895
      %2897 = vrot.lane.b32.xlu0 %v2537, 56
      %v2898 = vpop.permute.xlu0 %2897
      %2899 = vrot.lane.b32.xlu0 %v2836, 56
      %v2900 = vpop.permute.xlu0 %2899
      %2901 = vrot.lane.b32.xlu0 %v2838, 56
      %v2902 = vpop.permute.xlu0 %2901
      %v2935 = vrot.slane %v2031, 2
      %v2936 = vrot.slane %v2032, 2
      %v2937 = vsel %vm598, %v2935, %v2936
      %v2938 = vrot.slane %v2033, 2
      %v2939 = vsel %vm598, %v2936, %v2938
      %2940 = vrot.lane.b32.xlu0 %v2270, 64
      %v2941 = vpop.permute.xlu0 %2940
      %2942 = vrot.lane.b32.xlu0 %v2272, 64
      %v2943 = vpop.permute.xlu0 %2942
      %2944 = vrot.lane.b32.xlu0 %v2275, 64
      %v2945 = vpop.permute.xlu0 %2944
      %2946 = vrot.lane.b32.xlu0 %v2277, 64
      %v2947 = vpop.permute.xlu0 %2946
      %2948 = vrot.lane.b32.xlu0 %v2280, 64
      %v2949 = vpop.permute.xlu0 %2948
      %2950 = vrot.lane.b32.xlu0 %v2282, 64
      %v2951 = vpop.permute.xlu0 %2950
      %2952 = vrot.lane.b32.xlu0 %v2285, 64
      %v2953 = vpop.permute.xlu0 %2952
      %2954 = vrot.lane.b32.xlu0 %v2287, 64
      %v2955 = vpop.permute.xlu0 %2954
      %2956 = vrot.lane.b32.xlu0 %v2290, 64
      %v2957 = vpop.permute.xlu0 %2956
      %2958 = vrot.lane.b32.xlu0 %v2292, 64
      %v2959 = vpop.permute.xlu0 %2958
      %2960 = vrot.lane.b32.xlu0 %v2295, 64
      %v2961 = vpop.permute.xlu0 %2960
      %2962 = vrot.lane.b32.xlu0 %v2297, 64
      %v2963 = vpop.permute.xlu0 %2962
      %2964 = vrot.lane.b32.xlu0 %v2300, 64
      %v2965 = vpop.permute.xlu0 %2964
      %2966 = vrot.lane.b32.xlu0 %v2302, 64
      %v2967 = vpop.permute.xlu0 %2966
      %2968 = vrot.lane.b32.xlu0 %v2305, 64
      %v2969 = vpop.permute.xlu0 %2968
      %2970 = vrot.lane.b32.xlu0 %v2307, 64
      %v2971 = vpop.permute.xlu0 %2970
      %2972 = vrot.lane.b32.xlu0 %v2310, 64
      %v2973 = vpop.permute.xlu0 %2972
      %2974 = vrot.lane.b32.xlu0 %v2312, 64
      %v2975 = vpop.permute.xlu0 %2974
      %2976 = vrot.lane.b32.xlu0 %v2315, 64
      %v2977 = vpop.permute.xlu0 %2976
      %2978 = vrot.lane.b32.xlu0 %v2317, 64
      %v2979 = vpop.permute.xlu0 %2978
      %2980 = vrot.lane.b32.xlu0 %v2320, 64
      %v2981 = vpop.permute.xlu0 %2980
      %2982 = vrot.lane.b32.xlu0 %v2322, 64
      %v2983 = vpop.permute.xlu0 %2982
      %2984 = vrot.lane.b32.xlu0 %v2325, 64
      %v2985 = vpop.permute.xlu0 %2984
      %2986 = vrot.lane.b32.xlu0 %v2327, 64
      %v2987 = vpop.permute.xlu0 %2986
      %2988 = vrot.lane.b32.xlu0 %v2330, 64
      %v2989 = vpop.permute.xlu0 %2988
      %2990 = vrot.lane.b32.xlu0 %v2332, 64
      %v2991 = vpop.permute.xlu0 %2990
      %2992 = vrot.lane.b32.xlu0 %v2335, 64
      %v2993 = vpop.permute.xlu0 %2992
      %2994 = vrot.lane.b32.xlu0 %v2337, 64
      %v2995 = vpop.permute.xlu0 %2994
      %2996 = vrot.lane.b32.xlu0 %v2636, 64
      %v2997 = vpop.permute.xlu0 %2996
      %2998 = vrot.lane.b32.xlu0 %v2638, 64
      %v2999 = vpop.permute.xlu0 %2998
      %3000 = vrot.lane.b32.xlu0 %v2937, 64
      %v3001 = vpop.permute.xlu0 %3000
      %3002 = vrot.lane.b32.xlu0 %v2939, 64
      %v3003 = vpop.permute.xlu0 %3002
      %v3036 = vsel %vm230, %v1980, %v2163
      %v3037 = vsel %vm230, %v1981, %v2165
      %v3038 = vsel %vm230, %v1983, %v2167
      %v3039 = vsel %vm230, %v1984, %v2169
      %v3040 = vsel %vm230, %v1986, %v2171
      %v3041 = vsel %vm230, %v1987, %v2173
      %v3042 = vsel %vm230, %v1989, %v2175
      %v3043 = vsel %vm230, %v1990, %v2177
      %v3044 = vsel %vm230, %v1992, %v2179
      %v3045 = vsel %vm230, %v1993, %v2181
      %v3046 = vsel %vm230, %v1995, %v2183
      %v3047 = vsel %vm230, %v1996, %v2185
      %v3048 = vsel %vm230, %v1998, %v2187
      %v3049 = vsel %vm230, %v1999, %v2189
      %v3050 = vsel %vm230, %v2001, %v2191
      %v3051 = vsel %vm230, %v2002, %v2193
      %v3052 = vsel %vm230, %v2004, %v2195
      %v3053 = vsel %vm230, %v2005, %v2197
      %v3054 = vsel %vm230, %v2007, %v2199
      %v3055 = vsel %vm230, %v2008, %v2201
      %v3056 = vsel %vm230, %v2010, %v2203
      %v3057 = vsel %vm230, %v2011, %v2205
      %v3058 = vsel %vm230, %v2013, %v2207
      %v3059 = vsel %vm230, %v2014, %v2209
      %v3060 = vsel %vm230, %v2016, %v2211
      %v3061 = vsel %vm230, %v2017, %v2213
      %v3062 = vsel %vm230, %v2019, %v2215
      %v3063 = vsel %vm230, %v2020, %v2217
      %v3064 = vsel %vm230, %v2022, %v2219
      %v3065 = vsel %vm230, %v2023, %v2221
      %v3066 = vsel %vm230, %v2025, %v2223
      %v3067 = vsel %vm230, %v2026, %v2225
      %v3068 = vsel %vm1409, %v3036, %v2339
      %v3069 = vsel %vm1409, %v3037, %v2341
      %v3070 = vsel %vm1409, %v3038, %v2343
      %v3071 = vsel %vm1409, %v3039, %v2345
      %v3072 = vsel %vm1409, %v3040, %v2347
      %v3073 = vsel %vm1409, %v3041, %v2349
      %v3074 = vsel %vm1409, %v3042, %v2351
      %v3075 = vsel %vm1409, %v3043, %v2353
      %v3076 = vsel %vm1409, %v3044, %v2355
      %v3077 = vsel %vm1409, %v3045, %v2357
      %v3078 = vsel %vm1409, %v3046, %v2359
      %v3079 = vsel %vm1409, %v3047, %v2361
      %v3080 = vsel %vm1409, %v3048, %v2363
      %v3081 = vsel %vm1409, %v3049, %v2365
      %v3082 = vsel %vm1409, %v3050, %v2367
      %v3083 = vsel %vm1409, %v3051, %v2369
      %v3084 = vsel %vm1409, %v3052, %v2371
      %v3085 = vsel %vm1409, %v3053, %v2373
      %v3086 = vsel %vm1409, %v3054, %v2375
      %v3087 = vsel %vm1409, %v3055, %v2377
      %v3088 = vsel %vm1409, %v3056, %v2379
      %v3089 = vsel %vm1409, %v3057, %v2381
      %v3090 = vsel %vm1409, %v3058, %v2383
      %v3091 = vsel %vm1409, %v3059, %v2385
      %v3092 = vsel %vm1409, %v3060, %v2387
      %v3093 = vsel %vm1409, %v3061, %v2389
      %v3094 = vsel %vm1409, %v3062, %v2391
      %v3095 = vsel %vm1409, %v3063, %v2393
      %v3096 = vsel %vm1409, %v3064, %v2395
      %v3097 = vsel %vm1409, %v3065, %v2397
      %v3098 = vsel %vm1409, %v3066, %v2399
      %v3099 = vsel %vm1409, %v3067, %v2401
      %v3100 = vsel %vm1442, %v3068, %v2437
      %v3101 = vsel %vm1442, %v3069, %v2439
      %v3102 = vsel %vm1442, %v3070, %v2441
      %v3103 = vsel %vm1442, %v3071, %v2443
      %v3104 = vsel %vm1442, %v3072, %v2445
      %v3105 = vsel %vm1442, %v3073, %v2447
      %v3106 = vsel %vm1442, %v3074, %v2449
      %v3107 = vsel %vm1442, %v3075, %v2451
      %v3108 = vsel %vm1442, %v3076, %v2453
      %v3109 = vsel %vm1442, %v3077, %v2455
      %v3110 = vsel %vm1442, %v3078, %v2457
      %v3111 = vsel %vm1442, %v3079, %v2459
      %v3112 = vsel %vm1442, %v3080, %v2461
      %v3113 = vsel %vm1442, %v3081, %v2463
      %v3114 = vsel %vm1442, %v3082, %v2465
      %v3115 = vsel %vm1442, %v3083, %v2467
      %v3116 = vsel %vm1442, %v3084, %v2469
      %v3117 = vsel %vm1442, %v3085, %v2471
      %v3118 = vsel %vm1442, %v3086, %v2473
      %v3119 = vsel %vm1442, %v3087, %v2475
      %v3120 = vsel %vm1442, %v3088, %v2477
      %v3121 = vsel %vm1442, %v3089, %v2479
      %v3122 = vsel %vm1442, %v3090, %v2481
      %v3123 = vsel %vm1442, %v3091, %v2483
      %v3124 = vsel %vm1442, %v3092, %v2485
      %v3125 = vsel %vm1442, %v3093, %v2487
      %v3126 = vsel %vm1442, %v3094, %v2489
      %v3127 = vsel %vm1442, %v3095, %v2491
      %v3128 = vsel %vm1442, %v3096, %v2493
      %v3129 = vsel %vm1442, %v3097, %v2495
      %v3130 = vsel %vm1442, %v3098, %v2497
      %v3131 = vsel %vm1442, %v3099, %v2499
      %v3132 = vsel %vm1475, %v3100, %v2539
      %v3133 = vsel %vm1475, %v3101, %v2541
      %v3134 = vsel %vm1475, %v3102, %v2543
      %v3135 = vsel %vm1475, %v3103, %v2545
      %v3136 = vsel %vm1475, %v3104, %v2547
      %v3137 = vsel %vm1475, %v3105, %v2549
      %v3138 = vsel %vm1475, %v3106, %v2551
      %v3139 = vsel %vm1475, %v3107, %v2553
      %v3140 = vsel %vm1475, %v3108, %v2555
      %v3141 = vsel %vm1475, %v3109, %v2557
      %v3142 = vsel %vm1475, %v3110, %v2559
      %v3143 = vsel %vm1475, %v3111, %v2561
      %v3144 = vsel %vm1475, %v3112, %v2563
      %v3145 = vsel %vm1475, %v3113, %v2565
      %v3146 = vsel %vm1475, %v3114, %v2567
      %v3147 = vsel %vm1475, %v3115, %v2569
      %v3148 = vsel %vm1475, %v3116, %v2571
      %v3149 = vsel %vm1475, %v3117, %v2573
      %v3150 = vsel %vm1475, %v3118, %v2575
      %v3151 = vsel %vm1475, %v3119, %v2577
      %v3152 = vsel %vm1475, %v3120, %v2579
      %v3153 = vsel %vm1475, %v3121, %v2581
      %v3154 = vsel %vm1475, %v3122, %v2583
      %v3155 = vsel %vm1475, %v3123, %v2585
      %v3156 = vsel %vm1475, %v3124, %v2587
      %v3157 = vsel %vm1475, %v3125, %v2589
      %v3158 = vsel %vm1475, %v3126, %v2591
      %v3159 = vsel %vm1475, %v3127, %v2593
      %v3160 = vsel %vm1475, %v3128, %v2595
      %v3161 = vsel %vm1475, %v3129, %v2597
      %v3162 = vsel %vm1475, %v3130, %v2599
      %v3163 = vsel %vm1475, %v3131, %v2601
      %v3164 = vsel %vm1508, %v3132, %v2640
      %v3165 = vsel %vm1508, %v3133, %v2642
      %v3166 = vsel %vm1508, %v3134, %v2644
      %v3167 = vsel %vm1508, %v3135, %v2646
      %v3168 = vsel %vm1508, %v3136, %v2648
      %v3169 = vsel %vm1508, %v3137, %v2650
      %v3170 = vsel %vm1508, %v3138, %v2652
      %v3171 = vsel %vm1508, %v3139, %v2654
      %v3172 = vsel %vm1508, %v3140, %v2656
      %v3173 = vsel %vm1508, %v3141, %v2658
      %v3174 = vsel %vm1508, %v3142, %v2660
      %v3175 = vsel %vm1508, %v3143, %v2662
      %v3176 = vsel %vm1508, %v3144, %v2664
      %v3177 = vsel %vm1508, %v3145, %v2666
      %v3178 = vsel %vm1508, %v3146, %v2668
      %v3179 = vsel %vm1508, %v3147, %v2670
      %v3180 = vsel %vm1508, %v3148, %v2672
      %v3181 = vsel %vm1508, %v3149, %v2674
      %v3182 = vsel %vm1508, %v3150, %v2676
      %v3183 = vsel %vm1508, %v3151, %v2678
      %v3184 = vsel %vm1508, %v3152, %v2680
      %v3185 = vsel %vm1508, %v3153, %v2682
      %v3186 = vsel %vm1508, %v3154, %v2684
      %v3187 = vsel %vm1508, %v3155, %v2686
      %v3188 = vsel %vm1508, %v3156, %v2688
      %v3189 = vsel %vm1508, %v3157, %v2690
      %v3190 = vsel %vm1508, %v3158, %v2692
      %v3191 = vsel %vm1508, %v3159, %v2694
      %v3192 = vsel %vm1508, %v3160, %v2696
      %v3193 = vsel %vm1508, %v3161, %v2698
      %v3194 = vsel %vm1508, %v3162, %v2700
      %v3195 = vsel %vm1508, %v3163, %v2702
      %v3196 = vsel %vm1541, %v3164, %v2738
      %v3197 = vsel %vm1541, %v3165, %v2740
      %v3198 = vsel %vm1541, %v3166, %v2742
      %v3199 = vsel %vm1541, %v3167, %v2744
      %v3200 = vsel %vm1541, %v3168, %v2746
      %v3201 = vsel %vm1541, %v3169, %v2748
      %v3202 = vsel %vm1541, %v3170, %v2750
      %v3203 = vsel %vm1541, %v3171, %v2752
      %v3204 = vsel %vm1541, %v3172, %v2754
      %v3205 = vsel %vm1541, %v3173, %v2756
      %v3206 = vsel %vm1541, %v3174, %v2758
      %v3207 = vsel %vm1541, %v3175, %v2760
      %v3208 = vsel %vm1541, %v3176, %v2762
      %v3209 = vsel %vm1541, %v3177, %v2764
      %v3210 = vsel %vm1541, %v3178, %v2766
      %v3211 = vsel %vm1541, %v3179, %v2768
      %v3212 = vsel %vm1541, %v3180, %v2770
      %v3213 = vsel %vm1541, %v3181, %v2772
      %v3214 = vsel %vm1541, %v3182, %v2774
      %v3215 = vsel %vm1541, %v3183, %v2776
      %v3216 = vsel %vm1541, %v3184, %v2778
      %v3217 = vsel %vm1541, %v3185, %v2780
      %v3218 = vsel %vm1541, %v3186, %v2782
      %v3219 = vsel %vm1541, %v3187, %v2784
      %v3220 = vsel %vm1541, %v3188, %v2786
      %v3221 = vsel %vm1541, %v3189, %v2788
      %v3222 = vsel %vm1541, %v3190, %v2790
      %v3223 = vsel %vm1541, %v3191, %v2792
      %v3224 = vsel %vm1541, %v3192, %v2794
      %v3225 = vsel %vm1541, %v3193, %v2796
      %v3226 = vsel %vm1541, %v3194, %v2798
      %v3227 = vsel %vm1541, %v3195, %v2800
      %v3228 = vsel %vm1574, %v3196, %v2840
      %v3229 = vsel %vm1574, %v3197, %v2842
      %v3230 = vsel %vm1574, %v3198, %v2844
      %v3231 = vsel %vm1574, %v3199, %v2846
      %v3232 = vsel %vm1574, %v3200, %v2848
      %v3233 = vsel %vm1574, %v3201, %v2850
      %v3234 = vsel %vm1574, %v3202, %v2852
      %v3235 = vsel %vm1574, %v3203, %v2854
      %v3236 = vsel %vm1574, %v3204, %v2856
      %v3237 = vsel %vm1574, %v3205, %v2858
      %v3238 = vsel %vm1574, %v3206, %v2860
      %v3239 = vsel %vm1574, %v3207, %v2862
      %v3240 = vsel %vm1574, %v3208, %v2864
      %v3241 = vsel %vm1574, %v3209, %v2866
      %v3242 = vsel %vm1574, %v3210, %v2868
      %v3243 = vsel %vm1574, %v3211, %v2870
      %v3244 = vsel %vm1574, %v3212, %v2872
      %v3245 = vsel %vm1574, %v3213, %v2874
      %v3246 = vsel %vm1574, %v3214, %v2876
      %v3247 = vsel %vm1574, %v3215, %v2878
      %v3248 = vsel %vm1574, %v3216, %v2880
      %v3249 = vsel %vm1574, %v3217, %v2882
      %v3250 = vsel %vm1574, %v3218, %v2884
      %v3251 = vsel %vm1574, %v3219, %v2886
      %v3252 = vsel %vm1574, %v3220, %v2888
      %v3253 = vsel %vm1574, %v3221, %v2890
      %v3254 = vsel %vm1574, %v3222, %v2892
      %v3255 = vsel %vm1574, %v3223, %v2894
      %v3256 = vsel %vm1574, %v3224, %v2896
      %v3257 = vsel %vm1574, %v3225, %v2898
      %v3258 = vsel %vm1574, %v3226, %v2900
      %v3259 = vsel %vm1574, %v3227, %v2902
      %v3260 = vsel %vm1607, %v3228, %v2941
      %v3261 = vsel %vm1607, %v3229, %v2943
      %v3262 = vsel %vm1607, %v3230, %v2945
      %v3263 = vsel %vm1607, %v3231, %v2947
      %v3264 = vsel %vm1607, %v3232, %v2949
      %v3265 = vsel %vm1607, %v3233, %v2951
      %v3266 = vsel %vm1607, %v3234, %v2953
      %v3267 = vsel %vm1607, %v3235, %v2955
      %v3268 = vsel %vm1607, %v3236, %v2957
      %v3269 = vsel %vm1607, %v3237, %v2959
      %v3270 = vsel %vm1607, %v3238, %v2961
      %v3271 = vsel %vm1607, %v3239, %v2963
      %v3272 = vsel %vm1607, %v3240, %v2965
      %v3273 = vsel %vm1607, %v3241, %v2967
      %v3274 = vsel %vm1607, %v3242, %v2969
      %v3275 = vsel %vm1607, %v3243, %v2971
      %v3276 = vsel %vm1607, %v3244, %v2973
      %v3277 = vsel %vm1607, %v3245, %v2975
      %v3278 = vsel %vm1607, %v3246, %v2977
      %v3279 = vsel %vm1607, %v3247, %v2979
      %v3280 = vsel %vm1607, %v3248, %v2981
      %v3281 = vsel %vm1607, %v3249, %v2983
      %v3282 = vsel %vm1607, %v3250, %v2985
      %v3283 = vsel %vm1607, %v3251, %v2987
      %v3284 = vsel %vm1607, %v3252, %v2989
      %v3285 = vsel %vm1607, %v3253, %v2991
      %v3286 = vsel %vm1607, %v3254, %v2993
      %v3287 = vsel %vm1607, %v3255, %v2995
      %v3288 = vsel %vm1607, %v3256, %v2997
      %v3289 = vsel %vm1607, %v3257, %v2999
      %v3290 = vsel %vm1607, %v3258, %v3001
      %v3291 = vsel %vm1607, %v3259, %v3003
      %v3292 = vld [vmem:[%s2] sm:$0xff]
      %v3293 = vld [vmem:[%s2 + $0x8] sm:$0xff]
      %v3294 = vld [vmem:[%s2 + $0x10] sm:$0xff]
      %v3295 = vld [vmem:[%s2 + $0x18] sm:$0xff]
      %v3296 = vld [vmem:[%s2 + $0x20] sm:$0xff]
      %v3297 = vld [vmem:[%s2 + $0x28] sm:$0xff]
      %v3298 = vld [vmem:[%s2 + $0x30] sm:$0xff]
      %v3299 = vld [vmem:[%s2 + $0x38] sm:$0xff]
      %v3300 = vld [vmem:[%s2 + $0x40] sm:$0xff]
      %v3301 = vld [vmem:[%s3 + $0x1] sm:$0x1]
      %v3302 = vperm.slane %v3301, 0
      %v3304 = vsel %vm1651, %v3260, 0
      %v3307 = vsel %vm1651, %v3261, 0
      %v3310 = vsel %vm1651, %v3262, 0
      %v3313 = vsel %vm1651, %v3263, 0
      %v3316 = vsel %vm1651, %v3264, 0
      %v3319 = vsel %vm1651, %v3265, 0
      %v3322 = vsel %vm1651, %v3266, 0
      %v3325 = vsel %vm1651, %v3267, 0
      %v3328 = vsel %vm1651, %v3268, 0
      %v3331 = vsel %vm1651, %v3269, 0
      %v3334 = vsel %vm1651, %v3270, 0
      %v3337 = vsel %vm1651, %v3271, 0
      %v3340 = vsel %vm1651, %v3272, 0
      %v3343 = vsel %vm1651, %v3273, 0
      %v3346 = vsel %vm1651, %v3274, 0
      %v3349 = vsel %vm1651, %v3275, 0
      %v3352 = vsel %vm1651, %v3276, 0
      %v3355 = vsel %vm1651, %v3277, 0
      %v3358 = vsel %vm1651, %v3278, 0
      %v3361 = vsel %vm1651, %v3279, 0
      %v3364 = vsel %vm1651, %v3280, 0
      %v3367 = vsel %vm1651, %v3281, 0
      %v3370 = vsel %vm1651, %v3282, 0
      %v3373 = vsel %vm1651, %v3283, 0
      %v3376 = vsel %vm1651, %v3284, 0
      %v3379 = vsel %vm1651, %v3285, 0
      %v3382 = vsel %vm1651, %v3286, 0
      %v3385 = vsel %vm1651, %v3287, 0
      %v3388 = vsel %vm1651, %v3288, 0
      %v3391 = vsel %vm1651, %v3289, 0
      %v3394 = vsel %vm1651, %v3290, 0
      %v3397 = vsel %vm1651, %v3291, 0
      %3399 = vmatpush.msra.mxu0 0.0
      %3400 = vmatpush.msra.mxu0 0.0
      %3401 = vmatpush.msra.mxu0 0.0
      %3402 = vmatpush.msra.mxu0 0.0
      %3403 = vmatpush.msra.mxu0 0.0
      %3404 = vmatpush.msra.mxu0 0.0
      %3405 = vmatpush.msra.mxu0 0.0
      %3406 = vmatpush.msra.mxu0 %v3300
      %3407 = vmatpush.msra.mxu0 %v3299
      %3408 = vmatpush.msra.mxu0 %v3298
      %3409 = vmatpush.msra.mxu0 %v3297
      %3410 = vmatpush.msra.mxu0 %v3296
      %3411 = vmatpush.msra.mxu0 %v3295
      %3412 = vmatpush.msra.mxu0 %v3294
      %3413 = vmatpush.msra.mxu0 %v3293
      %3414 = vmatpush.msra.mxu0 %v3292
      %3415 = vmatmul.f32.gmra.mxu0 %v3304
      %v3416 = vpop.f32.mrf.mxu0
      %v3417 = vadd.f32 %v3302, %v3416
      %3418 = vmatmul.f32.gmra.mxu0 %v3307
      %v3419 = vpop.f32.mrf.mxu0
      %v3420 = vadd.f32 %v3302, %v3419
      %3421 = vmatmul.f32.gmra.mxu0 %v3310
      %v3422 = vpop.f32.mrf.mxu0
      %v3423 = vadd.f32 %v3302, %v3422
      %3424 = vmatmul.f32.gmra.mxu0 %v3313
      %v3425 = vpop.f32.mrf.mxu0
      %v3426 = vadd.f32 %v3302, %v3425
      %3427 = vmatmul.f32.gmra.mxu0 %v3316
      %v3428 = vpop.f32.mrf.mxu0
      %v3429 = vadd.f32 %v3302, %v3428
      %3430 = vmatmul.f32.gmra.mxu0 %v3319
      %v3431 = vpop.f32.mrf.mxu0
      %v3432 = vadd.f32 %v3302, %v3431
      %3433 = vmatmul.f32.gmra.mxu0 %v3322
      %v3434 = vpop.f32.mrf.mxu0
      %v3435 = vadd.f32 %v3302, %v3434
      %3436 = vmatmul.f32.gmra.mxu0 %v3325
      %v3437 = vpop.f32.mrf.mxu0
      %v3438 = vadd.f32 %v3302, %v3437
      %3439 = vmatmul.f32.gmra.mxu0 %v3328
      %v3440 = vpop.f32.mrf.mxu0
      %v3441 = vadd.f32 %v3302, %v3440
      %3442 = vmatmul.f32.gmra.mxu0 %v3331
      %v3443 = vpop.f32.mrf.mxu0
      %v3444 = vadd.f32 %v3302, %v3443
      %3445 = vmatmul.f32.gmra.mxu0 %v3334
      %v3446 = vpop.f32.mrf.mxu0
      %v3447 = vadd.f32 %v3302, %v3446
      %3448 = vmatmul.f32.gmra.mxu0 %v3337
      %v3449 = vpop.f32.mrf.mxu0
      %v3450 = vadd.f32 %v3302, %v3449
      %3451 = vmatmul.f32.gmra.mxu0 %v3340
      %v3452 = vpop.f32.mrf.mxu0
      %v3453 = vadd.f32 %v3302, %v3452
      %3454 = vmatmul.f32.gmra.mxu0 %v3343
      %v3455 = vpop.f32.mrf.mxu0
      %v3456 = vadd.f32 %v3302, %v3455
      %3457 = vmatmul.f32.gmra.mxu0 %v3346
      %v3458 = vpop.f32.mrf.mxu0
      %v3459 = vadd.f32 %v3302, %v3458
      %3460 = vmatmul.f32.gmra.mxu0 %v3349
      %v3461 = vpop.f32.mrf.mxu0
      %v3462 = vadd.f32 %v3302, %v3461
      %3463 = vmatmul.f32.gmra.mxu0 %v3352
      %v3464 = vpop.f32.mrf.mxu0
      %v3465 = vadd.f32 %v3302, %v3464
      %3466 = vmatmul.f32.gmra.mxu0 %v3355
      %v3467 = vpop.f32.mrf.mxu0
      %v3468 = vadd.f32 %v3302, %v3467
      %3469 = vmatmul.f32.gmra.mxu0 %v3358
      %v3470 = vpop.f32.mrf.mxu0
      %v3471 = vadd.f32 %v3302, %v3470
      %3472 = vmatmul.f32.gmra.mxu0 %v3361
      %v3473 = vpop.f32.mrf.mxu0
      %v3474 = vadd.f32 %v3302, %v3473
      %3475 = vmatmul.f32.gmra.mxu0 %v3364
      %v3476 = vpop.f32.mrf.mxu0
      %v3477 = vadd.f32 %v3302, %v3476
      %3478 = vmatmul.f32.gmra.mxu0 %v3367
      %v3479 = vpop.f32.mrf.mxu0
      %v3480 = vadd.f32 %v3302, %v3479
      %3481 = vmatmul.f32.gmra.mxu0 %v3370
      %v3482 = vpop.f32.mrf.mxu0
      %v3483 = vadd.f32 %v3302, %v3482
      %3484 = vmatmul.f32.gmra.mxu0 %v3373
      %v3485 = vpop.f32.mrf.mxu0
      %v3486 = vadd.f32 %v3302, %v3485
      %3487 = vmatmul.f32.gmra.mxu0 %v3376
      %v3488 = vpop.f32.mrf.mxu0
      %v3489 = vadd.f32 %v3302, %v3488
      %3490 = vmatmul.f32.gmra.mxu0 %v3379
      %v3491 = vpop.f32.mrf.mxu0
      %v3492 = vadd.f32 %v3302, %v3491
      %3493 = vmatmul.f32.gmra.mxu0 %v3382
      %v3494 = vpop.f32.mrf.mxu0
      %v3495 = vadd.f32 %v3302, %v3494
      %3496 = vmatmul.f32.gmra.mxu0 %v3385
      %v3497 = vpop.f32.mrf.mxu0
      %v3498 = vadd.f32 %v3302, %v3497
      %3499 = vmatmul.f32.gmra.mxu0 %v3388
      %v3500 = vpop.f32.mrf.mxu0
      %v3501 = vadd.f32 %v3302, %v3500
      %3502 = vmatmul.f32.gmra.mxu0 %v3391
      %v3503 = vpop.f32.mrf.mxu0
      %v3504 = vadd.f32 %v3302, %v3503
      %3505 = vmatmul.f32.gmra.mxu0 %v3394
      %v3506 = vpop.f32.mrf.mxu0
      %v3507 = vadd.f32 %v3302, %v3506
      %3508 = vmatmul.f32.gmra.mxu0 %v3397
      %v3509 = vpop.f32.mrf.mxu0
      %v3510 = vadd.f32 %v3302, %v3509
      %3511 = vdwg.mxu0
      %v3512 = vadd.f32 %v198, %v3417
      %v3513 = vadd.f32 %v199, %v3420
      %v3514 = vadd.f32 %v200, %v3423
      %v3515 = vadd.f32 %v201, %v3426
      %v3516 = vadd.f32 %v202, %v3429
      %v3517 = vadd.f32 %v203, %v3432
      %v3518 = vadd.f32 %v204, %v3435
      %v3519 = vadd.f32 %v205, %v3438
      %v3520 = vadd.f32 %v206, %v3441
      %v3521 = vadd.f32 %v207, %v3444
      %v3522 = vadd.f32 %v208, %v3447
      %v3523 = vadd.f32 %v209, %v3450
      %v3524 = vadd.f32 %v210, %v3453
      %v3525 = vadd.f32 %v211, %v3456
      %v3526 = vadd.f32 %v212, %v3459
      %v3527 = vadd.f32 %v213, %v3462
      %v3528 = vadd.f32 %v214, %v3465
      %v3529 = vadd.f32 %v215, %v3468
      %v3530 = vadd.f32 %v216, %v3471
      %v3531 = vadd.f32 %v217, %v3474
      %v3532 = vadd.f32 %v218, %v3477
      %v3533 = vadd.f32 %v219, %v3480
      %v3534 = vadd.f32 %v220, %v3483
      %v3535 = vadd.f32 %v221, %v3486
      %v3536 = vadd.f32 %v222, %v3489
      %v3537 = vadd.f32 %v223, %v3492
      %v3538 = vadd.f32 %v224, %v3495
      %v3539 = vadd.f32 %v225, %v3498
      %v3540 = vadd.f32 %v226, %v3501
      %v3541 = vadd.f32 %v227, %v3504
      %v3542 = vadd.f32 %v228, %v3507
      %v3543 = vadd.f32 %v229, %v3510
      %v3544 = vmax.f32 %v3512, 0.0
      %v3545 = vmax.f32 %v3513, 0.0
      %v3546 = vmax.f32 %v3514, 0.0
      %v3547 = vmax.f32 %v3515, 0.0
      %v3548 = vmax.f32 %v3516, 0.0
      %v3549 = vmax.f32 %v3517, 0.0
      %v3550 = vmax.f32 %v3518, 0.0
      %v3551 = vmax.f32 %v3519, 0.0
      %v3552 = vmax.f32 %v3520, 0.0
      %v3553 = vmax.f32 %v3521, 0.0
      %v3554 = vmax.f32 %v3522, 0.0
      %v3555 = vmax.f32 %v3523, 0.0
      %v3556 = vmax.f32 %v3524, 0.0
      %v3557 = vmax.f32 %v3525, 0.0
      %v3558 = vmax.f32 %v3526, 0.0
      %v3559 = vmax.f32 %v3527, 0.0
      %v3560 = vmax.f32 %v3528, 0.0
      %v3561 = vmax.f32 %v3529, 0.0
      %v3562 = vmax.f32 %v3530, 0.0
      %v3563 = vmax.f32 %v3531, 0.0
      %v3564 = vmax.f32 %v3532, 0.0
      %v3565 = vmax.f32 %v3533, 0.0
      %v3566 = vmax.f32 %v3534, 0.0
      %v3567 = vmax.f32 %v3535, 0.0
      %v3568 = vmax.f32 %v3536, 0.0
      %v3569 = vmax.f32 %v3537, 0.0
      %v3570 = vmax.f32 %v3538, 0.0
      %v3571 = vmax.f32 %v3539, 0.0
      %v3572 = vmax.f32 %v3540, 0.0
      %v3573 = vmax.f32 %v3541, 0.0
      %v3574 = vmax.f32 %v3542, 0.0
      %v3575 = vmax.f32 %v3543, 0.0
      %3576 = vst.msk [vmem:[%s197] sm:$0xff] %vm230, %v3544
      %3577 = vst.msk [vmem:[%s197 + $0x8] sm:$0xff] %vm230, %v3545
      %3578 = vst.msk [vmem:[%s197 + $0x10] sm:$0xff] %vm230, %v3546
      %3579 = vst.msk [vmem:[%s197 + $0x18] sm:$0xff] %vm230, %v3547
      %3580 = vst.msk [vmem:[%s197 + $0x20] sm:$0xff] %vm230, %v3548
      %3581 = vst.msk [vmem:[%s197 + $0x28] sm:$0xff] %vm230, %v3549
      %3582 = vst.msk [vmem:[%s197 + $0x30] sm:$0xff] %vm230, %v3550
      %3583 = vst.msk [vmem:[%s197 + $0x38] sm:$0xff] %vm230, %v3551
      %3584 = vst.msk [vmem:[%s197 + $0x40] sm:$0xff] %vm230, %v3552
      %3585 = vst.msk [vmem:[%s197 + $0x48] sm:$0xff] %vm230, %v3553
      %3586 = vst.msk [vmem:[%s197 + $0x50] sm:$0xff] %vm230, %v3554
      %3587 = vst.msk [vmem:[%s197 + $0x58] sm:$0xff] %vm230, %v3555
      %3588 = vst.msk [vmem:[%s197 + $0x60] sm:$0xff] %vm230, %v3556
      %3589 = vst.msk [vmem:[%s197 + $0x68] sm:$0xff] %vm230, %v3557
      %3590 = vst.msk [vmem:[%s197 + $0x70] sm:$0xff] %vm230, %v3558
      %3591 = vst.msk [vmem:[%s197 + $0x78] sm:$0xff] %vm230, %v3559
      %3592 = vst.msk [vmem:[%s197 + $0x80] sm:$0xff] %vm230, %v3560
      %3593 = vst.msk [vmem:[%s197 + $0x88] sm:$0xff] %vm230, %v3561
      %3594 = vst.msk [vmem:[%s197 + $0x90] sm:$0xff] %vm230, %v3562
      %3595 = vst.msk [vmem:[%s197 + $0x98] sm:$0xff] %vm230, %v3563
      %3596 = vst.msk [vmem:[%s197 + $0xa0] sm:$0xff] %vm230, %v3564
      %3597 = vst.msk [vmem:[%s197 + $0xa8] sm:$0xff] %vm230, %v3565
      %3598 = vst.msk [vmem:[%s197 + $0xb0] sm:$0xff] %vm230, %v3566
      %3599 = vst.msk [vmem:[%s197 + $0xb8] sm:$0xff] %vm230, %v3567
      %3600 = vst.msk [vmem:[%s197 + $0xc0] sm:$0xff] %vm230, %v3568
      %3601 = vst.msk [vmem:[%s197 + $0xc8] sm:$0xff] %vm230, %v3569
      %3602 = vst.msk [vmem:[%s197 + $0xd0] sm:$0xff] %vm230, %v3570
      %3603 = vst.msk [vmem:[%s197 + $0xd8] sm:$0xff] %vm230, %v3571
      %3604 = vst.msk [vmem:[%s197 + $0xe0] sm:$0xff] %vm230, %v3572
      %3605 = vst.msk [vmem:[%s197 + $0xe8] sm:$0xff] %vm230, %v3573
      %3606 = vst.msk [vmem:[%s197 + $0xf0] sm:$0xff] %vm230, %v3574
      %3607 = vst.msk [vmem:[%s197 + $0xf8] sm:$0xff] %vm230, %v3575
      %p3608 = scmp.lt.s32.totalorder %s15, 1
      %s3609 = scalar_select %p3608, %s15, 1
      %s3610 = smul.addr %s3609, 32
      %s3611 = smul.addr %s3610, 8
      %s3612 = scalar_lea.vmem %s4, %s3611
      // Predicated region
      $region37: #{resnet_basicblock_forward.1} parent=35 // pred_check
        %p3613 = pneg %p122
      $region38: #{resnet_basicblock_forward.1} parent=35 // pred_check_branch
        %3615 = sbr.rel (%p3613) target = $region40
      $region39: #{resnet_basicblock_forward.1} parent=35 // pred_region
        _
      $region40: #{resnet_basicblock_forward.1} parent=35 // pred_fallthru
        _
    $region36: #{resnet_basicblock_forward.1} parent=5 // pred_fallthru
      _
    %p3616 = scmp.le.s32.totalorder 2, %s10
    // Predicated region
    $region41: #{resnet_basicblock_forward.1} parent=5 // pred_check
      %p3617 = pneg %p3616
    $region42: #{resnet_basicblock_forward.1} parent=5 // pred_check_branch
      %3619 = sbr.rel (%p3617) target = $region44
    $region43: #{resnet_basicblock_forward.1} parent=5 // pred_region
      %s3620 = ssub.s32 %s10, 2
      // Predicated region
      $region45: #{resnet_basicblock_forward.1} parent=43 // pred_check
        %p3621 = pneg %p128
      $region46: #{resnet_basicblock_forward.1} parent=43 // pred_check_branch
        %3623 = sbr.rel (%p3621) target = $region48
      $region47: #{resnet_basicblock_forward.1} parent=43 // pred_region
        %p3624 = scmp.lt.s32.totalorder %s16, 1
        %s3625 = scalar_select %p3624, %s16, 1
        %s3626 = smul.addr %s3625, 32
        %s3627 = smul.addr %s3626, 8
        %s3628 = scalar_lea.vmem %s4, %s3627
      $region48: #{resnet_basicblock_forward.1} parent=43 // pred_fallthru
        _
    $region44: #{resnet_basicblock_forward.1} parent=5 // pred_fallthru
      _
  $region6: #{resnet_basicblock_forward.1} parent=0 // loop_footer
    %s14 = sadd.s32 1, %s10
  $region7: #{resnet_basicblock_forward.1} parent=0 // loop_footer_branch
    %9 = sbr.rel target = $region3
  $region8: #{resnet_basicblock_forward.1} parent=0 // loop_exit
    _

</llo_original>
